<compile_context>
chip_gen: v7x
topology: tpu7x:2x2x1
jax: 0.10.0
libtpu: 0.0.40
codegen_flags: <defaults>
</compile_context>

<pallas_src>
import jax
import jax.numpy as jnp
from jax.experimental import pallas as pl
from jax.experimental.pallas import tpu as pltpu

INPUT_DIM = 60        # nn.LSTM(60, ...)
HIDDEN = 32
NUM_LAYERS = 2
BATCH = 4             # forward hardcodes h_n.permute(1,0,2).reshape(4, -1)
SEQ = 8
OUT_DIM = 1


def lstm_head_kernel(x_ref, wih0_ref, whh0_ref, b0_ref,
                     wih1_ref, whh1_ref, b1_ref,
                     wlin_ref, blin_ref, out_ref):
    B, T, D = x_ref.shape
    H = HIDDEN

    # ---- hoisted layer-0 input projection: one batched matmul, bias folded ----
    # (B,T,60) -> (B*T,60) collapses leading dims only: free relayout in VMEM.
    x_flat = x_ref[...].reshape(B * T, D)                         # (32, 60)
    xw0 = (jnp.dot(x_flat, wih0_ref[...],
                   preferred_element_type=jnp.float32)
           + b0_ref[...])                                         # (32, 4H)
    xw0 = xw0.reshape(B, T, 4 * H)                                # (B, T, 4H)

    whh0 = whh0_ref[...]
    wih1 = wih1_ref[...]
    whh1 = whh1_ref[...]
    b1b = jnp.broadcast_to(b1_ref[...], (B, 4 * H))               # hoisted broadcast (once)

    def gates(pre):
        # one full-width sigmoid + one narrow tanh instead of 3 + 1 narrow EUP pushes
        sig = jax.nn.sigmoid(pre)                                 # (B, 4H)
        i = sig[:, 0 * H:1 * H]
        f = sig[:, 1 * H:2 * H]
        o = sig[:, 3 * H:4 * H]
        g = jnp.tanh(pre[:, 2 * H:3 * H])
        return i, f, g, o

    zeros = jnp.zeros((B, H), jnp.float32)

    # ---- layer 0 recurrence, fully unrolled (T static) ----
    h0, c0 = zeros, zeros
    h0_steps = []
    for t in range(T):
        pre = xw0[:, t, :] + jnp.dot(h0, whh0,
                                     preferred_element_type=jnp.float32)
        i, f, g, o = gates(pre)
        c0 = f * c0 + i * g
        h0 = o * jnp.tanh(c0)
        h0_steps.append(h0)

    # ---- layer 1 recurrence, fully unrolled; the x-projection of step t only
    # depends on h0(t), so it runs off the serial h1 chain (wavefront skew).
    # Note parenthesization: (dot(h0) + b1b) is off-chain, only the final add
    # with dot(h1, whh1) sits on the h1 critical chain. ----
    h1, c1 = zeros, zeros
    for t in range(T):
        xproj = jnp.dot(h0_steps[t], wih1,
                        preferred_element_type=jnp.float32) + b1b
        pre = xproj + jnp.dot(h1, whh1, preferred_element_type=jnp.float32)
        i, f, g, o = gates(pre)
        c1 = f * c1 + i * g
        h1 = o * jnp.tanh(c1)

    # ---- head: h_n.permute(1,0,2).reshape(B,-1) @ W.T + b, computed as a VPU
    # multiply + lane (XLU) reduction: no lane concat, no 1-lane-output matmul ----
    w = wlin_ref[...]                                             # (1, 2H)
    contrib = h0 * w[:, :H] + h1 * w[:, H:]                       # (B, H)
    out_ref[...] = (jnp.sum(contrib, axis=-1, keepdims=True)
                    + blin_ref[...])
    # TODO(synk): nn.Dropout is identity in inference mode; not applied here.


def aaaa_forward(x, p):
    """x: (B, T, 60) float32, batch-first exactly like the PyTorch module."""
    vmem = pl.BlockSpec(memory_space=pltpu.MemorySpace.VMEM)
    out = pl.pallas_call(
        lstm_head_kernel,
        out_shape=jax.ShapeDtypeStruct((BATCH, OUT_DIM), jnp.float32),
        in_specs=[vmem] * 9,
        out_specs=vmem,
    )(x.astype(jnp.float32),
      p["wih0"], p["whh0"], p["b0"],
      p["wih1"], p["whh1"], p["b1"],
      p["wlin"], p["blin"])
    # predictions[:, -1]  (output_size == 1 -> just that single column)
    return out[:, -1]


def init_params(key):
    ks = jax.random.split(key, 6)

    def ortho(k, shape):
        a = jax.random.normal(k, shape, jnp.float32)
        q, r = jnp.linalg.qr(a)
        return q * jnp.sign(jnp.diag(r))[None, :]

    # weight_ih_*: kaiming_normal_  (std = sqrt(2 / fan_in))
    wih0 = jax.random.normal(ks[0], (4 * HIDDEN, INPUT_DIM), jnp.float32) * jnp.sqrt(2.0 / INPUT_DIM)
    wih1 = jax.random.normal(ks[1], (4 * HIDDEN, HIDDEN), jnp.float32) * jnp.sqrt(2.0 / HIDDEN)
    # weight_hh_*: orthogonal_
    whh0 = ortho(ks[2], (4 * HIDDEN, HIDDEN))
    whh1 = ortho(ks[3], (4 * HIDDEN, HIDDEN))
    # all LSTM biases initialized to 0 (bias_ih + bias_hh folded together)
    b0 = jnp.zeros((1, 4 * HIDDEN), jnp.float32)
    b1 = jnp.zeros((1, 4 * HIDDEN), jnp.float32)
    # linear_2: PyTorch default uniform(-1/sqrt(fan_in), 1/sqrt(fan_in)); weight kept
    # in its native (out_features, in_features) = (1, 2H) row layout.
    bound = 1.0 / float(jnp.sqrt(float(NUM_LAYERS * HIDDEN)))
    wlin = jax.random.uniform(ks[4], (OUT_DIM, NUM_LAYERS * HIDDEN),
                              jnp.float32, -bound, bound)
    blin = jax.random.uniform(ks[5], (OUT_DIM,), jnp.float32, -bound, bound)

    return dict(
        wih0=wih0.T, whh0=whh0.T, b0=b0,          # (60,128), (32,128), (1,128)
        wih1=wih1.T, whh1=whh1.T, b1=b1,          # (32,128), (32,128), (1,128)
        wlin=wlin,                                 # (1, 64)
        blin=blin.reshape(1, OUT_DIM),             # (1, 1)
    )


def reference_forward(x, p):
    """Pure-JAX reference of the same forward pass (sanity check)."""
    B = x.shape[0]
    H = HIDDEN
    h0 = c0 = h1 = c1 = jnp.zeros((B, H), jnp.float32)

    def gates(xin, h, wih, whh, b):
        g = xin @ wih + h @ whh + b
        return (jax.nn.sigmoid(g[:, :H]), jax.nn.sigmoid(g[:, H:2 * H]),
                jnp.tanh(g[:, 2 * H:3 * H]), jax.nn.sigmoid(g[:, 3 * H:]))

    for t in range(x.shape[1]):
        x_t = x[:, t, :]
        i0, f0, g0, o0 = gates(x_t, h0, p["wih0"], p["whh0"], p["b0"])
        c0 = f0 * c0 + i0 * g0
        h0 = o0 * jnp.tanh(c0)
        i1, f1, g1, o1 = gates(h0, h1, p["wih1"], p["whh1"], p["b1"])
        c1 = f1 * c1 + i1 * g1
        h1 = o1 * jnp.tanh(c1)
    feat = jnp.concatenate([h0, h1], axis=-1)                     # (B, 2H)
    return (feat @ p["wlin"].T + p["blin"])[:, -1]


if __name__ == "__main__":
    key = jax.random.PRNGKey(0)
    kx, kp = jax.random.split(key)
    x = jax.random.normal(kx, (BATCH, SEQ, INPUT_DIM), jnp.float32)
    params = init_params(kp)

    out = jax.block_until_ready(aaaa_forward(x, params))
    ref = reference_forward(x, params)

    assert out.shape == (BATCH,)
    assert jnp.allclose(out, ref, atol=1e-4, rtol=1e-4)
    print("KERNEL_OK")
</pallas_src>

<mosaic_0001>
module attributes {stable_mosaic.version = 11 : i64} {
  func.func @lstm_head_kernel(%arg0: memref<4x8x60xf32, #tpu.memory_space<vmem>>, %arg1: memref<60x128xf32, #tpu.memory_space<vmem>>, %arg2: memref<32x128xf32, #tpu.memory_space<vmem>>, %arg3: memref<1x128xf32, #tpu.memory_space<vmem>>, %arg4: memref<32x128xf32, #tpu.memory_space<vmem>>, %arg5: memref<32x128xf32, #tpu.memory_space<vmem>>, %arg6: memref<1x128xf32, #tpu.memory_space<vmem>>, %arg7: memref<1x64xf32, #tpu.memory_space<vmem>>, %arg8: memref<1x1xf32, #tpu.memory_space<vmem>>, %arg9: memref<4x1xf32, #tpu.memory_space<vmem>>) attributes {dimension_semantics = [], scalar_prefetch = 0 : i64, scratch_operands = 0 : i64, tpu.core_type = #tpu.core_type<tc>} {
    %c0 = arith.constant 0 : index
    %c0_0 = arith.constant 0 : index
    %c0_1 = arith.constant 0 : index
    %0 = vector.load %arg0[%c0, %c0_0, %c0_1] : memref<4x8x60xf32, #tpu.memory_space<vmem>>, vector<4x8x60xf32>
    %1 = vector.shape_cast %0 : vector<4x8x60xf32> to vector<32x60xf32>
    %c0_2 = arith.constant 0 : index
    %c0_3 = arith.constant 0 : index
    %2 = vector.load %arg1[%c0_2, %c0_3] : memref<60x128xf32, #tpu.memory_space<vmem>>, vector<60x128xf32>
    %cst = arith.constant dense<0.000000e+00> : vector<32x128xf32>
    %3 = tpu.matmul %1, %2, %cst {dimension_numbers = #tpu.dot_dimension_numbers<[1], [0], [0], [1], [0, 0, 1, 1], [], []>} : vector<32x60xf32>, vector<60x128xf32>, vector<32x128xf32> -> vector<32x128xf32>
    %c0_4 = arith.constant 0 : index
    %c0_5 = arith.constant 0 : index
    %4 = vector.load %arg3[%c0_4, %c0_5] : memref<1x128xf32, #tpu.memory_space<vmem>>, vector<1x128xf32>
    %5 = vector.broadcast %4 : vector<1x128xf32> to vector<32x128xf32>
    %6 = arith.addf %3, %5 : vector<32x128xf32>
    %7 = vector.shape_cast %6 : vector<32x128xf32> to vector<4x8x128xf32>
    %c0_6 = arith.constant 0 : index
    %c0_7 = arith.constant 0 : index
    %8 = vector.load %arg2[%c0_6, %c0_7] : memref<32x128xf32, #tpu.memory_space<vmem>>, vector<32x128xf32>
    %c0_8 = arith.constant 0 : index
    %c0_9 = arith.constant 0 : index
    %9 = vector.load %arg4[%c0_8, %c0_9] : memref<32x128xf32, #tpu.memory_space<vmem>>, vector<32x128xf32>
    %c0_10 = arith.constant 0 : index
    %c0_11 = arith.constant 0 : index
    %10 = vector.load %arg5[%c0_10, %c0_11] : memref<32x128xf32, #tpu.memory_space<vmem>>, vector<32x128xf32>
    %c0_12 = arith.constant 0 : index
    %c0_13 = arith.constant 0 : index
    %11 = vector.load %arg6[%c0_12, %c0_13] : memref<1x128xf32, #tpu.memory_space<vmem>>, vector<1x128xf32>
    %12 = vector.shape_cast %11 : vector<1x128xf32> to vector<1x128xf32>
    %13 = vector.broadcast %12 : vector<1x128xf32> to vector<4x128xf32>
    %cst_14 = arith.constant 0.000000e+00 : f32
    %14 = vector.broadcast %cst_14 : f32 to vector<4x32xf32>
    %15 = vector.extract_strided_slice %7 {offsets = [0, 0, 0], sizes = [4, 1, 128], strides = [1, 1, 1]} : vector<4x8x128xf32> to vector<4x1x128xf32>
    %16 = vector.shape_cast %15 : vector<4x1x128xf32> to vector<4x128xf32>
    %cst_15 = arith.constant dense<0.000000e+00> : vector<4x128xf32>
    %17 = tpu.matmul %14, %8, %cst_15 {dimension_numbers = #tpu.dot_dimension_numbers<[1], [0], [0], [1], [0, 0, 1, 1], [], []>} : vector<4x32xf32>, vector<32x128xf32>, vector<4x128xf32> -> vector<4x128xf32>
    %18 = arith.addf %16, %17 : vector<4x128xf32>
    %19 = arith.negf %18 : vector<4x128xf32>
    %20 = math.exp %19 : vector<4x128xf32>
    %cst_16 = arith.constant 1.000000e+00 : f32
    %21 = vector.broadcast %cst_16 : f32 to vector<4x128xf32>
    %22 = arith.addf %21, %20 : vector<4x128xf32>
    %23 = arith.divf %21, %22 : vector<4x128xf32>
    %24 = vector.extract_strided_slice %23 {offsets = [0, 0], sizes = [4, 32], strides = [1, 1]} : vector<4x128xf32> to vector<4x32xf32>
    %25 = vector.extract_strided_slice %23 {offsets = [0, 32], sizes = [4, 32], strides = [1, 1]} : vector<4x128xf32> to vector<4x32xf32>
    %26 = vector.extract_strided_slice %23 {offsets = [0, 96], sizes = [4, 32], strides = [1, 1]} : vector<4x128xf32> to vector<4x32xf32>
    %27 = vector.extract_strided_slice %18 {offsets = [0, 64], sizes = [4, 32], strides = [1, 1]} : vector<4x128xf32> to vector<4x32xf32>
    %28 = math.tanh %27 : vector<4x32xf32>
    %29 = arith.mulf %25, %14 : vector<4x32xf32>
    %30 = arith.mulf %24, %28 : vector<4x32xf32>
    %31 = arith.addf %29, %30 : vector<4x32xf32>
    %32 = math.tanh %31 : vector<4x32xf32>
    %33 = arith.mulf %26, %32 : vector<4x32xf32>
    %34 = vector.extract_strided_slice %7 {offsets = [0, 1, 0], sizes = [4, 1, 128], strides = [1, 1, 1]} : vector<4x8x128xf32> to vector<4x1x128xf32>
    %35 = vector.shape_cast %34 : vector<4x1x128xf32> to vector<4x128xf32>
    %cst_17 = arith.constant dense<0.000000e+00> : vector<4x128xf32>
    %36 = tpu.matmul %33, %8, %cst_17 {dimension_numbers = #tpu.dot_dimension_numbers<[1], [0], [0], [1], [0, 0, 1, 1], [], []>} : vector<4x32xf32>, vector<32x128xf32>, vector<4x128xf32> -> vector<4x128xf32>
    %37 = arith.addf %35, %36 : vector<4x128xf32>
    %38 = arith.negf %37 : vector<4x128xf32>
    %39 = math.exp %38 : vector<4x128xf32>
    %cst_18 = arith.constant 1.000000e+00 : f32
    %40 = vector.broadcast %cst_18 : f32 to vector<4x128xf32>
    %41 = arith.addf %40, %39 : vector<4x128xf32>
    %42 = arith.divf %40, %41 : vector<4x128xf32>
    %43 = vector.extract_strided_slice %42 {offsets = [0, 0], sizes = [4, 32], strides = [1, 1]} : vector<4x128xf32> to vector<4x32xf32>
    %44 = vector.extract_strided_slice %42 {offsets = [0, 32], sizes = [4, 32], strides = [1, 1]} : vector<4x128xf32> to vector<4x32xf32>
    %45 = vector.extract_strided_slice %42 {offsets = [0, 96], sizes = [4, 32], strides = [1, 1]} : vector<4x128xf32> to vector<4x32xf32>
    %46 = vector.extract_strided_slice %37 {offsets = [0, 64], sizes = [4, 32], strides = [1, 1]} : vector<4x128xf32> to vector<4x32xf32>
    %47 = math.tanh %46 : vector<4x32xf32>
    %48 = arith.mulf %44, %31 : vector<4x32xf32>
    %49 = arith.mulf %43, %47 : vector<4x32xf32>
    %50 = arith.addf %48, %49 : vector<4x32xf32>
    %51 = math.tanh %50 : vector<4x32xf32>
    %52 = arith.mulf %45, %51 : vector<4x32xf32>
    %53 = vector.extract_strided_slice %7 {offsets = [0, 2, 0], sizes = [4, 1, 128], strides = [1, 1, 1]} : vector<4x8x128xf32> to vector<4x1x128xf32>
    %54 = vector.shape_cast %53 : vector<4x1x128xf32> to vector<4x128xf32>
    %cst_19 = arith.constant dense<0.000000e+00> : vector<4x128xf32>
    %55 = tpu.matmul %52, %8, %cst_19 {dimension_numbers = #tpu.dot_dimension_numbers<[1], [0], [0], [1], [0, 0, 1, 1], [], []>} : vector<4x32xf32>, vector<32x128xf32>, vector<4x128xf32> -> vector<4x128xf32>
    %56 = arith.addf %54, %55 : vector<4x128xf32>
    %57 = arith.negf %56 : vector<4x128xf32>
    %58 = math.exp %57 : vector<4x128xf32>
    %cst_20 = arith.constant 1.000000e+00 : f32
    %59 = vector.broadcast %cst_20 : f32 to vector<4x128xf32>
    %60 = arith.addf %59, %58 : vector<4x128xf32>
    %61 = arith.divf %59, %60 : vector<4x128xf32>
    %62 = vector.extract_strided_slice %61 {offsets = [0, 0], sizes = [4, 32], strides = [1, 1]} : vector<4x128xf32> to vector<4x32xf32>
    %63 = vector.extract_strided_slice %61 {offsets = [0, 32], sizes = [4, 32], strides = [1, 1]} : vector<4x128xf32> to vector<4x32xf32>
    %64 = vector.extract_strided_slice %61 {offsets = [0, 96], sizes = [4, 32], strides = [1, 1]} : vector<4x128xf32> to vector<4x32xf32>
    %65 = vector.extract_strided_slice %56 {offsets = [0, 64], sizes = [4, 32], strides = [1, 1]} : vector<4x128xf32> to vector<4x32xf32>
    %66 = math.tanh %65 : vector<4x32xf32>
    %67 = arith.mulf %63, %50 : vector<4x32xf32>
    %68 = arith.mulf %62, %66 : vector<4x32xf32>
    %69 = arith.addf %67, %68 : vector<4x32xf32>
    %70 = math.tanh %69 : vector<4x32xf32>
    %71 = arith.mulf %64, %70 : vector<4x32xf32>
    %72 = vector.extract_strided_slice %7 {offsets = [0, 3, 0], sizes = [4, 1, 128], strides = [1, 1, 1]} : vector<4x8x128xf32> to vector<4x1x128xf32>
    %73 = vector.shape_cast %72 : vector<4x1x128xf32> to vector<4x128xf32>
    %cst_21 = arith.constant dense<0.000000e+00> : vector<4x128xf32>
    %74 = tpu.matmul %71, %8, %cst_21 {dimension_numbers = #tpu.dot_dimension_numbers<[1], [0], [0], [1], [0, 0, 1, 1], [], []>} : vector<4x32xf32>, vector<32x128xf32>, vector<4x128xf32> -> vector<4x128xf32>
    %75 = arith.addf %73, %74 : vector<4x128xf32>
    %76 = arith.negf %75 : vector<4x128xf32>
    %77 = math.exp %76 : vector<4x128xf32>
    %cst_22 = arith.constant 1.000000e+00 : f32
    %78 = vector.broadcast %cst_22 : f32 to vector<4x128xf32>
    %79 = arith.addf %78, %77 : vector<4x128xf32>
    %80 = arith.divf %78, %79 : vector<4x128xf32>
    %81 = vector.extract_strided_slice %80 {offsets = [0, 0], sizes = [4, 32], strides = [1, 1]} : vector<4x128xf32> to vector<4x32xf32>
    %82 = vector.extract_strided_slice %80 {offsets = [0, 32], sizes = [4, 32], strides = [1, 1]} : vector<4x128xf32> to vector<4x32xf32>
    %83 = vector.extract_strided_slice %80 {offsets = [0, 96], sizes = [4, 32], strides = [1, 1]} : vector<4x128xf32> to vector<4x32xf32>
    %84 = vector.extract_strided_slice %75 {offsets = [0, 64], sizes = [4, 32], strides = [1, 1]} : vector<4x128xf32> to vector<4x32xf32>
    %85 = math.tanh %84 : vector<4x32xf32>
    %86 = arith.mulf %82, %69 : vector<4x32xf32>
    %87 = arith.mulf %81, %85 : vector<4x32xf32>
    %88 = arith.addf %86, %87 : vector<4x32xf32>
    %89 = math.tanh %88 : vector<4x32xf32>
    %90 = arith.mulf %83, %89 : vector<4x32xf32>
    %91 = vector.extract_strided_slice %7 {offsets = [0, 4, 0], sizes = [4, 1, 128], strides = [1, 1, 1]} : vector<4x8x128xf32> to vector<4x1x128xf32>
    %92 = vector.shape_cast %91 : vector<4x1x128xf32> to vector<4x128xf32>
    %cst_23 = arith.constant dense<0.000000e+00> : vector<4x128xf32>
    %93 = tpu.matmul %90, %8, %cst_23 {dimension_numbers = #tpu.dot_dimension_numbers<[1], [0], [0], [1], [0, 0, 1, 1], [], []>} : vector<4x32xf32>, vector<32x128xf32>, vector<4x128xf32> -> vector<4x128xf32>
    %94 = arith.addf %92, %93 : vector<4x128xf32>
    %95 = arith.negf %94 : vector<4x128xf32>
    %96 = math.exp %95 : vector<4x128xf32>
    %cst_24 = arith.constant 1.000000e+00 : f32
    %97 = vector.broadcast %cst_24 : f32 to vector<4x128xf32>
    %98 = arith.addf %97, %96 : vector<4x128xf32>
    %99 = arith.divf %97, %98 : vector<4x128xf32>
    %100 = vector.extract_strided_slice %99 {offsets = [0, 0], sizes = [4, 32], strides = [1, 1]} : vector<4x128xf32> to vector<4x32xf32>
    %101 = vector.extract_strided_slice %99 {offsets = [0, 32], sizes = [4, 32], strides = [1, 1]} : vector<4x128xf32> to vector<4x32xf32>
    %102 = vector.extract_strided_slice %99 {offsets = [0, 96], sizes = [4, 32], strides = [1, 1]} : vector<4x128xf32> to vector<4x32xf32>
    %103 = vector.extract_strided_slice %94 {offsets = [0, 64], sizes = [4, 32], strides = [1, 1]} : vector<4x128xf32> to vector<4x32xf32>
    %104 = math.tanh %103 : vector<4x32xf32>
    %105 = arith.mulf %101, %88 : vector<4x32xf32>
    %106 = arith.mulf %100, %104 : vector<4x32xf32>
    %107 = arith.addf %105, %106 : vector<4x32xf32>
    %108 = math.tanh %107 : vector<4x32xf32>
    %109 = arith.mulf %102, %108 : vector<4x32xf32>
    %110 = vector.extract_strided_slice %7 {offsets = [0, 5, 0], sizes = [4, 1, 128], strides = [1, 1, 1]} : vector<4x8x128xf32> to vector<4x1x128xf32>
    %111 = vector.shape_cast %110 : vector<4x1x128xf32> to vector<4x128xf32>
    %cst_25 = arith.constant dense<0.000000e+00> : vector<4x128xf32>
    %112 = tpu.matmul %109, %8, %cst_25 {dimension_numbers = #tpu.dot_dimension_numbers<[1], [0], [0], [1], [0, 0, 1, 1], [], []>} : vector<4x32xf32>, vector<32x128xf32>, vector<4x128xf32> -> vector<4x128xf32>
    %113 = arith.addf %111, %112 : vector<4x128xf32>
    %114 = arith.negf %113 : vector<4x128xf32>
    %115 = math.exp %114 : vector<4x128xf32>
    %cst_26 = arith.constant 1.000000e+00 : f32
    %116 = vector.broadcast %cst_26 : f32 to vector<4x128xf32>
    %117 = arith.addf %116, %115 : vector<4x128xf32>
    %118 = arith.divf %116, %117 : vector<4x128xf32>
    %119 = vector.extract_strided_slice %118 {offsets = [0, 0], sizes = [4, 32], strides = [1, 1]} : vector<4x128xf32> to vector<4x32xf32>
    %120 = vector.extract_strided_slice %118 {offsets = [0, 32], sizes = [4, 32], strides = [1, 1]} : vector<4x128xf32> to vector<4x32xf32>
    %121 = vector.extract_strided_slice %118 {offsets = [0, 96], sizes = [4, 32], strides = [1, 1]} : vector<4x128xf32> to vector<4x32xf32>
    %122 = vector.extract_strided_slice %113 {offsets = [0, 64], sizes = [4, 32], strides = [1, 1]} : vector<4x128xf32> to vector<4x32xf32>
    %123 = math.tanh %122 : vector<4x32xf32>
    %124 = arith.mulf %120, %107 : vector<4x32xf32>
    %125 = arith.mulf %119, %123 : vector<4x32xf32>
    %126 = arith.addf %124, %125 : vector<4x32xf32>
    %127 = math.tanh %126 : vector<4x32xf32>
    %128 = arith.mulf %121, %127 : vector<4x32xf32>
    %129 = vector.extract_strided_slice %7 {offsets = [0, 6, 0], sizes = [4, 1, 128], strides = [1, 1, 1]} : vector<4x8x128xf32> to vector<4x1x128xf32>
    %130 = vector.shape_cast %129 : vector<4x1x128xf32> to vector<4x128xf32>
    %cst_27 = arith.constant dense<0.000000e+00> : vector<4x128xf32>
    %131 = tpu.matmul %128, %8, %cst_27 {dimension_numbers = #tpu.dot_dimension_numbers<[1], [0], [0], [1], [0, 0, 1, 1], [], []>} : vector<4x32xf32>, vector<32x128xf32>, vector<4x128xf32> -> vector<4x128xf32>
    %132 = arith.addf %130, %131 : vector<4x128xf32>
    %133 = arith.negf %132 : vector<4x128xf32>
    %134 = math.exp %133 : vector<4x128xf32>
    %cst_28 = arith.constant 1.000000e+00 : f32
    %135 = vector.broadcast %cst_28 : f32 to vector<4x128xf32>
    %136 = arith.addf %135, %134 : vector<4x128xf32>
    %137 = arith.divf %135, %136 : vector<4x128xf32>
    %138 = vector.extract_strided_slice %137 {offsets = [0, 0], sizes = [4, 32], strides = [1, 1]} : vector<4x128xf32> to vector<4x32xf32>
    %139 = vector.extract_strided_slice %137 {offsets = [0, 32], sizes = [4, 32], strides = [1, 1]} : vector<4x128xf32> to vector<4x32xf32>
    %140 = vector.extract_strided_slice %137 {offsets = [0, 96], sizes = [4, 32], strides = [1, 1]} : vector<4x128xf32> to vector<4x32xf32>
    %141 = vector.extract_strided_slice %132 {offsets = [0, 64], sizes = [4, 32], strides = [1, 1]} : vector<4x128xf32> to vector<4x32xf32>
    %142 = math.tanh %141 : vector<4x32xf32>
    %143 = arith.mulf %139, %126 : vector<4x32xf32>
    %144 = arith.mulf %138, %142 : vector<4x32xf32>
    %145 = arith.addf %143, %144 : vector<4x32xf32>
    %146 = math.tanh %145 : vector<4x32xf32>
    %147 = arith.mulf %140, %146 : vector<4x32xf32>
    %148 = vector.extract_strided_slice %7 {offsets = [0, 7, 0], sizes = [4, 1, 128], strides = [1, 1, 1]} : vector<4x8x128xf32> to vector<4x1x128xf32>
    %149 = vector.shape_cast %148 : vector<4x1x128xf32> to vector<4x128xf32>
    %cst_29 = arith.constant dense<0.000000e+00> : vector<4x128xf32>
    %150 = tpu.matmul %147, %8, %cst_29 {dimension_numbers = #tpu.dot_dimension_numbers<[1], [0], [0], [1], [0, 0, 1, 1], [], []>} : vector<4x32xf32>, vector<32x128xf32>, vector<4x128xf32> -> vector<4x128xf32>
    %151 = arith.addf %149, %150 : vector<4x128xf32>
    %152 = arith.negf %151 : vector<4x128xf32>
    %153 = math.exp %152 : vector<4x128xf32>
    %cst_30 = arith.constant 1.000000e+00 : f32
    %154 = vector.broadcast %cst_30 : f32 to vector<4x128xf32>
    %155 = arith.addf %154, %153 : vector<4x128xf32>
    %156 = arith.divf %154, %155 : vector<4x128xf32>
    %157 = vector.extract_strided_slice %156 {offsets = [0, 0], sizes = [4, 32], strides = [1, 1]} : vector<4x128xf32> to vector<4x32xf32>
    %158 = vector.extract_strided_slice %156 {offsets = [0, 32], sizes = [4, 32], strides = [1, 1]} : vector<4x128xf32> to vector<4x32xf32>
    %159 = vector.extract_strided_slice %156 {offsets = [0, 96], sizes = [4, 32], strides = [1, 1]} : vector<4x128xf32> to vector<4x32xf32>
    %160 = vector.extract_strided_slice %151 {offsets = [0, 64], sizes = [4, 32], strides = [1, 1]} : vector<4x128xf32> to vector<4x32xf32>
    %161 = math.tanh %160 : vector<4x32xf32>
    %162 = arith.mulf %158, %145 : vector<4x32xf32>
    %163 = arith.mulf %157, %161 : vector<4x32xf32>
    %164 = arith.addf %162, %163 : vector<4x32xf32>
    %165 = math.tanh %164 : vector<4x32xf32>
    %166 = arith.mulf %159, %165 : vector<4x32xf32>
    %cst_31 = arith.constant dense<0.000000e+00> : vector<4x128xf32>
    %167 = tpu.matmul %33, %9, %cst_31 {dimension_numbers = #tpu.dot_dimension_numbers<[1], [0], [0], [1], [0, 0, 1, 1], [], []>} : vector<4x32xf32>, vector<32x128xf32>, vector<4x128xf32> -> vector<4x128xf32>
    %168 = arith.addf %167, %13 : vector<4x128xf32>
    %cst_32 = arith.constant dense<0.000000e+00> : vector<4x128xf32>
    %169 = tpu.matmul %14, %10, %cst_32 {dimension_numbers = #tpu.dot_dimension_numbers<[1], [0], [0], [1], [0, 0, 1, 1], [], []>} : vector<4x32xf32>, vector<32x128xf32>, vector<4x128xf32> -> vector<4x128xf32>
    %170 = arith.addf %168, %169 : vector<4x128xf32>
    %171 = arith.negf %170 : vector<4x128xf32>
    %172 = math.exp %171 : vector<4x128xf32>
    %cst_33 = arith.constant 1.000000e+00 : f32
    %173 = vector.broadcast %cst_33 : f32 to vector<4x128xf32>
    %174 = arith.addf %173, %172 : vector<4x128xf32>
    %175 = arith.divf %173, %174 : vector<4x128xf32>
    %176 = vector.extract_strided_slice %175 {offsets = [0, 0], sizes = [4, 32], strides = [1, 1]} : vector<4x128xf32> to vector<4x32xf32>
    %177 = vector.extract_strided_slice %175 {offsets = [0, 32], sizes = [4, 32], strides = [1, 1]} : vector<4x128xf32> to vector<4x32xf32>
    %178 = vector.extract_strided_slice %175 {offsets = [0, 96], sizes = [4, 32], strides = [1, 1]} : vector<4x128xf32> to vector<4x32xf32>
    %179 = vector.extract_strided_slice %170 {offsets = [0, 64], sizes = [4, 32], strides = [1, 1]} : vector<4x128xf32> to vector<4x32xf32>
    %180 = math.tanh %179 : vector<4x32xf32>
    %181 = arith.mulf %177, %14 : vector<4x32xf32>
    %182 = arith.mulf %176, %180 : vector<4x32xf32>
    %183 = arith.addf %181, %182 : vector<4x32xf32>
    %184 = math.tanh %183 : vector<4x32xf32>
    %185 = arith.mulf %178, %184 : vector<4x32xf32>
    %cst_34 = arith.constant dense<0.000000e+00> : vector<4x128xf32>
    %186 = tpu.matmul %52, %9, %cst_34 {dimension_numbers = #tpu.dot_dimension_numbers<[1], [0], [0], [1], [0, 0, 1, 1], [], []>} : vector<4x32xf32>, vector<32x128xf32>, vector<4x128xf32> -> vector<4x128xf32>
    %187 = arith.addf %186, %13 : vector<4x128xf32>
    %cst_35 = arith.constant dense<0.000000e+00> : vector<4x128xf32>
    %188 = tpu.matmul %185, %10, %cst_35 {dimension_numbers = #tpu.dot_dimension_numbers<[1], [0], [0], [1], [0, 0, 1, 1], [], []>} : vector<4x32xf32>, vector<32x128xf32>, vector<4x128xf32> -> vector<4x128xf32>
    %189 = arith.addf %187, %188 : vector<4x128xf32>
    %190 = arith.negf %189 : vector<4x128xf32>
    %191 = math.exp %190 : vector<4x128xf32>
    %cst_36 = arith.constant 1.000000e+00 : f32
    %192 = vector.broadcast %cst_36 : f32 to vector<4x128xf32>
    %193 = arith.addf %192, %191 : vector<4x128xf32>
    %194 = arith.divf %192, %193 : vector<4x128xf32>
    %195 = vector.extract_strided_slice %194 {offsets = [0, 0], sizes = [4, 32], strides = [1, 1]} : vector<4x128xf32> to vector<4x32xf32>
    %196 = vector.extract_strided_slice %194 {offsets = [0, 32], sizes = [4, 32], strides = [1, 1]} : vector<4x128xf32> to vector<4x32xf32>
    %197 = vector.extract_strided_slice %194 {offsets = [0, 96], sizes = [4, 32], strides = [1, 1]} : vector<4x128xf32> to vector<4x32xf32>
    %198 = vector.extract_strided_slice %189 {offsets = [0, 64], sizes = [4, 32], strides = [1, 1]} : vector<4x128xf32> to vector<4x32xf32>
    %199 = math.tanh %198 : vector<4x32xf32>
    %200 = arith.mulf %196, %183 : vector<4x32xf32>
    %201 = arith.mulf %195, %199 : vector<4x32xf32>
    %202 = arith.addf %200, %201 : vector<4x32xf32>
    %203 = math.tanh %202 : vector<4x32xf32>
    %204 = arith.mulf %197, %203 : vector<4x32xf32>
    %cst_37 = arith.constant dense<0.000000e+00> : vector<4x128xf32>
    %205 = tpu.matmul %71, %9, %cst_37 {dimension_numbers = #tpu.dot_dimension_numbers<[1], [0], [0], [1], [0, 0, 1, 1], [], []>} : vector<4x32xf32>, vector<32x128xf32>, vector<4x128xf32> -> vector<4x128xf32>
    %206 = arith.addf %205, %13 : vector<4x128xf32>
    %cst_38 = arith.constant dense<0.000000e+00> : vector<4x128xf32>
    %207 = tpu.matmul %204, %10, %cst_38 {dimension_numbers = #tpu.dot_dimension_numbers<[1], [0], [0], [1], [0, 0, 1, 1], [], []>} : vector<4x32xf32>, vector<32x128xf32>, vector<4x128xf32> -> vector<4x128xf32>
    %208 = arith.addf %206, %207 : vector<4x128xf32>
    %209 = arith.negf %208 : vector<4x128xf32>
    %210 = math.exp %209 : vector<4x128xf32>
    %cst_39 = arith.constant 1.000000e+00 : f32
    %211 = vector.broadcast %cst_39 : f32 to vector<4x128xf32>
    %212 = arith.addf %211, %210 : vector<4x128xf32>
    %213 = arith.divf %211, %212 : vector<4x128xf32>
    %214 = vector.extract_strided_slice %213 {offsets = [0, 0], sizes = [4, 32], strides = [1, 1]} : vector<4x128xf32> to vector<4x32xf32>
    %215 = vector.extract_strided_slice %213 {offsets = [0, 32], sizes = [4, 32], strides = [1, 1]} : vector<4x128xf32> to vector<4x32xf32>
    %216 = vector.extract_strided_slice %213 {offsets = [0, 96], sizes = [4, 32], strides = [1, 1]} : vector<4x128xf32> to vector<4x32xf32>
    %217 = vector.extract_strided_slice %208 {offsets = [0, 64], sizes = [4, 32], strides = [1, 1]} : vector<4x128xf32> to vector<4x32xf32>
    %218 = math.tanh %217 : vector<4x32xf32>
    %219 = arith.mulf %215, %202 : vector<4x32xf32>
    %220 = arith.mulf %214, %218 : vector<4x32xf32>
    %221 = arith.addf %219, %220 : vector<4x32xf32>
    %222 = math.tanh %221 : vector<4x32xf32>
    %223 = arith.mulf %216, %222 : vector<4x32xf32>
    %cst_40 = arith.constant dense<0.000000e+00> : vector<4x128xf32>
    %224 = tpu.matmul %90, %9, %cst_40 {dimension_numbers = #tpu.dot_dimension_numbers<[1], [0], [0], [1], [0, 0, 1, 1], [], []>} : vector<4x32xf32>, vector<32x128xf32>, vector<4x128xf32> -> vector<4x128xf32>
    %225 = arith.addf %224, %13 : vector<4x128xf32>
    %cst_41 = arith.constant dense<0.000000e+00> : vector<4x128xf32>
    %226 = tpu.matmul %223, %10, %cst_41 {dimension_numbers = #tpu.dot_dimension_numbers<[1], [0], [0], [1], [0, 0, 1, 1], [], []>} : vector<4x32xf32>, vector<32x128xf32>, vector<4x128xf32> -> vector<4x128xf32>
    %227 = arith.addf %225, %226 : vector<4x128xf32>
    %228 = arith.negf %227 : vector<4x128xf32>
    %229 = math.exp %228 : vector<4x128xf32>
    %cst_42 = arith.constant 1.000000e+00 : f32
    %230 = vector.broadcast %cst_42 : f32 to vector<4x128xf32>
    %231 = arith.addf %230, %229 : vector<4x128xf32>
    %232 = arith.divf %230, %231 : vector<4x128xf32>
    %233 = vector.extract_strided_slice %232 {offsets = [0, 0], sizes = [4, 32], strides = [1, 1]} : vector<4x128xf32> to vector<4x32xf32>
    %234 = vector.extract_strided_slice %232 {offsets = [0, 32], sizes = [4, 32], strides = [1, 1]} : vector<4x128xf32> to vector<4x32xf32>
    %235 = vector.extract_strided_slice %232 {offsets = [0, 96], sizes = [4, 32], strides = [1, 1]} : vector<4x128xf32> to vector<4x32xf32>
    %236 = vector.extract_strided_slice %227 {offsets = [0, 64], sizes = [4, 32], strides = [1, 1]} : vector<4x128xf32> to vector<4x32xf32>
    %237 = math.tanh %236 : vector<4x32xf32>
    %238 = arith.mulf %234, %221 : vector<4x32xf32>
    %239 = arith.mulf %233, %237 : vector<4x32xf32>
    %240 = arith.addf %238, %239 : vector<4x32xf32>
    %241 = math.tanh %240 : vector<4x32xf32>
    %242 = arith.mulf %235, %241 : vector<4x32xf32>
    %cst_43 = arith.constant dense<0.000000e+00> : vector<4x128xf32>
    %243 = tpu.matmul %109, %9, %cst_43 {dimension_numbers = #tpu.dot_dimension_numbers<[1], [0], [0], [1], [0, 0, 1, 1], [], []>} : vector<4x32xf32>, vector<32x128xf32>, vector<4x128xf32> -> vector<4x128xf32>
    %244 = arith.addf %243, %13 : vector<4x128xf32>
    %cst_44 = arith.constant dense<0.000000e+00> : vector<4x128xf32>
    %245 = tpu.matmul %242, %10, %cst_44 {dimension_numbers = #tpu.dot_dimension_numbers<[1], [0], [0], [1], [0, 0, 1, 1], [], []>} : vector<4x32xf32>, vector<32x128xf32>, vector<4x128xf32> -> vector<4x128xf32>
    %246 = arith.addf %244, %245 : vector<4x128xf32>
    %247 = arith.negf %246 : vector<4x128xf32>
    %248 = math.exp %247 : vector<4x128xf32>
    %cst_45 = arith.constant 1.000000e+00 : f32
    %249 = vector.broadcast %cst_45 : f32 to vector<4x128xf32>
    %250 = arith.addf %249, %248 : vector<4x128xf32>
    %251 = arith.divf %249, %250 : vector<4x128xf32>
    %252 = vector.extract_strided_slice %251 {offsets = [0, 0], sizes = [4, 32], strides = [1, 1]} : vector<4x128xf32> to vector<4x32xf32>
    %253 = vector.extract_strided_slice %251 {offsets = [0, 32], sizes = [4, 32], strides = [1, 1]} : vector<4x128xf32> to vector<4x32xf32>
    %254 = vector.extract_strided_slice %251 {offsets = [0, 96], sizes = [4, 32], strides = [1, 1]} : vector<4x128xf32> to vector<4x32xf32>
    %255 = vector.extract_strided_slice %246 {offsets = [0, 64], sizes = [4, 32], strides = [1, 1]} : vector<4x128xf32> to vector<4x32xf32>
    %256 = math.tanh %255 : vector<4x32xf32>
    %257 = arith.mulf %253, %240 : vector<4x32xf32>
    %258 = arith.mulf %252, %256 : vector<4x32xf32>
    %259 = arith.addf %257, %258 : vector<4x32xf32>
    %260 = math.tanh %259 : vector<4x32xf32>
    %261 = arith.mulf %254, %260 : vector<4x32xf32>
    %cst_46 = arith.constant dense<0.000000e+00> : vector<4x128xf32>
    %262 = tpu.matmul %128, %9, %cst_46 {dimension_numbers = #tpu.dot_dimension_numbers<[1], [0], [0], [1], [0, 0, 1, 1], [], []>} : vector<4x32xf32>, vector<32x128xf32>, vector<4x128xf32> -> vector<4x128xf32>
    %263 = arith.addf %262, %13 : vector<4x128xf32>
    %cst_47 = arith.constant dense<0.000000e+00> : vector<4x128xf32>
    %264 = tpu.matmul %261, %10, %cst_47 {dimension_numbers = #tpu.dot_dimension_numbers<[1], [0], [0], [1], [0, 0, 1, 1], [], []>} : vector<4x32xf32>, vector<32x128xf32>, vector<4x128xf32> -> vector<4x128xf32>
    %265 = arith.addf %263, %264 : vector<4x128xf32>
    %266 = arith.negf %265 : vector<4x128xf32>
    %267 = math.exp %266 : vector<4x128xf32>
    %cst_48 = arith.constant 1.000000e+00 : f32
    %268 = vector.broadcast %cst_48 : f32 to vector<4x128xf32>
    %269 = arith.addf %268, %267 : vector<4x128xf32>
    %270 = arith.divf %268, %269 : vector<4x128xf32>
    %271 = vector.extract_strided_slice %270 {offsets = [0, 0], sizes = [4, 32], strides = [1, 1]} : vector<4x128xf32> to vector<4x32xf32>
    %272 = vector.extract_strided_slice %270 {offsets = [0, 32], sizes = [4, 32], strides = [1, 1]} : vector<4x128xf32> to vector<4x32xf32>
    %273 = vector.extract_strided_slice %270 {offsets = [0, 96], sizes = [4, 32], strides = [1, 1]} : vector<4x128xf32> to vector<4x32xf32>
    %274 = vector.extract_strided_slice %265 {offsets = [0, 64], sizes = [4, 32], strides = [1, 1]} : vector<4x128xf32> to vector<4x32xf32>
    %275 = math.tanh %274 : vector<4x32xf32>
    %276 = arith.mulf %272, %259 : vector<4x32xf32>
    %277 = arith.mulf %271, %275 : vector<4x32xf32>
    %278 = arith.addf %276, %277 : vector<4x32xf32>
    %279 = math.tanh %278 : vector<4x32xf32>
    %280 = arith.mulf %273, %279 : vector<4x32xf32>
    %cst_49 = arith.constant dense<0.000000e+00> : vector<4x128xf32>
    %281 = tpu.matmul %147, %9, %cst_49 {dimension_numbers = #tpu.dot_dimension_numbers<[1], [0], [0], [1], [0, 0, 1, 1], [], []>} : vector<4x32xf32>, vector<32x128xf32>, vector<4x128xf32> -> vector<4x128xf32>
    %282 = arith.addf %281, %13 : vector<4x128xf32>
    %cst_50 = arith.constant dense<0.000000e+00> : vector<4x128xf32>
    %283 = tpu.matmul %280, %10, %cst_50 {dimension_numbers = #tpu.dot_dimension_numbers<[1], [0], [0], [1], [0, 0, 1, 1], [], []>} : vector<4x32xf32>, vector<32x128xf32>, vector<4x128xf32> -> vector<4x128xf32>
    %284 = arith.addf %282, %283 : vector<4x128xf32>
    %285 = arith.negf %284 : vector<4x128xf32>
    %286 = math.exp %285 : vector<4x128xf32>
    %cst_51 = arith.constant 1.000000e+00 : f32
    %287 = vector.broadcast %cst_51 : f32 to vector<4x128xf32>
    %288 = arith.addf %287, %286 : vector<4x128xf32>
    %289 = arith.divf %287, %288 : vector<4x128xf32>
    %290 = vector.extract_strided_slice %289 {offsets = [0, 0], sizes = [4, 32], strides = [1, 1]} : vector<4x128xf32> to vector<4x32xf32>
    %291 = vector.extract_strided_slice %289 {offsets = [0, 32], sizes = [4, 32], strides = [1, 1]} : vector<4x128xf32> to vector<4x32xf32>
    %292 = vector.extract_strided_slice %289 {offsets = [0, 96], sizes = [4, 32], strides = [1, 1]} : vector<4x128xf32> to vector<4x32xf32>
    %293 = vector.extract_strided_slice %284 {offsets = [0, 64], sizes = [4, 32], strides = [1, 1]} : vector<4x128xf32> to vector<4x32xf32>
    %294 = math.tanh %293 : vector<4x32xf32>
    %295 = arith.mulf %291, %278 : vector<4x32xf32>
    %296 = arith.mulf %290, %294 : vector<4x32xf32>
    %297 = arith.addf %295, %296 : vector<4x32xf32>
    %298 = math.tanh %297 : vector<4x32xf32>
    %299 = arith.mulf %292, %298 : vector<4x32xf32>
    %cst_52 = arith.constant dense<0.000000e+00> : vector<4x128xf32>
    %300 = tpu.matmul %166, %9, %cst_52 {dimension_numbers = #tpu.dot_dimension_numbers<[1], [0], [0], [1], [0, 0, 1, 1], [], []>} : vector<4x32xf32>, vector<32x128xf32>, vector<4x128xf32> -> vector<4x128xf32>
    %301 = arith.addf %300, %13 : vector<4x128xf32>
    %cst_53 = arith.constant dense<0.000000e+00> : vector<4x128xf32>
    %302 = tpu.matmul %299, %10, %cst_53 {dimension_numbers = #tpu.dot_dimension_numbers<[1], [0], [0], [1], [0, 0, 1, 1], [], []>} : vector<4x32xf32>, vector<32x128xf32>, vector<4x128xf32> -> vector<4x128xf32>
    %303 = arith.addf %301, %302 : vector<4x128xf32>
    %304 = arith.negf %303 : vector<4x128xf32>
    %305 = math.exp %304 : vector<4x128xf32>
    %cst_54 = arith.constant 1.000000e+00 : f32
    %306 = vector.broadcast %cst_54 : f32 to vector<4x128xf32>
    %307 = arith.addf %306, %305 : vector<4x128xf32>
    %308 = arith.divf %306, %307 : vector<4x128xf32>
    %309 = vector.extract_strided_slice %308 {offsets = [0, 0], sizes = [4, 32], strides = [1, 1]} : vector<4x128xf32> to vector<4x32xf32>
    %310 = vector.extract_strided_slice %308 {offsets = [0, 32], sizes = [4, 32], strides = [1, 1]} : vector<4x128xf32> to vector<4x32xf32>
    %311 = vector.extract_strided_slice %308 {offsets = [0, 96], sizes = [4, 32], strides = [1, 1]} : vector<4x128xf32> to vector<4x32xf32>
    %312 = vector.extract_strided_slice %303 {offsets = [0, 64], sizes = [4, 32], strides = [1, 1]} : vector<4x128xf32> to vector<4x32xf32>
    %313 = math.tanh %312 : vector<4x32xf32>
    %314 = arith.mulf %310, %297 : vector<4x32xf32>
    %315 = arith.mulf %309, %313 : vector<4x32xf32>
    %316 = arith.addf %314, %315 : vector<4x32xf32>
    %317 = math.tanh %316 : vector<4x32xf32>
    %318 = arith.mulf %311, %317 : vector<4x32xf32>
    %c0_55 = arith.constant 0 : index
    %c0_56 = arith.constant 0 : index
    %319 = vector.load %arg7[%c0_55, %c0_56] : memref<1x64xf32, #tpu.memory_space<vmem>>, vector<1x64xf32>
    %320 = vector.extract_strided_slice %319 {offsets = [0, 0], sizes = [1, 32], strides = [1, 1]} : vector<1x64xf32> to vector<1x32xf32>
    %321 = vector.broadcast %320 : vector<1x32xf32> to vector<4x32xf32>
    %322 = arith.mulf %166, %321 : vector<4x32xf32>
    %323 = vector.extract_strided_slice %319 {offsets = [0, 32], sizes = [1, 32], strides = [1, 1]} : vector<1x64xf32> to vector<1x32xf32>
    %324 = vector.broadcast %323 : vector<1x32xf32> to vector<4x32xf32>
    %325 = arith.mulf %318, %324 : vector<4x32xf32>
    %326 = arith.addf %322, %325 : vector<4x32xf32>
    %cst_57 = arith.constant dense<0.000000e+00> : vector<4xf32>
    %327 = vector.multi_reduction <add>, %326, %cst_57 [1] : vector<4x32xf32> to vector<4xf32>
    %328 = vector.shape_cast %327 : vector<4xf32> to vector<4x1xf32>
    %c0_58 = arith.constant 0 : index
    %c0_59 = arith.constant 0 : index
    %329 = vector.load %arg8[%c0_58, %c0_59] : memref<1x1xf32, #tpu.memory_space<vmem>>, vector<1x1xf32>
    %330 = vector.broadcast %329 : vector<1x1xf32> to vector<4x1xf32>
    %331 = arith.addf %328, %330 : vector<4x1xf32>
    %c0_60 = arith.constant 0 : index
    %c0_61 = arith.constant 0 : index
    %332 = vector.load %arg9[%c0_60, %c0_61] : memref<4x1xf32, #tpu.memory_space<vmem>>, vector<4x1xf32>
    tpu.vector_store %arg9[%c0_60, %c0_61], %331 {strides = array<i32>} : memref<4x1xf32, #tpu.memory_space<vmem>>, vector<4x1xf32>,
    return
  }
}

</mosaic_0001>

<llo_original>
// kernel: tpu_custom_call.1
$region0: #{tpu_custom_call.1}
  #allocation0 [shape = 'u32[]', space=smem, size = 0x4, offset = 0x4, fixed_abs, tag = 'smem constant byte address 0x4 - core index']
  #allocation1 [shape = 'u32[144,128]{1,0:T(1,128)}', space=vmem, size = 0x12000, scoped, tag = 'internal scratch']
  #allocation2 [shape = 'f32[1,1]{1,0:T(1,128)S(1)}', space=vmem, size = 0x200, scoped, tag = 'scoped memory for tpu_custom_call.1']
  %s0 = inlined_call_operand.hbm [shape: f32[4,8,60], index: 0, kind: input, shape index: {}]
  %s1 = inlined_call_operand.hbm [shape: f32[60,128], index: 1, kind: input, shape index: {}]
  %s2 = inlined_call_operand.hbm [shape: f32[32,128], index: 2, kind: input, shape index: {}]
  %s3 = inlined_call_operand.vmem [shape: f32[1,128], index: 3, kind: input, shape index: {}]
  %s4 = inlined_call_operand.hbm [shape: f32[32,128], index: 4, kind: input, shape index: {}]
  %s5 = inlined_call_operand.hbm [shape: f32[32,128], index: 5, kind: input, shape index: {}]
  %s6 = inlined_call_operand.vmem [shape: f32[1,128], index: 6, kind: input, shape index: {}]
  %s7 = inlined_call_operand.vmem [shape: f32[1,64], index: 7, kind: input, shape index: {}]
  %s8 = inlined_call_operand.<no memory space> [shape: f32[1,1], index: 8, kind: input, shape index: {}]
  %s9 = inlined_call_operand.vmem [shape: f32[4,1], index: 9, kind: output, shape index: {}]
  %s10 = sld [smem:[#allocation0]]
  $region66: #{tpu_custom_call.1} parent=0
    _
  %s12 = ssub.s32 1, %s10
  %s13 = scalar_select 0, %s12, %s10
  %v14 = vstv %s8
  %15 = vst [vmem:[#allocation2] sm:$0x1] %v14
  $region1: #{tpu_custom_call.1} parent=0
    #allocation3 [shape = 'u8[16384]{0}', space=vmem, size = 0x4000, scoped, tag = 'input window, operand 0, single buffered']
    #allocation4 [shape = 's32[1]{0}', space=sflag, size = 0x4, scoped, tag = 'scoped memory for tpu_custom_call.1']
    #allocation5 [shape = 'u8[32768]{0}', space=vmem, size = 0x8000, scoped, tag = 'input window, operand 1, single buffered']
    #allocation6 [shape = 's32[1]{0}', space=sflag, size = 0x4, scoped, tag = 'scoped memory for tpu_custom_call.1']
    #allocation7 [shape = 'u8[16384]{0}', space=vmem, size = 0x4000, scoped, tag = 'input window, operand 2, single buffered']
    #allocation8 [shape = 'u8[16384]{0}', space=vmem, size = 0x4000, scoped, tag = 'input window, operand 4, single buffered']
    #allocation9 [shape = 's32[1]{0}', space=sflag, size = 0x4, scoped, tag = 'scoped memory for tpu_custom_call.1']
    #allocation10 [shape = 'u8[16384]{0}', space=vmem, size = 0x4000, scoped, tag = 'input window, operand 5, single buffered']
    %16 = vsyncpa [#allocation4], 0
    %17 = vsyncpa [#allocation6], 0
    %18 = vsyncpa [#allocation9], 0
    // Predicated region
    $region2: #{tpu_custom_call.1} parent=1 // pred_check
      _
    $region3: #{tpu_custom_call.1} parent=1 // pred_check_branch
      %20 = sbr.rel (0) target = $region5
    $region4: #{tpu_custom_call.1} parent=1 // pred_region
      %s22 = ssub.s32 512, 512
      %23 = vsyncadd [#allocation4], %s22
      %s24 = sshll.u32 [#allocation3], 4
      %s25 = int_to_ptr.vmem [resolvable:$true] %s24
      %30 = dma.hbm_to_vmem [thread:$0]  %s0, 512, %s25, [#allocation4], 128, 128, 8
    $region5: #{tpu_custom_call.1} parent=1 // pred_fallthru
      _
    // Predicated region
    $region6: #{tpu_custom_call.1} parent=1 // pred_check
      _
    $region7: #{tpu_custom_call.1} parent=1 // pred_check_branch
      %32 = sbr.rel (0) target = $region9
    $region8: #{tpu_custom_call.1} parent=1 // pred_region
      %s34 = ssub.s32 1024, 1024
      %35 = vsyncadd [#allocation6], %s34
      %s36 = sshll.u32 [#allocation5], 4
      %s37 = int_to_ptr.vmem [resolvable:$true] %s36
      %42 = dma.hbm_to_vmem [thread:$0]  %s1, 1024, %s37, [#allocation6], 128, 128, 8
    $region9: #{tpu_custom_call.1} parent=1 // pred_fallthru
      _
    // Predicated region
    $region10: #{tpu_custom_call.1} parent=1 // pred_check
      _
    $region11: #{tpu_custom_call.1} parent=1 // pred_check_branch
      %44 = sbr.rel (0) target = $region13
    $region12: #{tpu_custom_call.1} parent=1 // pred_region
      %s46 = ssub.s32 512, 512
      %47 = vsyncadd [#allocation6], %s46
      %s48 = sshll.u32 [#allocation7], 4
      %s49 = int_to_ptr.vmem [resolvable:$true] %s48
      %54 = dma.hbm_to_vmem [thread:$0]  %s2, 512, %s49, [#allocation6], 128, 128, 8
    $region13: #{tpu_custom_call.1} parent=1 // pred_fallthru
      _
    // Predicated region
    $region14: #{tpu_custom_call.1} parent=1 // pred_check
      _
    $region15: #{tpu_custom_call.1} parent=1 // pred_check_branch
      %56 = sbr.rel (0) target = $region17
    $region16: #{tpu_custom_call.1} parent=1 // pred_region
      _
    $region17: #{tpu_custom_call.1} parent=1 // pred_fallthru
      _
    // Predicated region
    $region18: #{tpu_custom_call.1} parent=1 // pred_check
      _
    $region19: #{tpu_custom_call.1} parent=1 // pred_check_branch
      %58 = sbr.rel (0) target = $region21
    $region20: #{tpu_custom_call.1} parent=1 // pred_region
      %s60 = ssub.s32 512, 512
      %61 = vsyncadd [#allocation9], %s60
      %s62 = sshll.u32 [#allocation8], 4
      %s63 = int_to_ptr.vmem [resolvable:$true] %s62
      %68 = dma.hbm_to_vmem [thread:$0]  %s4, 512, %s63, [#allocation9], 128, 128, 8
    $region21: #{tpu_custom_call.1} parent=1 // pred_fallthru
      _
    // Predicated region
    $region22: #{tpu_custom_call.1} parent=1 // pred_check
      _
    $region23: #{tpu_custom_call.1} parent=1 // pred_check_branch
      %70 = sbr.rel (0) target = $region25
    $region24: #{tpu_custom_call.1} parent=1 // pred_region
      %s72 = ssub.s32 512, 512
      %73 = vsyncadd [#allocation9], %s72
      %s74 = sshll.u32 [#allocation10], 4
      %s75 = int_to_ptr.vmem [resolvable:$true] %s74
      %80 = dma.hbm_to_vmem [thread:$0]  %s5, 512, %s75, [#allocation9], 128, 128, 8
    $region25: #{tpu_custom_call.1} parent=1 // pred_fallthru
      _
    // Predicated region
    $region26: #{tpu_custom_call.1} parent=1 // pred_check
      _
    $region27: #{tpu_custom_call.1} parent=1 // pred_check_branch
      %82 = sbr.rel (0) target = $region29
    $region28: #{tpu_custom_call.1} parent=1 // pred_region
      _
    $region29: #{tpu_custom_call.1} parent=1 // pred_fallthru
      _
    // Predicated region
    $region30: #{tpu_custom_call.1} parent=1 // pred_check
      _
    $region31: #{tpu_custom_call.1} parent=1 // pred_check_branch
      %84 = sbr.rel (0) target = $region33
    $region32: #{tpu_custom_call.1} parent=1 // pred_region
      _
    $region33: #{tpu_custom_call.1} parent=1 // pred_fallthru
      _
    // Predicated region
    $region34: #{tpu_custom_call.1} parent=1 // pred_check
      _
    $region35: #{tpu_custom_call.1} parent=1 // pred_check_branch
      %86 = sbr.rel (0) target = $region37
    $region36: #{tpu_custom_call.1} parent=1 // pred_region
      _
    $region37: #{tpu_custom_call.1} parent=1 // pred_fallthru
      _
    // Predicated region
    $region38: #{tpu_custom_call.1} parent=1 // pred_check
      _
    $region39: #{tpu_custom_call.1} parent=1 // pred_check_branch
      %88 = sbr.rel (0) target = $region41
    $region40: #{tpu_custom_call.1} parent=1 // pred_region
      %89 = dma.done [#allocation4], 512
    $region41: #{tpu_custom_call.1} parent=1 // pred_fallthru
      _
    // Predicated region
    $region42: #{tpu_custom_call.1} parent=1 // pred_check
      _
    $region43: #{tpu_custom_call.1} parent=1 // pred_check_branch
      %91 = sbr.rel (0) target = $region45
    $region44: #{tpu_custom_call.1} parent=1 // pred_region
      %92 = dma.done [#allocation6], 1024
    $region45: #{tpu_custom_call.1} parent=1 // pred_fallthru
      _
    // Predicated region
    $region46: #{tpu_custom_call.1} parent=1 // pred_check
      _
    $region47: #{tpu_custom_call.1} parent=1 // pred_check_branch
      %94 = sbr.rel (0) target = $region49
    $region48: #{tpu_custom_call.1} parent=1 // pred_region
      %95 = dma.done [#allocation6], 512
    $region49: #{tpu_custom_call.1} parent=1 // pred_fallthru
      _
    // Predicated region
    $region50: #{tpu_custom_call.1} parent=1 // pred_check
      _
    $region51: #{tpu_custom_call.1} parent=1 // pred_check_branch
      %97 = sbr.rel (0) target = $region53
    $region52: #{tpu_custom_call.1} parent=1 // pred_region
      %98 = dma.done [#allocation9], 512
    $region53: #{tpu_custom_call.1} parent=1 // pred_fallthru
      _
    // Predicated region
    $region54: #{tpu_custom_call.1} parent=1 // pred_check
      _
    $region55: #{tpu_custom_call.1} parent=1 // pred_check_branch
      %100 = sbr.rel (0) target = $region57
    $region56: #{tpu_custom_call.1} parent=1 // pred_region
      %101 = dma.done [#allocation9], 512
    $region57: #{tpu_custom_call.1} parent=1 // pred_fallthru
      _
    %v102 = vld [vmem:[#allocation3] sm:$0xff]
    %v103 = vld [vmem:[#allocation3 + $0x8] sm:$0xff]
    %v104 = vld [vmem:[#allocation3 + $0x10] sm:$0xff]
    %v105 = vld [vmem:[#allocation3 + $0x18] sm:$0xff]
    %v106 = vld [vmem:[#allocation5] sm:$0xff]
    %v107 = vld [vmem:[#allocation5 + $0x8] sm:$0xff]
    %v108 = vld [vmem:[#allocation5 + $0x10] sm:$0xff]
    %v109 = vld [vmem:[#allocation5 + $0x18] sm:$0xff]
    %v110 = vld [vmem:[#allocation5 + $0x20] sm:$0xff]
    %v111 = vld [vmem:[#allocation5 + $0x28] sm:$0xff]
    %v112 = vld [vmem:[#allocation5 + $0x30] sm:$0xff]
    %v113 = vld [vmem:[#allocation5 + $0x38] sm:$0xf]
    %v114 = vld [vmem:[%s3] sm:$0x1]
    %v116 = vlaneseq
    %v117 = vshrl.u32 %v116, 7
    %v118 = vsub.s32 0, %v117
    %v119 = vrot.slane %v114, %v118
    %vm121 = vcmask 490496
    %v123 = vsel %vm121, %v102, 0
    %v126 = vsel %vm121, %v103, 0
    %v129 = vsel %vm121, %v104, 0
    %v132 = vsel %vm121, %v105, 0
    %vm134 = vcmask 1043456
    %v136 = vsel %vm134, %v113, 0
    %138 = vmatprep.subr.mxu0 0.0
    %139 = vmatpush1.msra.mxu0 %v106
    %140 = vmatprep.subr.mxu0 0.0
    %141 = vmatpush1.msra.mxu0 %v107
    %142 = vmatprep.subr.mxu0 0.0
    %143 = vmatpush1.msra.mxu0 %v108
    %144 = vmatprep.subr.mxu0 0.0
    %145 = vmatpush1.msra.mxu0 %v109
    %146 = vmatprep.subr.mxu0 0.0
    %147 = vmatpush1.msra.mxu0 %v110
    %148 = vmatprep.subr.mxu0 0.0
    %149 = vmatpush1.msra.mxu0 %v111
    %150 = vmatprep.subr.mxu0 0.0
    %151 = vmatpush1.msra.mxu0 %v112
    %152 = vmatprep.subr.mxu0 0.0
    %153 = vmatpush1.msra.mxu0 %v136
    %154 = vmatprep.subr.mxu0 0.0
    %155 = vmatpush1.msra.mxu0 0.0
    %156 = vmatprep.subr.mxu0 0.0
    %157 = vmatpush1.msra.mxu0 0.0
    %158 = vmatprep.subr.mxu0 0.0
    %159 = vmatpush1.msra.mxu0 0.0
    %160 = vmatprep.subr.mxu0 0.0
    %161 = vmatpush1.msra.mxu0 0.0
    %162 = vmatprep.subr.mxu0 0.0
    %163 = vmatpush1.msra.mxu0 0.0
    %164 = vmatprep.subr.mxu0 0.0
    %165 = vmatpush1.msra.mxu0 0.0
    %166 = vmatprep.subr.mxu0 0.0
    %167 = vmatpush1.msra.mxu0 0.0
    %168 = vmatprep.subr.mxu0 0.0
    %169 = vmatpush1.msra.mxu0 0.0
    %170 = vmatprep.subr.mxu0 0.0
    %171 = vmatpush1.msra.mxu0 0.0
    %172 = vmatprep.subr.mxu0 0.0
    %173 = vmatpush1.msra.mxu0 0.0
    %174 = vmatprep.subr.mxu0 0.0
    %175 = vmatpush1.msra.mxu0 0.0
    %176 = vmatprep.subr.mxu0 0.0
    %177 = vmatpush1.msra.mxu0 0.0
    %178 = vmatprep.subr.mxu0 0.0
    %179 = vmatpush1.msra.mxu0 0.0
    %180 = vmatprep.subr.mxu0 0.0
    %181 = vmatpush1.msra.mxu0 0.0
    %182 = vmatprep.subr.mxu0 0.0
    %183 = vmatpush1.msra.mxu0 0.0
    %184 = vmatprep.subr.mxu0 0.0
    %185 = vmatpush1.msra.mxu0 0.0
    %186 = vmatprep.subr.mxu0 0.0
    %187 = vmatpush1.msra.mxu0 0.0
    %188 = vmatprep.subr.mxu0 0.0
    %189 = vmatpush1.msra.mxu0 0.0
    %190 = vmatprep.subr.mxu0 0.0
    %191 = vmatpush1.msra.mxu0 0.0
    %192 = vmatprep.subr.mxu0 0.0
    %193 = vmatpush1.msra.mxu0 0.0
    %194 = vmatprep.subr.mxu0 0.0
    %195 = vmatpush1.msra.mxu0 0.0
    %196 = vmatprep.subr.mxu0 0.0
    %197 = vmatpush1.msra.mxu0 0.0
    %198 = vmatprep.subr.mxu0 0.0
    %199 = vmatpush1.msra.mxu0 0.0
    %200 = vmatprep.subr.mxu0 0.0
    %201 = vmatpush1.msra.mxu0 0.0
    %202 = vmatprep.mubr.f32.mxu0 0.0
    %203 = vmatmul.mubr.f32.gmra.mrb[0].mxu0 %v123
    %v204 = vpop.f32.mrb[0].mxu0
    %v205 = vadd.f32 %v119, %v204
    %v206 = vpop.f32.mrb[0].mxu0
    %207 = vmatprep.mubr.f32.mxu0 0.0
    %208 = vmatmul.mubr.f32.gmra.mrb[0].mxu0 %v126
    %v209 = vpop.f32.mrb[0].mxu0
    %v210 = vadd.f32 %v119, %v209
    %v211 = vpop.f32.mrb[0].mxu0
    %212 = vmatprep.mubr.f32.mxu0 0.0
    %213 = vmatmul.mubr.f32.gmra.mrb[0].mxu0 %v129
    %v214 = vpop.f32.mrb[0].mxu0
    %v215 = vadd.f32 %v119, %v214
    %v216 = vpop.f32.mrb[0].mxu0
    %217 = vmatprep.mubr.f32.mxu0 0.0
    %218 = vmatmul.mubr.f32.gmra.mrb[0].mxu0 %v132
    %v219 = vpop.f32.mrb[0].mxu0
    %v220 = vadd.f32 %v119, %v219
    %v221 = vpop.f32.mrb[0].mxu0
    %222 = vdwg.mxu0
    %v223 = vld [vmem:[#allocation7] sm:$0xff]
    %v224 = vld [vmem:[#allocation7 + $0x8] sm:$0xff]
    %v225 = vld [vmem:[#allocation7 + $0x10] sm:$0xff]
    %v226 = vld [vmem:[#allocation7 + $0x18] sm:$0xff]
    %v227 = vld [vmem:[#allocation8] sm:$0xff]
    %v228 = vld [vmem:[#allocation8 + $0x8] sm:$0xff]
    %v229 = vld [vmem:[#allocation8 + $0x10] sm:$0xff]
    %v230 = vld [vmem:[#allocation8 + $0x18] sm:$0xff]
    %v231 = vld [vmem:[#allocation10] sm:$0xff]
    %v232 = vld [vmem:[#allocation10 + $0x8] sm:$0xff]
    %v233 = vld [vmem:[#allocation10 + $0x10] sm:$0xff]
    %v234 = vld [vmem:[#allocation10 + $0x18] sm:$0xff]
    %v235 = vld [vmem:[%s6] sm:$0x1]
    %v237 = vlaneseq
    %v238 = vshrl.u32 %v237, 7
    %v239 = vsub.s32 0, %v238
    %v240 = vrot.slane %v235, %v239
    %vm242 = vcmask 261120
    %v244 = vsel %vm242, 0.0, 0
    %246 = vmatprep.subr.mxu0 0.0
    %247 = vmatpush1.msra.mxu0 %v223
    %248 = vmatprep.subr.mxu0 0.0
    %249 = vmatpush1.msra.mxu0 %v224
    %250 = vmatprep.subr.mxu0 0.0
    %251 = vmatpush1.msra.mxu0 %v225
    %252 = vmatprep.subr.mxu0 0.0
    %253 = vmatpush1.msra.mxu0 %v226
    %254 = vmatprep.subr.mxu0 0.0
    %255 = vmatpush1.msra.mxu0 0.0
    %256 = vmatprep.subr.mxu0 0.0
    %257 = vmatpush1.msra.mxu0 0.0
    %258 = vmatprep.subr.mxu0 0.0
    %259 = vmatpush1.msra.mxu0 0.0
    %260 = vmatprep.subr.mxu0 0.0
    %261 = vmatpush1.msra.mxu0 0.0
    %262 = vmatprep.subr.mxu0 0.0
    %263 = vmatpush1.msra.mxu0 0.0
    %264 = vmatprep.subr.mxu0 0.0
    %265 = vmatpush1.msra.mxu0 0.0
    %266 = vmatprep.subr.mxu0 0.0
    %267 = vmatpush1.msra.mxu0 0.0
    %268 = vmatprep.subr.mxu0 0.0
    %269 = vmatpush1.msra.mxu0 0.0
    %270 = vmatprep.subr.mxu0 0.0
    %271 = vmatpush1.msra.mxu0 0.0
    %272 = vmatprep.subr.mxu0 0.0
    %273 = vmatpush1.msra.mxu0 0.0
    %274 = vmatprep.subr.mxu0 0.0
    %275 = vmatpush1.msra.mxu0 0.0
    %276 = vmatprep.subr.mxu0 0.0
    %277 = vmatpush1.msra.mxu0 0.0
    %278 = vmatprep.subr.mxu0 0.0
    %279 = vmatpush1.msra.mxu0 0.0
    %280 = vmatprep.subr.mxu0 0.0
    %281 = vmatpush1.msra.mxu0 0.0
    %282 = vmatprep.subr.mxu0 0.0
    %283 = vmatpush1.msra.mxu0 0.0
    %284 = vmatprep.subr.mxu0 0.0
    %285 = vmatpush1.msra.mxu0 0.0
    %286 = vmatprep.subr.mxu0 0.0
    %287 = vmatpush1.msra.mxu0 0.0
    %288 = vmatprep.subr.mxu0 0.0
    %289 = vmatpush1.msra.mxu0 0.0
    %290 = vmatprep.subr.mxu0 0.0
    %291 = vmatpush1.msra.mxu0 0.0
    %292 = vmatprep.subr.mxu0 0.0
    %293 = vmatpush1.msra.mxu0 0.0
    %294 = vmatprep.subr.mxu0 0.0
    %295 = vmatpush1.msra.mxu0 0.0
    %296 = vmatprep.subr.mxu0 0.0
    %297 = vmatpush1.msra.mxu0 0.0
    %298 = vmatprep.subr.mxu0 0.0
    %299 = vmatpush1.msra.mxu0 0.0
    %300 = vmatprep.subr.mxu0 0.0
    %301 = vmatpush1.msra.mxu0 0.0
    %302 = vmatprep.subr.mxu0 0.0
    %303 = vmatpush1.msra.mxu0 0.0
    %304 = vmatprep.subr.mxu0 0.0
    %305 = vmatpush1.msra.mxu0 0.0
    %306 = vmatprep.subr.mxu0 0.0
    %307 = vmatpush1.msra.mxu0 0.0
    %308 = vmatprep.subr.mxu0 0.0
    %309 = vmatpush1.msra.mxu0 0.0
    %310 = vmatprep.mubr.f32.mxu0 0.0
    %311 = vmatmul.mubr.f32.gmra.mrb[0].mxu0 %v244
    %v312 = vpop.f32.mrb[0].mxu0
    %v313 = vadd.f32 0.0, %v312
    %v314 = vpop.f32.mrb[0].mxu0
    %315 = vdwg.mxu0
    %v317 = vrot.slane %v313, 1
    %v318 = vrot.slane %v313, 2
    %v319 = vrot.slane %v313, 3
    %v324 = vadd.f32 %v205, %v313
    %v325 = vadd.f32 %v210, %v317
    %v326 = vadd.f32 %v215, %v318
    %v327 = vadd.f32 %v220, %v319
    %v328 = vxor.u32 %v324, 2147483648
    %v329 = vxor.u32 %v325, 2147483648
    %v330 = vxor.u32 %v326, 2147483648
    %v331 = vxor.u32 %v327, 2147483648
    %v332 = vmul.f32 %v328, 1.442695
    %v333 = vpow.pop %v332
    %v334 = vmul.f32 %v329, 1.442695
    %v335 = vpow.pop %v334
    %v336 = vmul.f32 %v330, 1.442695
    %v337 = vpow.pop %v336
    %v338 = vmul.f32 %v331, 1.442695
    %v339 = vpow.pop %v338
    %v340 = vadd.f32 %v333, 1.0
    %v341 = vadd.f32 %v335, 1.0
    %v342 = vadd.f32 %v337, 1.0
    %v343 = vadd.f32 %v339, 1.0
    %v344 = vrcp.pop %v340
    %v345 = vmul.f32 1.0, %v344
    %v346 = vrcp.pop %v341
    %v347 = vmul.f32 1.0, %v346
    %v348 = vrcp.pop %v342
    %v349 = vmul.f32 1.0, %v348
    %v350 = vrcp.pop %v343
    %v351 = vmul.f32 1.0, %v350
    %v352 = vtanh.pop %v324
    %v353 = vtanh.pop %v325
    %v354 = vtanh.pop %v326
    %v355 = vtanh.pop %v327
    %v356 = vmul.f32 %v345, 0.0
    %v357 = vmul.f32 %v347, 0.0
    %v358 = vmul.f32 %v349, 0.0
    %v359 = vmul.f32 %v351, 0.0
    %364 = vrot.lane.b32.xlu0 %v352, 64
    %v365 = vpop.permute.xlu0 %364
    %366 = vrot.lane.b32.xlu0 %v353, 64
    %v367 = vpop.permute.xlu0 %366
    %368 = vrot.lane.b32.xlu0 %v354, 64
    %v369 = vpop.permute.xlu0 %368
    %370 = vrot.lane.b32.xlu0 %v355, 64
    %v371 = vpop.permute.xlu0 %370
    %v376 = vmul.f32 %v345, %v365
    %v377 = vmul.f32 %v347, %v367
    %v378 = vmul.f32 %v349, %v369
    %v379 = vmul.f32 %v351, %v371
    %384 = vrot.lane.b32.xlu0 %v376, 32
    %v385 = vpop.permute.xlu0 %384
    %386 = vrot.lane.b32.xlu0 %v377, 32
    %v387 = vpop.permute.xlu0 %386
    %388 = vrot.lane.b32.xlu0 %v378, 32
    %v389 = vpop.permute.xlu0 %388
    %390 = vrot.lane.b32.xlu0 %v379, 32
    %v391 = vpop.permute.xlu0 %390
    %v396 = vadd.f32 %v356, %v385
    %v397 = vadd.f32 %v357, %v387
    %v398 = vadd.f32 %v358, %v389
    %v399 = vadd.f32 %v359, %v391
    %v400 = vtanh.pop %v396
    %v401 = vtanh.pop %v397
    %v402 = vtanh.pop %v398
    %v403 = vtanh.pop %v399
    %408 = vrot.lane.b32.xlu0 %v400, 64
    %v409 = vpop.permute.xlu0 %408
    %410 = vrot.lane.b32.xlu0 %v401, 64
    %v411 = vpop.permute.xlu0 %410
    %412 = vrot.lane.b32.xlu0 %v402, 64
    %v413 = vpop.permute.xlu0 %412
    %414 = vrot.lane.b32.xlu0 %v403, 64
    %v415 = vpop.permute.xlu0 %414
    %v420 = vmul.f32 %v345, %v409
    %v421 = vmul.f32 %v347, %v411
    %v422 = vmul.f32 %v349, %v413
    %v423 = vmul.f32 %v351, %v415
    %v428 = vrot.slane %v421, 7
    %vm429 = vcmask 1041409
    %v430 = vsel %vm429, %v428, %v420
    %v431 = vrot.slane %v422, 6
    %vm432 = vcmask 1042434
    %v433 = vsel %vm432, %v431, %v430
    %v434 = vrot.slane %v423, 5
    %vm435 = vcmask 1043459
    %v436 = vsel %vm435, %v434, %v433
    %437 = vrot.lane.b32.xlu0 %v436, 32
    %v438 = vpop.permute.xlu0 %437
    %v439 = vsel %vm242, %v438, 0
    %441 = vmatprep.subr.mxu0 0.0
    %442 = vmatpush1.msra.mxu0 %v223
    %443 = vmatprep.subr.mxu0 0.0
    %444 = vmatpush1.msra.mxu0 %v224
    %445 = vmatprep.subr.mxu0 0.0
    %446 = vmatpush1.msra.mxu0 %v225
    %447 = vmatprep.subr.mxu0 0.0
    %448 = vmatpush1.msra.mxu0 %v226
    %449 = vmatprep.subr.mxu0 0.0
    %450 = vmatpush1.msra.mxu0 0.0
    %451 = vmatprep.subr.mxu0 0.0
    %452 = vmatpush1.msra.mxu0 0.0
    %453 = vmatprep.subr.mxu0 0.0
    %454 = vmatpush1.msra.mxu0 0.0
    %455 = vmatprep.subr.mxu0 0.0
    %456 = vmatpush1.msra.mxu0 0.0
    %457 = vmatprep.subr.mxu0 0.0
    %458 = vmatpush1.msra.mxu0 0.0
    %459 = vmatprep.subr.mxu0 0.0
    %460 = vmatpush1.msra.mxu0 0.0
    %461 = vmatprep.subr.mxu0 0.0
    %462 = vmatpush1.msra.mxu0 0.0
    %463 = vmatprep.subr.mxu0 0.0
    %464 = vmatpush1.msra.mxu0 0.0
    %465 = vmatprep.subr.mxu0 0.0
    %466 = vmatpush1.msra.mxu0 0.0
    %467 = vmatprep.subr.mxu0 0.0
    %468 = vmatpush1.msra.mxu0 0.0
    %469 = vmatprep.subr.mxu0 0.0
    %470 = vmatpush1.msra.mxu0 0.0
    %471 = vmatprep.subr.mxu0 0.0
    %472 = vmatpush1.msra.mxu0 0.0
    %473 = vmatprep.subr.mxu0 0.0
    %474 = vmatpush1.msra.mxu0 0.0
    %475 = vmatprep.subr.mxu0 0.0
    %476 = vmatpush1.msra.mxu0 0.0
    %477 = vmatprep.subr.mxu0 0.0
    %478 = vmatpush1.msra.mxu0 0.0
    %479 = vmatprep.subr.mxu0 0.0
    %480 = vmatpush1.msra.mxu0 0.0
    %481 = vmatprep.subr.mxu0 0.0
    %482 = vmatpush1.msra.mxu0 0.0
    %483 = vmatprep.subr.mxu0 0.0
    %484 = vmatpush1.msra.mxu0 0.0
    %485 = vmatprep.subr.mxu0 0.0
    %486 = vmatpush1.msra.mxu0 0.0
    %487 = vmatprep.subr.mxu0 0.0
    %488 = vmatpush1.msra.mxu0 0.0
    %489 = vmatprep.subr.mxu0 0.0
    %490 = vmatpush1.msra.mxu0 0.0
    %491 = vmatprep.subr.mxu0 0.0
    %492 = vmatpush1.msra.mxu0 0.0
    %493 = vmatprep.subr.mxu0 0.0
    %494 = vmatpush1.msra.mxu0 0.0
    %495 = vmatprep.subr.mxu0 0.0
    %496 = vmatpush1.msra.mxu0 0.0
    %497 = vmatprep.subr.mxu0 0.0
    %498 = vmatpush1.msra.mxu0 0.0
    %499 = vmatprep.subr.mxu0 0.0
    %500 = vmatpush1.msra.mxu0 0.0
    %501 = vmatprep.subr.mxu0 0.0
    %502 = vmatpush1.msra.mxu0 0.0
    %503 = vmatprep.subr.mxu0 0.0
    %504 = vmatpush1.msra.mxu0 0.0
    %505 = vmatprep.mubr.f32.mxu0 0.0
    %506 = vmatmul.mubr.f32.gmra.mrb[0].mxu0 %v439
    %v507 = vpop.f32.mrb[0].mxu0
    %v508 = vadd.f32 0.0, %v507
    %v509 = vpop.f32.mrb[0].mxu0
    %510 = vdwg.mxu0
    %v512 = vrot.slane %v508, 7
    %v513 = vrot.slane %v508, 1
    %v514 = vrot.slane %v508, 2
    %v519 = vadd.f32 %v205, %v512
    %v520 = vadd.f32 %v210, %v508
    %v521 = vadd.f32 %v215, %v513
    %v522 = vadd.f32 %v220, %v514
    %v523 = vxor.u32 %v519, 2147483648
    %v524 = vxor.u32 %v520, 2147483648
    %v525 = vxor.u32 %v521, 2147483648
    %v526 = vxor.u32 %v522, 2147483648
    %v527 = vmul.f32 %v523, 1.442695
    %v528 = vpow.pop %v527
    %v529 = vmul.f32 %v524, 1.442695
    %v530 = vpow.pop %v529
    %v531 = vmul.f32 %v525, 1.442695
    %v532 = vpow.pop %v531
    %v533 = vmul.f32 %v526, 1.442695
    %v534 = vpow.pop %v533
    %v535 = vadd.f32 %v528, 1.0
    %v536 = vadd.f32 %v530, 1.0
    %v537 = vadd.f32 %v532, 1.0
    %v538 = vadd.f32 %v534, 1.0
    %v539 = vrcp.pop %v535
    %v540 = vmul.f32 1.0, %v539
    %v541 = vrcp.pop %v536
    %v542 = vmul.f32 1.0, %v541
    %v543 = vrcp.pop %v537
    %v544 = vmul.f32 1.0, %v543
    %v545 = vrcp.pop %v538
    %v546 = vmul.f32 1.0, %v545
    %v547 = vtanh.pop %v519
    %v548 = vtanh.pop %v520
    %v549 = vtanh.pop %v521
    %v550 = vtanh.pop %v522
    %v555 = vrot.slane %v396, 7
    %v556 = vrot.slane %v397, 7
    %v557 = vrot.slane %v398, 7
    %v558 = vrot.slane %v399, 7
    %v563 = vmul.f32 %v540, %v555
    %v564 = vmul.f32 %v542, %v556
    %v565 = vmul.f32 %v544, %v557
    %v566 = vmul.f32 %v546, %v558
    %571 = vrot.lane.b32.xlu0 %v547, 64
    %v572 = vpop.permute.xlu0 %571
    %573 = vrot.lane.b32.xlu0 %v548, 64
    %v574 = vpop.permute.xlu0 %573
    %575 = vrot.lane.b32.xlu0 %v549, 64
    %v576 = vpop.permute.xlu0 %575
    %577 = vrot.lane.b32.xlu0 %v550, 64
    %v578 = vpop.permute.xlu0 %577
    %v583 = vmul.f32 %v540, %v572
    %v584 = vmul.f32 %v542, %v574
    %v585 = vmul.f32 %v544, %v576
    %v586 = vmul.f32 %v546, %v578
    %591 = vrot.lane.b32.xlu0 %v583, 32
    %v592 = vpop.permute.xlu0 %591
    %593 = vrot.lane.b32.xlu0 %v584, 32
    %v594 = vpop.permute.xlu0 %593
    %595 = vrot.lane.b32.xlu0 %v585, 32
    %v596 = vpop.permute.xlu0 %595
    %597 = vrot.lane.b32.xlu0 %v586, 32
    %v598 = vpop.permute.xlu0 %597
    %v603 = vadd.f32 %v563, %v592
    %v604 = vadd.f32 %v564, %v594
    %v605 = vadd.f32 %v565, %v596
    %v606 = vadd.f32 %v566, %v598
    %v607 = vtanh.pop %v603
    %v608 = vtanh.pop %v604
    %v609 = vtanh.pop %v605
    %v610 = vtanh.pop %v606
    %615 = vrot.lane.b32.xlu0 %v607, 64
    %v616 = vpop.permute.xlu0 %615
    %617 = vrot.lane.b32.xlu0 %v608, 64
    %v618 = vpop.permute.xlu0 %617
    %619 = vrot.lane.b32.xlu0 %v609, 64
    %v620 = vpop.permute.xlu0 %619
    %621 = vrot.lane.b32.xlu0 %v610, 64
    %v622 = vpop.permute.xlu0 %621
    %v627 = vmul.f32 %v540, %v616
    %v628 = vmul.f32 %v542, %v618
    %v629 = vmul.f32 %v544, %v620
    %v630 = vmul.f32 %v546, %v622
    %v635 = vrot.slane %v627, 1
    %v636 = vsel %vm429, %v628, %v635
    %v637 = vrot.slane %v629, 7
    %v638 = vsel %vm432, %v637, %v636
    %v639 = vrot.slane %v630, 6
    %v640 = vsel %vm435, %v639, %v638
    %641 = vrot.lane.b32.xlu0 %v640, 32
    %v642 = vpop.permute.xlu0 %641
    %v643 = vsel %vm242, %v642, 0
    %645 = vmatprep.subr.mxu0 0.0
    %646 = vmatpush1.msra.mxu0 %v223
    %647 = vmatprep.subr.mxu0 0.0
    %648 = vmatpush1.msra.mxu0 %v224
    %649 = vmatprep.subr.mxu0 0.0
    %650 = vmatpush1.msra.mxu0 %v225
    %651 = vmatprep.subr.mxu0 0.0
    %652 = vmatpush1.msra.mxu0 %v226
    %653 = vmatprep.subr.mxu0 0.0
    %654 = vmatpush1.msra.mxu0 0.0
    %655 = vmatprep.subr.mxu0 0.0
    %656 = vmatpush1.msra.mxu0 0.0
    %657 = vmatprep.subr.mxu0 0.0
    %658 = vmatpush1.msra.mxu0 0.0
    %659 = vmatprep.subr.mxu0 0.0
    %660 = vmatpush1.msra.mxu0 0.0
    %661 = vmatprep.subr.mxu0 0.0
    %662 = vmatpush1.msra.mxu0 0.0
    %663 = vmatprep.subr.mxu0 0.0
    %664 = vmatpush1.msra.mxu0 0.0
    %665 = vmatprep.subr.mxu0 0.0
    %666 = vmatpush1.msra.mxu0 0.0
    %667 = vmatprep.subr.mxu0 0.0
    %668 = vmatpush1.msra.mxu0 0.0
    %669 = vmatprep.subr.mxu0 0.0
    %670 = vmatpush1.msra.mxu0 0.0
    %671 = vmatprep.subr.mxu0 0.0
    %672 = vmatpush1.msra.mxu0 0.0
    %673 = vmatprep.subr.mxu0 0.0
    %674 = vmatpush1.msra.mxu0 0.0
    %675 = vmatprep.subr.mxu0 0.0
    %676 = vmatpush1.msra.mxu0 0.0
    %677 = vmatprep.subr.mxu0 0.0
    %678 = vmatpush1.msra.mxu0 0.0
    %679 = vmatprep.subr.mxu0 0.0
    %680 = vmatpush1.msra.mxu0 0.0
    %681 = vmatprep.subr.mxu0 0.0
    %682 = vmatpush1.msra.mxu0 0.0
    %683 = vmatprep.subr.mxu0 0.0
    %684 = vmatpush1.msra.mxu0 0.0
    %685 = vmatprep.subr.mxu0 0.0
    %686 = vmatpush1.msra.mxu0 0.0
    %687 = vmatprep.subr.mxu0 0.0
    %688 = vmatpush1.msra.mxu0 0.0
    %689 = vmatprep.subr.mxu0 0.0
    %690 = vmatpush1.msra.mxu0 0.0
    %691 = vmatprep.subr.mxu0 0.0
    %692 = vmatpush1.msra.mxu0 0.0
    %693 = vmatprep.subr.mxu0 0.0
    %694 = vmatpush1.msra.mxu0 0.0
    %695 = vmatprep.subr.mxu0 0.0
    %696 = vmatpush1.msra.mxu0 0.0
    %697 = vmatprep.subr.mxu0 0.0
    %698 = vmatpush1.msra.mxu0 0.0
    %699 = vmatprep.subr.mxu0 0.0
    %700 = vmatpush1.msra.mxu0 0.0
    %701 = vmatprep.subr.mxu0 0.0
    %702 = vmatpush1.msra.mxu0 0.0
    %703 = vmatprep.subr.mxu0 0.0
    %704 = vmatpush1.msra.mxu0 0.0
    %705 = vmatprep.subr.mxu0 0.0
    %706 = vmatpush1.msra.mxu0 0.0
    %707 = vmatprep.subr.mxu0 0.0
    %708 = vmatpush1.msra.mxu0 0.0
    %709 = vmatprep.mubr.f32.mxu0 0.0
    %710 = vmatmul.mubr.f32.gmra.mrb[0].mxu0 %v643
    %v711 = vpop.f32.mrb[0].mxu0
    %v712 = vadd.f32 0.0, %v711
    %v713 = vpop.f32.mrb[0].mxu0
    %714 = vdwg.mxu0
    %v716 = vrot.slane %v712, 6
    %v717 = vrot.slane %v712, 7
    %v718 = vrot.slane %v712, 1
    %v723 = vadd.f32 %v205, %v716
    %v724 = vadd.f32 %v210, %v717
    %v725 = vadd.f32 %v215, %v712
    %v726 = vadd.f32 %v220, %v718
    %v727 = vxor.u32 %v723, 2147483648
    %v728 = vxor.u32 %v724, 2147483648
    %v729 = vxor.u32 %v725, 2147483648
    %v730 = vxor.u32 %v726, 2147483648
    %v731 = vmul.f32 %v727, 1.442695
    %v732 = vpow.pop %v731
    %v733 = vmul.f32 %v728, 1.442695
    %v734 = vpow.pop %v733
    %v735 = vmul.f32 %v729, 1.442695
    %v736 = vpow.pop %v735
    %v737 = vmul.f32 %v730, 1.442695
    %v738 = vpow.pop %v737
    %v739 = vadd.f32 %v732, 1.0
    %v740 = vadd.f32 %v734, 1.0
    %v741 = vadd.f32 %v736, 1.0
    %v742 = vadd.f32 %v738, 1.0
    %v743 = vrcp.pop %v739
    %v744 = vmul.f32 1.0, %v743
    %v745 = vrcp.pop %v740
    %v746 = vmul.f32 1.0, %v745
    %v747 = vrcp.pop %v741
    %v748 = vmul.f32 1.0, %v747
    %v749 = vrcp.pop %v742
    %v750 = vmul.f32 1.0, %v749
    %v751 = vtanh.pop %v723
    %v752 = vtanh.pop %v724
    %v753 = vtanh.pop %v725
    %v754 = vtanh.pop %v726
    %v759 = vrot.slane %v603, 7
    %v760 = vrot.slane %v604, 7
    %v761 = vrot.slane %v605, 7
    %v762 = vrot.slane %v606, 7
    %v767 = vmul.f32 %v744, %v759
    %v768 = vmul.f32 %v746, %v760
    %v769 = vmul.f32 %v748, %v761
    %v770 = vmul.f32 %v750, %v762
    %775 = vrot.lane.b32.xlu0 %v751, 64
    %v776 = vpop.permute.xlu0 %775
    %777 = vrot.lane.b32.xlu0 %v752, 64
    %v778 = vpop.permute.xlu0 %777
    %779 = vrot.lane.b32.xlu0 %v753, 64
    %v780 = vpop.permute.xlu0 %779
    %781 = vrot.lane.b32.xlu0 %v754, 64
    %v782 = vpop.permute.xlu0 %781
    %v787 = vmul.f32 %v744, %v776
    %v788 = vmul.f32 %v746, %v778
    %v789 = vmul.f32 %v748, %v780
    %v790 = vmul.f32 %v750, %v782
    %795 = vrot.lane.b32.xlu0 %v787, 32
    %v796 = vpop.permute.xlu0 %795
    %797 = vrot.lane.b32.xlu0 %v788, 32
    %v798 = vpop.permute.xlu0 %797
    %799 = vrot.lane.b32.xlu0 %v789, 32
    %v800 = vpop.permute.xlu0 %799
    %801 = vrot.lane.b32.xlu0 %v790, 32
    %v802 = vpop.permute.xlu0 %801
    %v807 = vadd.f32 %v767, %v796
    %v808 = vadd.f32 %v768, %v798
    %v809 = vadd.f32 %v769, %v800
    %v810 = vadd.f32 %v770, %v802
    %v811 = vtanh.pop %v807
    %v812 = vtanh.pop %v808
    %v813 = vtanh.pop %v809
    %v814 = vtanh.pop %v810
    %819 = vrot.lane.b32.xlu0 %v811, 64
    %v820 = vpop.permute.xlu0 %819
    %821 = vrot.lane.b32.xlu0 %v812, 64
    %v822 = vpop.permute.xlu0 %821
    %823 = vrot.lane.b32.xlu0 %v813, 64
    %v824 = vpop.permute.xlu0 %823
    %825 = vrot.lane.b32.xlu0 %v814, 64
    %v826 = vpop.permute.xlu0 %825
    %v831 = vmul.f32 %v744, %v820
    %v832 = vmul.f32 %v746, %v822
    %v833 = vmul.f32 %v748, %v824
    %v834 = vmul.f32 %v750, %v826
    %v839 = vrot.slane %v831, 2
    %v840 = vrot.slane %v832, 1
    %v841 = vsel %vm429, %v840, %v839
    %v842 = vsel %vm432, %v833, %v841
    %v843 = vrot.slane %v834, 7
    %v844 = vsel %vm435, %v843, %v842
    %845 = vrot.lane.b32.xlu0 %v844, 32
    %v846 = vpop.permute.xlu0 %845
    %v847 = vsel %vm242, %v846, 0
    %849 = vmatprep.subr.mxu0 0.0
    %850 = vmatpush1.msra.mxu0 %v223
    %851 = vmatprep.subr.mxu0 0.0
    %852 = vmatpush1.msra.mxu0 %v224
    %853 = vmatprep.subr.mxu0 0.0
    %854 = vmatpush1.msra.mxu0 %v225
    %855 = vmatprep.subr.mxu0 0.0
    %856 = vmatpush1.msra.mxu0 %v226
    %857 = vmatprep.subr.mxu0 0.0
    %858 = vmatpush1.msra.mxu0 0.0
    %859 = vmatprep.subr.mxu0 0.0
    %860 = vmatpush1.msra.mxu0 0.0
    %861 = vmatprep.subr.mxu0 0.0
    %862 = vmatpush1.msra.mxu0 0.0
    %863 = vmatprep.subr.mxu0 0.0
    %864 = vmatpush1.msra.mxu0 0.0
    %865 = vmatprep.subr.mxu0 0.0
    %866 = vmatpush1.msra.mxu0 0.0
    %867 = vmatprep.subr.mxu0 0.0
    %868 = vmatpush1.msra.mxu0 0.0
    %869 = vmatprep.subr.mxu0 0.0
    %870 = vmatpush1.msra.mxu0 0.0
    %871 = vmatprep.subr.mxu0 0.0
    %872 = vmatpush1.msra.mxu0 0.0
    %873 = vmatprep.subr.mxu0 0.0
    %874 = vmatpush1.msra.mxu0 0.0
    %875 = vmatprep.subr.mxu0 0.0
    %876 = vmatpush1.msra.mxu0 0.0
    %877 = vmatprep.subr.mxu0 0.0
    %878 = vmatpush1.msra.mxu0 0.0
    %879 = vmatprep.subr.mxu0 0.0
    %880 = vmatpush1.msra.mxu0 0.0
    %881 = vmatprep.subr.mxu0 0.0
    %882 = vmatpush1.msra.mxu0 0.0
    %883 = vmatprep.subr.mxu0 0.0
    %884 = vmatpush1.msra.mxu0 0.0
    %885 = vmatprep.subr.mxu0 0.0
    %886 = vmatpush1.msra.mxu0 0.0
    %887 = vmatprep.subr.mxu0 0.0
    %888 = vmatpush1.msra.mxu0 0.0
    %889 = vmatprep.subr.mxu0 0.0
    %890 = vmatpush1.msra.mxu0 0.0
    %891 = vmatprep.subr.mxu0 0.0
    %892 = vmatpush1.msra.mxu0 0.0
    %893 = vmatprep.subr.mxu0 0.0
    %894 = vmatpush1.msra.mxu0 0.0
    %895 = vmatprep.subr.mxu0 0.0
    %896 = vmatpush1.msra.mxu0 0.0
    %897 = vmatprep.subr.mxu0 0.0
    %898 = vmatpush1.msra.mxu0 0.0
    %899 = vmatprep.subr.mxu0 0.0
    %900 = vmatpush1.msra.mxu0 0.0
    %901 = vmatprep.subr.mxu0 0.0
    %902 = vmatpush1.msra.mxu0 0.0
    %903 = vmatprep.subr.mxu0 0.0
    %904 = vmatpush1.msra.mxu0 0.0
    %905 = vmatprep.subr.mxu0 0.0
    %906 = vmatpush1.msra.mxu0 0.0
    %907 = vmatprep.subr.mxu0 0.0
    %908 = vmatpush1.msra.mxu0 0.0
    %909 = vmatprep.subr.mxu0 0.0
    %910 = vmatpush1.msra.mxu0 0.0
    %911 = vmatprep.subr.mxu0 0.0
    %912 = vmatpush1.msra.mxu0 0.0
    %913 = vmatprep.mubr.f32.mxu0 0.0
    %914 = vmatmul.mubr.f32.gmra.mrb[0].mxu0 %v847
    %v915 = vpop.f32.mrb[0].mxu0
    %v916 = vadd.f32 0.0, %v915
    %v917 = vpop.f32.mrb[0].mxu0
    %918 = vdwg.mxu0
    %v920 = vrot.slane %v916, 5
    %v921 = vrot.slane %v916, 6
    %v922 = vrot.slane %v916, 7
    %v927 = vadd.f32 %v205, %v920
    %v928 = vadd.f32 %v210, %v921
    %v929 = vadd.f32 %v215, %v922
    %v930 = vadd.f32 %v220, %v916
    %v931 = vxor.u32 %v927, 2147483648
    %v932 = vxor.u32 %v928, 2147483648
    %v933 = vxor.u32 %v929, 2147483648
    %v934 = vxor.u32 %v930, 2147483648
    %v935 = vmul.f32 %v931, 1.442695
    %v936 = vpow.pop %v935
    %v937 = vmul.f32 %v932, 1.442695
    %v938 = vpow.pop %v937
    %v939 = vmul.f32 %v933, 1.442695
    %v940 = vpow.pop %v939
    %v941 = vmul.f32 %v934, 1.442695
    %v942 = vpow.pop %v941
    %v943 = vadd.f32 %v936, 1.0
    %v944 = vadd.f32 %v938, 1.0
    %v945 = vadd.f32 %v940, 1.0
    %v946 = vadd.f32 %v942, 1.0
    %v947 = vrcp.pop %v943
    %v948 = vmul.f32 1.0, %v947
    %v949 = vrcp.pop %v944
    %v950 = vmul.f32 1.0, %v949
    %v951 = vrcp.pop %v945
    %v952 = vmul.f32 1.0, %v951
    %v953 = vrcp.pop %v946
    %v954 = vmul.f32 1.0, %v953
    %v955 = vtanh.pop %v927
    %v956 = vtanh.pop %v928
    %v957 = vtanh.pop %v929
    %v958 = vtanh.pop %v930
    %v963 = vrot.slane %v807, 7
    %v964 = vrot.slane %v808, 7
    %v965 = vrot.slane %v809, 7
    %v966 = vrot.slane %v810, 7
    %v971 = vmul.f32 %v948, %v963
    %v972 = vmul.f32 %v950, %v964
    %v973 = vmul.f32 %v952, %v965
    %v974 = vmul.f32 %v954, %v966
    %979 = vrot.lane.b32.xlu0 %v955, 64
    %v980 = vpop.permute.xlu0 %979
    %981 = vrot.lane.b32.xlu0 %v956, 64
    %v982 = vpop.permute.xlu0 %981
    %983 = vrot.lane.b32.xlu0 %v957, 64
    %v984 = vpop.permute.xlu0 %983
    %985 = vrot.lane.b32.xlu0 %v958, 64
    %v986 = vpop.permute.xlu0 %985
    %v991 = vmul.f32 %v948, %v980
    %v992 = vmul.f32 %v950, %v982
    %v993 = vmul.f32 %v952, %v984
    %v994 = vmul.f32 %v954, %v986
    %999 = vrot.lane.b32.xlu0 %v991, 32
    %v1000 = vpop.permute.xlu0 %999
    %1001 = vrot.lane.b32.xlu0 %v992, 32
    %v1002 = vpop.permute.xlu0 %1001
    %1003 = vrot.lane.b32.xlu0 %v993, 32
    %v1004 = vpop.permute.xlu0 %1003
    %1005 = vrot.lane.b32.xlu0 %v994, 32
    %v1006 = vpop.permute.xlu0 %1005
    %v1011 = vadd.f32 %v971, %v1000
    %v1012 = vadd.f32 %v972, %v1002
    %v1013 = vadd.f32 %v973, %v1004
    %v1014 = vadd.f32 %v974, %v1006
    %v1015 = vtanh.pop %v1011
    %v1016 = vtanh.pop %v1012
    %v1017 = vtanh.pop %v1013
    %v1018 = vtanh.pop %v1014
    %1023 = vrot.lane.b32.xlu0 %v1015, 64
    %v1024 = vpop.permute.xlu0 %1023
    %1025 = vrot.lane.b32.xlu0 %v1016, 64
    %v1026 = vpop.permute.xlu0 %1025
    %1027 = vrot.lane.b32.xlu0 %v1017, 64
    %v1028 = vpop.permute.xlu0 %1027
    %1029 = vrot.lane.b32.xlu0 %v1018, 64
    %v1030 = vpop.permute.xlu0 %1029
    %v1035 = vmul.f32 %v948, %v1024
    %v1036 = vmul.f32 %v950, %v1026
    %v1037 = vmul.f32 %v952, %v1028
    %v1038 = vmul.f32 %v954, %v1030
    %v1043 = vrot.slane %v1035, 3
    %v1044 = vrot.slane %v1036, 2
    %v1045 = vsel %vm429, %v1044, %v1043
    %v1046 = vrot.slane %v1037, 1
    %v1047 = vsel %vm432, %v1046, %v1045
    %v1048 = vsel %vm435, %v1038, %v1047
    %1049 = vrot.lane.b32.xlu0 %v1048, 32
    %v1050 = vpop.permute.xlu0 %1049
    %v1051 = vsel %vm242, %v1050, 0
    %1053 = vmatprep.subr.mxu0 0.0
    %1054 = vmatpush1.msra.mxu0 %v223
    %1055 = vmatprep.subr.mxu0 0.0
    %1056 = vmatpush1.msra.mxu0 %v224
    %1057 = vmatprep.subr.mxu0 0.0
    %1058 = vmatpush1.msra.mxu0 %v225
    %1059 = vmatprep.subr.mxu0 0.0
    %1060 = vmatpush1.msra.mxu0 %v226
    %1061 = vmatprep.subr.mxu0 0.0
    %1062 = vmatpush1.msra.mxu0 0.0
    %1063 = vmatprep.subr.mxu0 0.0
    %1064 = vmatpush1.msra.mxu0 0.0
    %1065 = vmatprep.subr.mxu0 0.0
    %1066 = vmatpush1.msra.mxu0 0.0
    %1067 = vmatprep.subr.mxu0 0.0
    %1068 = vmatpush1.msra.mxu0 0.0
    %1069 = vmatprep.subr.mxu0 0.0
    %1070 = vmatpush1.msra.mxu0 0.0
    %1071 = vmatprep.subr.mxu0 0.0
    %1072 = vmatpush1.msra.mxu0 0.0
    %1073 = vmatprep.subr.mxu0 0.0
    %1074 = vmatpush1.msra.mxu0 0.0
    %1075 = vmatprep.subr.mxu0 0.0
    %1076 = vmatpush1.msra.mxu0 0.0
    %1077 = vmatprep.subr.mxu0 0.0
    %1078 = vmatpush1.msra.mxu0 0.0
    %1079 = vmatprep.subr.mxu0 0.0
    %1080 = vmatpush1.msra.mxu0 0.0
    %1081 = vmatprep.subr.mxu0 0.0
    %1082 = vmatpush1.msra.mxu0 0.0
    %1083 = vmatprep.subr.mxu0 0.0
    %1084 = vmatpush1.msra.mxu0 0.0
    %1085 = vmatprep.subr.mxu0 0.0
    %1086 = vmatpush1.msra.mxu0 0.0
    %1087 = vmatprep.subr.mxu0 0.0
    %1088 = vmatpush1.msra.mxu0 0.0
    %1089 = vmatprep.subr.mxu0 0.0
    %1090 = vmatpush1.msra.mxu0 0.0
    %1091 = vmatprep.subr.mxu0 0.0
    %1092 = vmatpush1.msra.mxu0 0.0
    %1093 = vmatprep.subr.mxu0 0.0
    %1094 = vmatpush1.msra.mxu0 0.0
    %1095 = vmatprep.subr.mxu0 0.0
    %1096 = vmatpush1.msra.mxu0 0.0
    %1097 = vmatprep.subr.mxu0 0.0
    %1098 = vmatpush1.msra.mxu0 0.0
    %1099 = vmatprep.subr.mxu0 0.0
    %1100 = vmatpush1.msra.mxu0 0.0
    %1101 = vmatprep.subr.mxu0 0.0
    %1102 = vmatpush1.msra.mxu0 0.0
    %1103 = vmatprep.subr.mxu0 0.0
    %1104 = vmatpush1.msra.mxu0 0.0
    %1105 = vmatprep.subr.mxu0 0.0
    %1106 = vmatpush1.msra.mxu0 0.0
    %1107 = vmatprep.subr.mxu0 0.0
    %1108 = vmatpush1.msra.mxu0 0.0
    %1109 = vmatprep.subr.mxu0 0.0
    %1110 = vmatpush1.msra.mxu0 0.0
    %1111 = vmatprep.subr.mxu0 0.0
    %1112 = vmatpush1.msra.mxu0 0.0
    %1113 = vmatprep.subr.mxu0 0.0
    %1114 = vmatpush1.msra.mxu0 0.0
    %1115 = vmatprep.subr.mxu0 0.0
    %1116 = vmatpush1.msra.mxu0 0.0
    %1117 = vmatprep.mubr.f32.mxu0 0.0
    %1118 = vmatmul.mubr.f32.gmra.mrb[0].mxu0 %v1051
    %v1119 = vpop.f32.mrb[0].mxu0
    %v1120 = vadd.f32 0.0, %v1119
    %v1121 = vpop.f32.mrb[0].mxu0
    %1122 = vdwg.mxu0
    %v1124 = vrot.slane %v1120, 4
    %v1125 = vrot.slane %v1120, 5
    %v1126 = vrot.slane %v1120, 6
    %v1127 = vrot.slane %v1120, 7
    %v1132 = vadd.f32 %v205, %v1124
    %v1133 = vadd.f32 %v210, %v1125
    %v1134 = vadd.f32 %v215, %v1126
    %v1135 = vadd.f32 %v220, %v1127
    %v1136 = vxor.u32 %v1132, 2147483648
    %v1137 = vxor.u32 %v1133, 2147483648
    %v1138 = vxor.u32 %v1134, 2147483648
    %v1139 = vxor.u32 %v1135, 2147483648
    %v1140 = vmul.f32 %v1136, 1.442695
    %v1141 = vpow.pop %v1140
    %v1142 = vmul.f32 %v1137, 1.442695
    %v1143 = vpow.pop %v1142
    %v1144 = vmul.f32 %v1138, 1.442695
    %v1145 = vpow.pop %v1144
    %v1146 = vmul.f32 %v1139, 1.442695
    %v1147 = vpow.pop %v1146
    %v1148 = vadd.f32 %v1141, 1.0
    %v1149 = vadd.f32 %v1143, 1.0
    %v1150 = vadd.f32 %v1145, 1.0
    %v1151 = vadd.f32 %v1147, 1.0
    %v1152 = vrcp.pop %v1148
    %v1153 = vmul.f32 1.0, %v1152
    %v1154 = vrcp.pop %v1149
    %v1155 = vmul.f32 1.0, %v1154
    %v1156 = vrcp.pop %v1150
    %v1157 = vmul.f32 1.0, %v1156
    %v1158 = vrcp.pop %v1151
    %v1159 = vmul.f32 1.0, %v1158
    %v1160 = vtanh.pop %v1132
    %v1161 = vtanh.pop %v1133
    %v1162 = vtanh.pop %v1134
    %v1163 = vtanh.pop %v1135
    %v1168 = vrot.slane %v1011, 7
    %v1169 = vrot.slane %v1012, 7
    %v1170 = vrot.slane %v1013, 7
    %v1171 = vrot.slane %v1014, 7
    %v1176 = vmul.f32 %v1153, %v1168
    %v1177 = vmul.f32 %v1155, %v1169
    %v1178 = vmul.f32 %v1157, %v1170
    %v1179 = vmul.f32 %v1159, %v1171
    %1184 = vrot.lane.b32.xlu0 %v1160, 64
    %v1185 = vpop.permute.xlu0 %1184
    %1186 = vrot.lane.b32.xlu0 %v1161, 64
    %v1187 = vpop.permute.xlu0 %1186
    %1188 = vrot.lane.b32.xlu0 %v1162, 64
    %v1189 = vpop.permute.xlu0 %1188
    %1190 = vrot.lane.b32.xlu0 %v1163, 64
    %v1191 = vpop.permute.xlu0 %1190
    %v1196 = vmul.f32 %v1153, %v1185
    %v1197 = vmul.f32 %v1155, %v1187
    %v1198 = vmul.f32 %v1157, %v1189
    %v1199 = vmul.f32 %v1159, %v1191
    %1204 = vrot.lane.b32.xlu0 %v1196, 32
    %v1205 = vpop.permute.xlu0 %1204
    %1206 = vrot.lane.b32.xlu0 %v1197, 32
    %v1207 = vpop.permute.xlu0 %1206
    %1208 = vrot.lane.b32.xlu0 %v1198, 32
    %v1209 = vpop.permute.xlu0 %1208
    %1210 = vrot.lane.b32.xlu0 %v1199, 32
    %v1211 = vpop.permute.xlu0 %1210
    %v1216 = vadd.f32 %v1176, %v1205
    %v1217 = vadd.f32 %v1177, %v1207
    %v1218 = vadd.f32 %v1178, %v1209
    %v1219 = vadd.f32 %v1179, %v1211
    %v1220 = vtanh.pop %v1216
    %v1221 = vtanh.pop %v1217
    %v1222 = vtanh.pop %v1218
    %v1223 = vtanh.pop %v1219
    %1228 = vrot.lane.b32.xlu0 %v1220, 64
    %v1229 = vpop.permute.xlu0 %1228
    %1230 = vrot.lane.b32.xlu0 %v1221, 64
    %v1231 = vpop.permute.xlu0 %1230
    %1232 = vrot.lane.b32.xlu0 %v1222, 64
    %v1233 = vpop.permute.xlu0 %1232
    %1234 = vrot.lane.b32.xlu0 %v1223, 64
    %v1235 = vpop.permute.xlu0 %1234
    %v1240 = vmul.f32 %v1153, %v1229
    %v1241 = vmul.f32 %v1155, %v1231
    %v1242 = vmul.f32 %v1157, %v1233
    %v1243 = vmul.f32 %v1159, %v1235
    %v1248 = vrot.slane %v1240, 4
    %v1249 = vrot.slane %v1241, 3
    %v1250 = vsel %vm429, %v1249, %v1248
    %v1251 = vrot.slane %v1242, 2
    %v1252 = vsel %vm432, %v1251, %v1250
    %v1253 = vrot.slane %v1243, 1
    %v1254 = vsel %vm435, %v1253, %v1252
    %1255 = vrot.lane.b32.xlu0 %v1254, 32
    %v1256 = vpop.permute.xlu0 %1255
    %v1257 = vsel %vm242, %v1256, 0
    %1259 = vmatprep.subr.mxu0 0.0
    %1260 = vmatpush1.msra.mxu0 %v223
    %1261 = vmatprep.subr.mxu0 0.0
    %1262 = vmatpush1.msra.mxu0 %v224
    %1263 = vmatprep.subr.mxu0 0.0
    %1264 = vmatpush1.msra.mxu0 %v225
    %1265 = vmatprep.subr.mxu0 0.0
    %1266 = vmatpush1.msra.mxu0 %v226
    %1267 = vmatprep.subr.mxu0 0.0
    %1268 = vmatpush1.msra.mxu0 0.0
    %1269 = vmatprep.subr.mxu0 0.0
    %1270 = vmatpush1.msra.mxu0 0.0
    %1271 = vmatprep.subr.mxu0 0.0
    %1272 = vmatpush1.msra.mxu0 0.0
    %1273 = vmatprep.subr.mxu0 0.0
    %1274 = vmatpush1.msra.mxu0 0.0
    %1275 = vmatprep.subr.mxu0 0.0
    %1276 = vmatpush1.msra.mxu0 0.0
    %1277 = vmatprep.subr.mxu0 0.0
    %1278 = vmatpush1.msra.mxu0 0.0
    %1279 = vmatprep.subr.mxu0 0.0
    %1280 = vmatpush1.msra.mxu0 0.0
    %1281 = vmatprep.subr.mxu0 0.0
    %1282 = vmatpush1.msra.mxu0 0.0
    %1283 = vmatprep.subr.mxu0 0.0
    %1284 = vmatpush1.msra.mxu0 0.0
    %1285 = vmatprep.subr.mxu0 0.0
    %1286 = vmatpush1.msra.mxu0 0.0
    %1287 = vmatprep.subr.mxu0 0.0
    %1288 = vmatpush1.msra.mxu0 0.0
    %1289 = vmatprep.subr.mxu0 0.0
    %1290 = vmatpush1.msra.mxu0 0.0
    %1291 = vmatprep.subr.mxu0 0.0
    %1292 = vmatpush1.msra.mxu0 0.0
    %1293 = vmatprep.subr.mxu0 0.0
    %1294 = vmatpush1.msra.mxu0 0.0
    %1295 = vmatprep.subr.mxu0 0.0
    %1296 = vmatpush1.msra.mxu0 0.0
    %1297 = vmatprep.subr.mxu0 0.0
    %1298 = vmatpush1.msra.mxu0 0.0
    %1299 = vmatprep.subr.mxu0 0.0
    %1300 = vmatpush1.msra.mxu0 0.0
    %1301 = vmatprep.subr.mxu0 0.0
    %1302 = vmatpush1.msra.mxu0 0.0
    %1303 = vmatprep.subr.mxu0 0.0
    %1304 = vmatpush1.msra.mxu0 0.0
    %1305 = vmatprep.subr.mxu0 0.0
    %1306 = vmatpush1.msra.mxu0 0.0
    %1307 = vmatprep.subr.mxu0 0.0
    %1308 = vmatpush1.msra.mxu0 0.0
    %1309 = vmatprep.subr.mxu0 0.0
    %1310 = vmatpush1.msra.mxu0 0.0
    %1311 = vmatprep.subr.mxu0 0.0
    %1312 = vmatpush1.msra.mxu0 0.0
    %1313 = vmatprep.subr.mxu0 0.0
    %1314 = vmatpush1.msra.mxu0 0.0
    %1315 = vmatprep.subr.mxu0 0.0
    %1316 = vmatpush1.msra.mxu0 0.0
    %1317 = vmatprep.subr.mxu0 0.0
    %1318 = vmatpush1.msra.mxu0 0.0
    %1319 = vmatprep.subr.mxu0 0.0
    %1320 = vmatpush1.msra.mxu0 0.0
    %1321 = vmatprep.subr.mxu0 0.0
    %1322 = vmatpush1.msra.mxu0 0.0
    %1323 = vmatprep.mubr.f32.mxu0 0.0
    %1324 = vmatmul.mubr.f32.gmra.mrb[0].mxu0 %v1257
    %v1325 = vpop.f32.mrb[0].mxu0
    %v1326 = vadd.f32 0.0, %v1325
    %v1327 = vpop.f32.mrb[0].mxu0
    %1328 = vdwg.mxu0
    %v1330 = vrot.slane %v1326, 3
    %v1331 = vrot.slane %v1326, 4
    %v1332 = vrot.slane %v1326, 5
    %v1333 = vrot.slane %v1326, 6
    %v1338 = vadd.f32 %v205, %v1330
    %v1339 = vadd.f32 %v210, %v1331
    %v1340 = vadd.f32 %v215, %v1332
    %v1341 = vadd.f32 %v220, %v1333
    %v1342 = vxor.u32 %v1338, 2147483648
    %v1343 = vxor.u32 %v1339, 2147483648
    %v1344 = vxor.u32 %v1340, 2147483648
    %v1345 = vxor.u32 %v1341, 2147483648
    %v1346 = vmul.f32 %v1342, 1.442695
    %v1347 = vpow.pop %v1346
    %v1348 = vmul.f32 %v1343, 1.442695
    %v1349 = vpow.pop %v1348
    %v1350 = vmul.f32 %v1344, 1.442695
    %v1351 = vpow.pop %v1350
    %v1352 = vmul.f32 %v1345, 1.442695
    %v1353 = vpow.pop %v1352
    %v1354 = vadd.f32 %v1347, 1.0
    %v1355 = vadd.f32 %v1349, 1.0
    %v1356 = vadd.f32 %v1351, 1.0
    %v1357 = vadd.f32 %v1353, 1.0
    %v1358 = vrcp.pop %v1354
    %v1359 = vmul.f32 1.0, %v1358
    %v1360 = vrcp.pop %v1355
    %v1361 = vmul.f32 1.0, %v1360
    %v1362 = vrcp.pop %v1356
    %v1363 = vmul.f32 1.0, %v1362
    %v1364 = vrcp.pop %v1357
    %v1365 = vmul.f32 1.0, %v1364
    %v1366 = vtanh.pop %v1338
    %v1367 = vtanh.pop %v1339
    %v1368 = vtanh.pop %v1340
    %v1369 = vtanh.pop %v1341
    %v1374 = vrot.slane %v1216, 7
    %v1375 = vrot.slane %v1217, 7
    %v1376 = vrot.slane %v1218, 7
    %v1377 = vrot.slane %v1219, 7
    %v1382 = vmul.f32 %v1359, %v1374
    %v1383 = vmul.f32 %v1361, %v1375
    %v1384 = vmul.f32 %v1363, %v1376
    %v1385 = vmul.f32 %v1365, %v1377
    %1390 = vrot.lane.b32.xlu0 %v1366, 64
    %v1391 = vpop.permute.xlu0 %1390
    %1392 = vrot.lane.b32.xlu0 %v1367, 64
    %v1393 = vpop.permute.xlu0 %1392
    %1394 = vrot.lane.b32.xlu0 %v1368, 64
    %v1395 = vpop.permute.xlu0 %1394
    %1396 = vrot.lane.b32.xlu0 %v1369, 64
    %v1397 = vpop.permute.xlu0 %1396
    %v1402 = vmul.f32 %v1359, %v1391
    %v1403 = vmul.f32 %v1361, %v1393
    %v1404 = vmul.f32 %v1363, %v1395
    %v1405 = vmul.f32 %v1365, %v1397
    %1410 = vrot.lane.b32.xlu0 %v1402, 32
    %v1411 = vpop.permute.xlu0 %1410
    %1412 = vrot.lane.b32.xlu0 %v1403, 32
    %v1413 = vpop.permute.xlu0 %1412
    %1414 = vrot.lane.b32.xlu0 %v1404, 32
    %v1415 = vpop.permute.xlu0 %1414
    %1416 = vrot.lane.b32.xlu0 %v1405, 32
    %v1417 = vpop.permute.xlu0 %1416
    %v1422 = vadd.f32 %v1382, %v1411
    %v1423 = vadd.f32 %v1383, %v1413
    %v1424 = vadd.f32 %v1384, %v1415
    %v1425 = vadd.f32 %v1385, %v1417
    %v1426 = vtanh.pop %v1422
    %v1427 = vtanh.pop %v1423
    %v1428 = vtanh.pop %v1424
    %v1429 = vtanh.pop %v1425
    %1434 = vrot.lane.b32.xlu0 %v1426, 64
    %v1435 = vpop.permute.xlu0 %1434
    %1436 = vrot.lane.b32.xlu0 %v1427, 64
    %v1437 = vpop.permute.xlu0 %1436
    %1438 = vrot.lane.b32.xlu0 %v1428, 64
    %v1439 = vpop.permute.xlu0 %1438
    %1440 = vrot.lane.b32.xlu0 %v1429, 64
    %v1441 = vpop.permute.xlu0 %1440
    %v1446 = vmul.f32 %v1359, %v1435
    %v1447 = vmul.f32 %v1361, %v1437
    %v1448 = vmul.f32 %v1363, %v1439
    %v1449 = vmul.f32 %v1365, %v1441
    %v1454 = vrot.slane %v1446, 5
    %v1455 = vrot.slane %v1447, 4
    %v1456 = vsel %vm429, %v1455, %v1454
    %v1457 = vrot.slane %v1448, 3
    %v1458 = vsel %vm432, %v1457, %v1456
    %v1459 = vrot.slane %v1449, 2
    %v1460 = vsel %vm435, %v1459, %v1458
    %1461 = vrot.lane.b32.xlu0 %v1460, 32
    %v1462 = vpop.permute.xlu0 %1461
    %v1463 = vsel %vm242, %v1462, 0
    %1465 = vmatprep.subr.mxu0 0.0
    %1466 = vmatpush1.msra.mxu0 %v223
    %1467 = vmatprep.subr.mxu0 0.0
    %1468 = vmatpush1.msra.mxu0 %v224
    %1469 = vmatprep.subr.mxu0 0.0
    %1470 = vmatpush1.msra.mxu0 %v225
    %1471 = vmatprep.subr.mxu0 0.0
    %1472 = vmatpush1.msra.mxu0 %v226
    %1473 = vmatprep.subr.mxu0 0.0
    %1474 = vmatpush1.msra.mxu0 0.0
    %1475 = vmatprep.subr.mxu0 0.0
    %1476 = vmatpush1.msra.mxu0 0.0
    %1477 = vmatprep.subr.mxu0 0.0
    %1478 = vmatpush1.msra.mxu0 0.0
    %1479 = vmatprep.subr.mxu0 0.0
    %1480 = vmatpush1.msra.mxu0 0.0
    %1481 = vmatprep.subr.mxu0 0.0
    %1482 = vmatpush1.msra.mxu0 0.0
    %1483 = vmatprep.subr.mxu0 0.0
    %1484 = vmatpush1.msra.mxu0 0.0
    %1485 = vmatprep.subr.mxu0 0.0
    %1486 = vmatpush1.msra.mxu0 0.0
    %1487 = vmatprep.subr.mxu0 0.0
    %1488 = vmatpush1.msra.mxu0 0.0
    %1489 = vmatprep.subr.mxu0 0.0
    %1490 = vmatpush1.msra.mxu0 0.0
    %1491 = vmatprep.subr.mxu0 0.0
    %1492 = vmatpush1.msra.mxu0 0.0
    %1493 = vmatprep.subr.mxu0 0.0
    %1494 = vmatpush1.msra.mxu0 0.0
    %1495 = vmatprep.subr.mxu0 0.0
    %1496 = vmatpush1.msra.mxu0 0.0
    %1497 = vmatprep.subr.mxu0 0.0
    %1498 = vmatpush1.msra.mxu0 0.0
    %1499 = vmatprep.subr.mxu0 0.0
    %1500 = vmatpush1.msra.mxu0 0.0
    %1501 = vmatprep.subr.mxu0 0.0
    %1502 = vmatpush1.msra.mxu0 0.0
    %1503 = vmatprep.subr.mxu0 0.0
    %1504 = vmatpush1.msra.mxu0 0.0
    %1505 = vmatprep.subr.mxu0 0.0
    %1506 = vmatpush1.msra.mxu0 0.0
    %1507 = vmatprep.subr.mxu0 0.0
    %1508 = vmatpush1.msra.mxu0 0.0
    %1509 = vmatprep.subr.mxu0 0.0
    %1510 = vmatpush1.msra.mxu0 0.0
    %1511 = vmatprep.subr.mxu0 0.0
    %1512 = vmatpush1.msra.mxu0 0.0
    %1513 = vmatprep.subr.mxu0 0.0
    %1514 = vmatpush1.msra.mxu0 0.0
    %1515 = vmatprep.subr.mxu0 0.0
    %1516 = vmatpush1.msra.mxu0 0.0
    %1517 = vmatprep.subr.mxu0 0.0
    %1518 = vmatpush1.msra.mxu0 0.0
    %1519 = vmatprep.subr.mxu0 0.0
    %1520 = vmatpush1.msra.mxu0 0.0
    %1521 = vmatprep.subr.mxu0 0.0
    %1522 = vmatpush1.msra.mxu0 0.0
    %1523 = vmatprep.subr.mxu0 0.0
    %1524 = vmatpush1.msra.mxu0 0.0
    %1525 = vmatprep.subr.mxu0 0.0
    %1526 = vmatpush1.msra.mxu0 0.0
    %1527 = vmatprep.subr.mxu0 0.0
    %1528 = vmatpush1.msra.mxu0 0.0
    %1529 = vmatprep.mubr.f32.mxu0 0.0
    %1530 = vmatmul.mubr.f32.gmra.mrb[0].mxu0 %v1463
    %v1531 = vpop.f32.mrb[0].mxu0
    %v1532 = vadd.f32 0.0, %v1531
    %v1533 = vpop.f32.mrb[0].mxu0
    %1534 = vdwg.mxu0
    %v1536 = vrot.slane %v1532, 2
    %v1537 = vrot.slane %v1532, 3
    %v1538 = vrot.slane %v1532, 4
    %v1539 = vrot.slane %v1532, 5
    %v1544 = vadd.f32 %v205, %v1536
    %v1545 = vadd.f32 %v210, %v1537
    %v1546 = vadd.f32 %v215, %v1538
    %v1547 = vadd.f32 %v220, %v1539
    %v1548 = vxor.u32 %v1544, 2147483648
    %v1549 = vxor.u32 %v1545, 2147483648
    %v1550 = vxor.u32 %v1546, 2147483648
    %v1551 = vxor.u32 %v1547, 2147483648
    %v1552 = vmul.f32 %v1548, 1.442695
    %v1553 = vpow.pop %v1552
    %v1554 = vmul.f32 %v1549, 1.442695
    %v1555 = vpow.pop %v1554
    %v1556 = vmul.f32 %v1550, 1.442695
    %v1557 = vpow.pop %v1556
    %v1558 = vmul.f32 %v1551, 1.442695
    %v1559 = vpow.pop %v1558
    %v1560 = vadd.f32 %v1553, 1.0
    %v1561 = vadd.f32 %v1555, 1.0
    %v1562 = vadd.f32 %v1557, 1.0
    %v1563 = vadd.f32 %v1559, 1.0
    %v1564 = vrcp.pop %v1560
    %v1565 = vmul.f32 1.0, %v1564
    %v1566 = vrcp.pop %v1561
    %v1567 = vmul.f32 1.0, %v1566
    %v1568 = vrcp.pop %v1562
    %v1569 = vmul.f32 1.0, %v1568
    %v1570 = vrcp.pop %v1563
    %v1571 = vmul.f32 1.0, %v1570
    %v1572 = vtanh.pop %v1544
    %v1573 = vtanh.pop %v1545
    %v1574 = vtanh.pop %v1546
    %v1575 = vtanh.pop %v1547
    %v1580 = vrot.slane %v1422, 7
    %v1581 = vrot.slane %v1423, 7
    %v1582 = vrot.slane %v1424, 7
    %v1583 = vrot.slane %v1425, 7
    %v1588 = vmul.f32 %v1565, %v1580
    %v1589 = vmul.f32 %v1567, %v1581
    %v1590 = vmul.f32 %v1569, %v1582
    %v1591 = vmul.f32 %v1571, %v1583
    %1596 = vrot.lane.b32.xlu0 %v1572, 64
    %v1597 = vpop.permute.xlu0 %1596
    %1598 = vrot.lane.b32.xlu0 %v1573, 64
    %v1599 = vpop.permute.xlu0 %1598
    %1600 = vrot.lane.b32.xlu0 %v1574, 64
    %v1601 = vpop.permute.xlu0 %1600
    %1602 = vrot.lane.b32.xlu0 %v1575, 64
    %v1603 = vpop.permute.xlu0 %1602
    %v1608 = vmul.f32 %v1565, %v1597
    %v1609 = vmul.f32 %v1567, %v1599
    %v1610 = vmul.f32 %v1569, %v1601
    %v1611 = vmul.f32 %v1571, %v1603
    %1616 = vrot.lane.b32.xlu0 %v1608, 32
    %v1617 = vpop.permute.xlu0 %1616
    %1618 = vrot.lane.b32.xlu0 %v1609, 32
    %v1619 = vpop.permute.xlu0 %1618
    %1620 = vrot.lane.b32.xlu0 %v1610, 32
    %v1621 = vpop.permute.xlu0 %1620
    %1622 = vrot.lane.b32.xlu0 %v1611, 32
    %v1623 = vpop.permute.xlu0 %1622
    %v1628 = vadd.f32 %v1588, %v1617
    %v1629 = vadd.f32 %v1589, %v1619
    %v1630 = vadd.f32 %v1590, %v1621
    %v1631 = vadd.f32 %v1591, %v1623
    %v1632 = vtanh.pop %v1628
    %v1633 = vtanh.pop %v1629
    %v1634 = vtanh.pop %v1630
    %v1635 = vtanh.pop %v1631
    %1640 = vrot.lane.b32.xlu0 %v1632, 64
    %v1641 = vpop.permute.xlu0 %1640
    %1642 = vrot.lane.b32.xlu0 %v1633, 64
    %v1643 = vpop.permute.xlu0 %1642
    %1644 = vrot.lane.b32.xlu0 %v1634, 64
    %v1645 = vpop.permute.xlu0 %1644
    %1646 = vrot.lane.b32.xlu0 %v1635, 64
    %v1647 = vpop.permute.xlu0 %1646
    %v1652 = vmul.f32 %v1565, %v1641
    %v1653 = vmul.f32 %v1567, %v1643
    %v1654 = vmul.f32 %v1569, %v1645
    %v1655 = vmul.f32 %v1571, %v1647
    %v1660 = vrot.slane %v1652, 6
    %v1661 = vrot.slane %v1653, 5
    %v1662 = vsel %vm429, %v1661, %v1660
    %v1663 = vrot.slane %v1654, 4
    %v1664 = vsel %vm432, %v1663, %v1662
    %v1665 = vrot.slane %v1655, 3
    %v1666 = vsel %vm435, %v1665, %v1664
    %1667 = vrot.lane.b32.xlu0 %v1666, 32
    %v1668 = vpop.permute.xlu0 %1667
    %v1669 = vsel %vm242, %v1668, 0
    %1671 = vmatprep.subr.mxu0 0.0
    %1672 = vmatpush1.msra.mxu0 %v223
    %1673 = vmatprep.subr.mxu0 0.0
    %1674 = vmatpush1.msra.mxu0 %v224
    %1675 = vmatprep.subr.mxu0 0.0
    %1676 = vmatpush1.msra.mxu0 %v225
    %1677 = vmatprep.subr.mxu0 0.0
    %1678 = vmatpush1.msra.mxu0 %v226
    %1679 = vmatprep.subr.mxu0 0.0
    %1680 = vmatpush1.msra.mxu0 0.0
    %1681 = vmatprep.subr.mxu0 0.0
    %1682 = vmatpush1.msra.mxu0 0.0
    %1683 = vmatprep.subr.mxu0 0.0
    %1684 = vmatpush1.msra.mxu0 0.0
    %1685 = vmatprep.subr.mxu0 0.0
    %1686 = vmatpush1.msra.mxu0 0.0
    %1687 = vmatprep.subr.mxu0 0.0
    %1688 = vmatpush1.msra.mxu0 0.0
    %1689 = vmatprep.subr.mxu0 0.0
    %1690 = vmatpush1.msra.mxu0 0.0
    %1691 = vmatprep.subr.mxu0 0.0
    %1692 = vmatpush1.msra.mxu0 0.0
    %1693 = vmatprep.subr.mxu0 0.0
    %1694 = vmatpush1.msra.mxu0 0.0
    %1695 = vmatprep.subr.mxu0 0.0
    %1696 = vmatpush1.msra.mxu0 0.0
    %1697 = vmatprep.subr.mxu0 0.0
    %1698 = vmatpush1.msra.mxu0 0.0
    %1699 = vmatprep.subr.mxu0 0.0
    %1700 = vmatpush1.msra.mxu0 0.0
    %1701 = vmatprep.subr.mxu0 0.0
    %1702 = vmatpush1.msra.mxu0 0.0
    %1703 = vmatprep.subr.mxu0 0.0
    %1704 = vmatpush1.msra.mxu0 0.0
    %1705 = vmatprep.subr.mxu0 0.0
    %1706 = vmatpush1.msra.mxu0 0.0
    %1707 = vmatprep.subr.mxu0 0.0
    %1708 = vmatpush1.msra.mxu0 0.0
    %1709 = vmatprep.subr.mxu0 0.0
    %1710 = vmatpush1.msra.mxu0 0.0
    %1711 = vmatprep.subr.mxu0 0.0
    %1712 = vmatpush1.msra.mxu0 0.0
    %1713 = vmatprep.subr.mxu0 0.0
    %1714 = vmatpush1.msra.mxu0 0.0
    %1715 = vmatprep.subr.mxu0 0.0
    %1716 = vmatpush1.msra.mxu0 0.0
    %1717 = vmatprep.subr.mxu0 0.0
    %1718 = vmatpush1.msra.mxu0 0.0
    %1719 = vmatprep.subr.mxu0 0.0
    %1720 = vmatpush1.msra.mxu0 0.0
    %1721 = vmatprep.subr.mxu0 0.0
    %1722 = vmatpush1.msra.mxu0 0.0
    %1723 = vmatprep.subr.mxu0 0.0
    %1724 = vmatpush1.msra.mxu0 0.0
    %1725 = vmatprep.subr.mxu0 0.0
    %1726 = vmatpush1.msra.mxu0 0.0
    %1727 = vmatprep.subr.mxu0 0.0
    %1728 = vmatpush1.msra.mxu0 0.0
    %1729 = vmatprep.subr.mxu0 0.0
    %1730 = vmatpush1.msra.mxu0 0.0
    %1731 = vmatprep.subr.mxu0 0.0
    %1732 = vmatpush1.msra.mxu0 0.0
    %1733 = vmatprep.subr.mxu0 0.0
    %1734 = vmatpush1.msra.mxu0 0.0
    %1735 = vmatprep.mubr.f32.mxu0 0.0
    %1736 = vmatmul.mubr.f32.gmra.mrb[0].mxu0 %v1669
    %v1737 = vpop.f32.mrb[0].mxu0
    %v1738 = vadd.f32 0.0, %v1737
    %v1739 = vpop.f32.mrb[0].mxu0
    %1740 = vdwg.mxu0
    %v1742 = vrot.slane %v1738, 1
    %v1743 = vrot.slane %v1738, 2
    %v1744 = vrot.slane %v1738, 3
    %v1745 = vrot.slane %v1738, 4
    %v1750 = vadd.f32 %v205, %v1742
    %v1751 = vadd.f32 %v210, %v1743
    %v1752 = vadd.f32 %v215, %v1744
    %v1753 = vadd.f32 %v220, %v1745
    %v1754 = vxor.u32 %v1750, 2147483648
    %v1755 = vxor.u32 %v1751, 2147483648
    %v1756 = vxor.u32 %v1752, 2147483648
    %v1757 = vxor.u32 %v1753, 2147483648
    %v1758 = vmul.f32 %v1754, 1.442695
    %v1759 = vpow.pop %v1758
    %v1760 = vmul.f32 %v1755, 1.442695
    %v1761 = vpow.pop %v1760
    %v1762 = vmul.f32 %v1756, 1.442695
    %v1763 = vpow.pop %v1762
    %v1764 = vmul.f32 %v1757, 1.442695
    %v1765 = vpow.pop %v1764
    %v1766 = vadd.f32 %v1759, 1.0
    %v1767 = vadd.f32 %v1761, 1.0
    %v1768 = vadd.f32 %v1763, 1.0
    %v1769 = vadd.f32 %v1765, 1.0
    %v1770 = vrcp.pop %v1766
    %v1771 = vmul.f32 1.0, %v1770
    %v1772 = vrcp.pop %v1767
    %v1773 = vmul.f32 1.0, %v1772
    %v1774 = vrcp.pop %v1768
    %v1775 = vmul.f32 1.0, %v1774
    %v1776 = vrcp.pop %v1769
    %v1777 = vmul.f32 1.0, %v1776
    %v1778 = vtanh.pop %v1750
    %v1779 = vtanh.pop %v1751
    %v1780 = vtanh.pop %v1752
    %v1781 = vtanh.pop %v1753
    %v1786 = vrot.slane %v1628, 7
    %v1787 = vrot.slane %v1629, 7
    %v1788 = vrot.slane %v1630, 7
    %v1789 = vrot.slane %v1631, 7
    %v1794 = vmul.f32 %v1771, %v1786
    %v1795 = vmul.f32 %v1773, %v1787
    %v1796 = vmul.f32 %v1775, %v1788
    %v1797 = vmul.f32 %v1777, %v1789
    %1802 = vrot.lane.b32.xlu0 %v1778, 64
    %v1803 = vpop.permute.xlu0 %1802
    %1804 = vrot.lane.b32.xlu0 %v1779, 64
    %v1805 = vpop.permute.xlu0 %1804
    %1806 = vrot.lane.b32.xlu0 %v1780, 64
    %v1807 = vpop.permute.xlu0 %1806
    %1808 = vrot.lane.b32.xlu0 %v1781, 64
    %v1809 = vpop.permute.xlu0 %1808
    %v1814 = vmul.f32 %v1771, %v1803
    %v1815 = vmul.f32 %v1773, %v1805
    %v1816 = vmul.f32 %v1775, %v1807
    %v1817 = vmul.f32 %v1777, %v1809
    %1822 = vrot.lane.b32.xlu0 %v1814, 32
    %v1823 = vpop.permute.xlu0 %1822
    %1824 = vrot.lane.b32.xlu0 %v1815, 32
    %v1825 = vpop.permute.xlu0 %1824
    %1826 = vrot.lane.b32.xlu0 %v1816, 32
    %v1827 = vpop.permute.xlu0 %1826
    %1828 = vrot.lane.b32.xlu0 %v1817, 32
    %v1829 = vpop.permute.xlu0 %1828
    %v1834 = vadd.f32 %v1794, %v1823
    %v1835 = vadd.f32 %v1795, %v1825
    %v1836 = vadd.f32 %v1796, %v1827
    %v1837 = vadd.f32 %v1797, %v1829
    %v1838 = vtanh.pop %v1834
    %v1839 = vtanh.pop %v1835
    %v1840 = vtanh.pop %v1836
    %v1841 = vtanh.pop %v1837
    %1846 = vrot.lane.b32.xlu0 %v1838, 64
    %v1847 = vpop.permute.xlu0 %1846
    %1848 = vrot.lane.b32.xlu0 %v1839, 64
    %v1849 = vpop.permute.xlu0 %1848
    %1850 = vrot.lane.b32.xlu0 %v1840, 64
    %v1851 = vpop.permute.xlu0 %1850
    %1852 = vrot.lane.b32.xlu0 %v1841, 64
    %v1853 = vpop.permute.xlu0 %1852
    %v1858 = vmul.f32 %v1771, %v1847
    %v1859 = vmul.f32 %v1773, %v1849
    %v1860 = vmul.f32 %v1775, %v1851
    %v1861 = vmul.f32 %v1777, %v1853
    %1862 = vmatprep.subr.mxu0 0.0
    %1863 = vmatpush1.msra.mxu0 %v227
    %1864 = vmatprep.subr.mxu0 0.0
    %1865 = vmatpush1.msra.mxu0 %v228
    %1866 = vmatprep.subr.mxu0 0.0
    %1867 = vmatpush1.msra.mxu0 %v229
    %1868 = vmatprep.subr.mxu0 0.0
    %1869 = vmatpush1.msra.mxu0 %v230
    %1870 = vmatprep.subr.mxu0 0.0
    %1871 = vmatpush1.msra.mxu0 0.0
    %1872 = vmatprep.subr.mxu0 0.0
    %1873 = vmatpush1.msra.mxu0 0.0
    %1874 = vmatprep.subr.mxu0 0.0
    %1875 = vmatpush1.msra.mxu0 0.0
    %1876 = vmatprep.subr.mxu0 0.0
    %1877 = vmatpush1.msra.mxu0 0.0
    %1878 = vmatprep.subr.mxu0 0.0
    %1879 = vmatpush1.msra.mxu0 0.0
    %1880 = vmatprep.subr.mxu0 0.0
    %1881 = vmatpush1.msra.mxu0 0.0
    %1882 = vmatprep.subr.mxu0 0.0
    %1883 = vmatpush1.msra.mxu0 0.0
    %1884 = vmatprep.subr.mxu0 0.0
    %1885 = vmatpush1.msra.mxu0 0.0
    %1886 = vmatprep.subr.mxu0 0.0
    %1887 = vmatpush1.msra.mxu0 0.0
    %1888 = vmatprep.subr.mxu0 0.0
    %1889 = vmatpush1.msra.mxu0 0.0
    %1890 = vmatprep.subr.mxu0 0.0
    %1891 = vmatpush1.msra.mxu0 0.0
    %1892 = vmatprep.subr.mxu0 0.0
    %1893 = vmatpush1.msra.mxu0 0.0
    %1894 = vmatprep.subr.mxu0 0.0
    %1895 = vmatpush1.msra.mxu0 0.0
    %1896 = vmatprep.subr.mxu0 0.0
    %1897 = vmatpush1.msra.mxu0 0.0
    %1898 = vmatprep.subr.mxu0 0.0
    %1899 = vmatpush1.msra.mxu0 0.0
    %1900 = vmatprep.subr.mxu0 0.0
    %1901 = vmatpush1.msra.mxu0 0.0
    %1902 = vmatprep.subr.mxu0 0.0
    %1903 = vmatpush1.msra.mxu0 0.0
    %1904 = vmatprep.subr.mxu0 0.0
    %1905 = vmatpush1.msra.mxu0 0.0
    %1906 = vmatprep.subr.mxu0 0.0
    %1907 = vmatpush1.msra.mxu0 0.0
    %1908 = vmatprep.subr.mxu0 0.0
    %1909 = vmatpush1.msra.mxu0 0.0
    %1910 = vmatprep.subr.mxu0 0.0
    %1911 = vmatpush1.msra.mxu0 0.0
    %1912 = vmatprep.subr.mxu0 0.0
    %1913 = vmatpush1.msra.mxu0 0.0
    %1914 = vmatprep.subr.mxu0 0.0
    %1915 = vmatpush1.msra.mxu0 0.0
    %1916 = vmatprep.subr.mxu0 0.0
    %1917 = vmatpush1.msra.mxu0 0.0
    %1918 = vmatprep.subr.mxu0 0.0
    %1919 = vmatpush1.msra.mxu0 0.0
    %1920 = vmatprep.subr.mxu0 0.0
    %1921 = vmatpush1.msra.mxu0 0.0
    %1922 = vmatprep.subr.mxu0 0.0
    %1923 = vmatpush1.msra.mxu0 0.0
    %1924 = vmatprep.subr.mxu0 0.0
    %1925 = vmatpush1.msra.mxu0 0.0
    %1926 = vmatprep.mubr.f32.mxu0 0.0
    %1927 = vmatmul.mubr.f32.gmra.mrb[0].mxu0 %v439
    %v1928 = vpop.f32.mrb[0].mxu0
    %v1929 = vadd.f32 %v240, %v1928
    %v1930 = vpop.f32.mrb[0].mxu0
    %1931 = vdwg.mxu0
    %1932 = vmatprep.subr.mxu0 0.0
    %1933 = vmatpush1.msra.mxu0 %v231
    %1934 = vmatprep.subr.mxu0 0.0
    %1935 = vmatpush1.msra.mxu0 %v232
    %1936 = vmatprep.subr.mxu0 0.0
    %1937 = vmatpush1.msra.mxu0 %v233
    %1938 = vmatprep.subr.mxu0 0.0
    %1939 = vmatpush1.msra.mxu0 %v234
    %1940 = vmatprep.subr.mxu0 0.0
    %1941 = vmatpush1.msra.mxu0 0.0
    %1942 = vmatprep.subr.mxu0 0.0
    %1943 = vmatpush1.msra.mxu0 0.0
    %1944 = vmatprep.subr.mxu0 0.0
    %1945 = vmatpush1.msra.mxu0 0.0
    %1946 = vmatprep.subr.mxu0 0.0
    %1947 = vmatpush1.msra.mxu0 0.0
    %1948 = vmatprep.subr.mxu0 0.0
    %1949 = vmatpush1.msra.mxu0 0.0
    %1950 = vmatprep.subr.mxu0 0.0
    %1951 = vmatpush1.msra.mxu0 0.0
    %1952 = vmatprep.subr.mxu0 0.0
    %1953 = vmatpush1.msra.mxu0 0.0
    %1954 = vmatprep.subr.mxu0 0.0
    %1955 = vmatpush1.msra.mxu0 0.0
    %1956 = vmatprep.subr.mxu0 0.0
    %1957 = vmatpush1.msra.mxu0 0.0
    %1958 = vmatprep.subr.mxu0 0.0
    %1959 = vmatpush1.msra.mxu0 0.0
    %1960 = vmatprep.subr.mxu0 0.0
    %1961 = vmatpush1.msra.mxu0 0.0
    %1962 = vmatprep.subr.mxu0 0.0
    %1963 = vmatpush1.msra.mxu0 0.0
    %1964 = vmatprep.subr.mxu0 0.0
    %1965 = vmatpush1.msra.mxu0 0.0
    %1966 = vmatprep.subr.mxu0 0.0
    %1967 = vmatpush1.msra.mxu0 0.0
    %1968 = vmatprep.subr.mxu0 0.0
    %1969 = vmatpush1.msra.mxu0 0.0
    %1970 = vmatprep.subr.mxu0 0.0
    %1971 = vmatpush1.msra.mxu0 0.0
    %1972 = vmatprep.subr.mxu0 0.0
    %1973 = vmatpush1.msra.mxu0 0.0
    %1974 = vmatprep.subr.mxu0 0.0
    %1975 = vmatpush1.msra.mxu0 0.0
    %1976 = vmatprep.subr.mxu0 0.0
    %1977 = vmatpush1.msra.mxu0 0.0
    %1978 = vmatprep.subr.mxu0 0.0
    %1979 = vmatpush1.msra.mxu0 0.0
    %1980 = vmatprep.subr.mxu0 0.0
    %1981 = vmatpush1.msra.mxu0 0.0
    %1982 = vmatprep.subr.mxu0 0.0
    %1983 = vmatpush1.msra.mxu0 0.0
    %1984 = vmatprep.subr.mxu0 0.0
    %1985 = vmatpush1.msra.mxu0 0.0
    %1986 = vmatprep.subr.mxu0 0.0
    %1987 = vmatpush1.msra.mxu0 0.0
    %1988 = vmatprep.subr.mxu0 0.0
    %1989 = vmatpush1.msra.mxu0 0.0
    %1990 = vmatprep.subr.mxu0 0.0
    %1991 = vmatpush1.msra.mxu0 0.0
    %1992 = vmatprep.subr.mxu0 0.0
    %1993 = vmatpush1.msra.mxu0 0.0
    %1994 = vmatprep.subr.mxu0 0.0
    %1995 = vmatpush1.msra.mxu0 0.0
    %1996 = vmatprep.mubr.f32.mxu0 0.0
    %1997 = vmatmul.mubr.f32.gmra.mrb[0].mxu0 %v244
    %v1998 = vpop.f32.mrb[0].mxu0
    %v1999 = vadd.f32 0.0, %v1998
    %v2000 = vpop.f32.mrb[0].mxu0
    %2001 = vdwg.mxu0
    %v2002 = vadd.f32 %v1929, %v1999
    %v2003 = vxor.u32 %v2002, 2147483648
    %v2004 = vmul.f32 %v2003, 1.442695
    %v2005 = vpow.pop %v2004
    %v2006 = vadd.f32 %v2005, 1.0
    %v2007 = vrcp.pop %v2006
    %v2008 = vmul.f32 1.0, %v2007
    %v2009 = vtanh.pop %v2002
    %v2010 = vmul.f32 %v2008, 0.0
    %2012 = vrot.lane.b32.xlu0 %v2009, 64
    %v2013 = vpop.permute.xlu0 %2012
    %v2015 = vmul.f32 %v2008, %v2013
    %2017 = vrot.lane.b32.xlu0 %v2015, 32
    %v2018 = vpop.permute.xlu0 %2017
    %v2020 = vadd.f32 %v2010, %v2018
    %v2021 = vtanh.pop %v2020
    %2023 = vrot.lane.b32.xlu0 %v2021, 64
    %v2024 = vpop.permute.xlu0 %2023
    %v2026 = vmul.f32 %v2008, %v2024
    %2027 = vmatprep.subr.mxu0 0.0
    %2028 = vmatpush1.msra.mxu0 %v227
    %2029 = vmatprep.subr.mxu0 0.0
    %2030 = vmatpush1.msra.mxu0 %v228
    %2031 = vmatprep.subr.mxu0 0.0
    %2032 = vmatpush1.msra.mxu0 %v229
    %2033 = vmatprep.subr.mxu0 0.0
    %2034 = vmatpush1.msra.mxu0 %v230
    %2035 = vmatprep.subr.mxu0 0.0
    %2036 = vmatpush1.msra.mxu0 0.0
    %2037 = vmatprep.subr.mxu0 0.0
    %2038 = vmatpush1.msra.mxu0 0.0
    %2039 = vmatprep.subr.mxu0 0.0
    %2040 = vmatpush1.msra.mxu0 0.0
    %2041 = vmatprep.subr.mxu0 0.0
    %2042 = vmatpush1.msra.mxu0 0.0
    %2043 = vmatprep.subr.mxu0 0.0
    %2044 = vmatpush1.msra.mxu0 0.0
    %2045 = vmatprep.subr.mxu0 0.0
    %2046 = vmatpush1.msra.mxu0 0.0
    %2047 = vmatprep.subr.mxu0 0.0
    %2048 = vmatpush1.msra.mxu0 0.0
    %2049 = vmatprep.subr.mxu0 0.0
    %2050 = vmatpush1.msra.mxu0 0.0
    %2051 = vmatprep.subr.mxu0 0.0
    %2052 = vmatpush1.msra.mxu0 0.0
    %2053 = vmatprep.subr.mxu0 0.0
    %2054 = vmatpush1.msra.mxu0 0.0
    %2055 = vmatprep.subr.mxu0 0.0
    %2056 = vmatpush1.msra.mxu0 0.0
    %2057 = vmatprep.subr.mxu0 0.0
    %2058 = vmatpush1.msra.mxu0 0.0
    %2059 = vmatprep.subr.mxu0 0.0
    %2060 = vmatpush1.msra.mxu0 0.0
    %2061 = vmatprep.subr.mxu0 0.0
    %2062 = vmatpush1.msra.mxu0 0.0
    %2063 = vmatprep.subr.mxu0 0.0
    %2064 = vmatpush1.msra.mxu0 0.0
    %2065 = vmatprep.subr.mxu0 0.0
    %2066 = vmatpush1.msra.mxu0 0.0
    %2067 = vmatprep.subr.mxu0 0.0
    %2068 = vmatpush1.msra.mxu0 0.0
    %2069 = vmatprep.subr.mxu0 0.0
    %2070 = vmatpush1.msra.mxu0 0.0
    %2071 = vmatprep.subr.mxu0 0.0
    %2072 = vmatpush1.msra.mxu0 0.0
    %2073 = vmatprep.subr.mxu0 0.0
    %2074 = vmatpush1.msra.mxu0 0.0
    %2075 = vmatprep.subr.mxu0 0.0
    %2076 = vmatpush1.msra.mxu0 0.0
    %2077 = vmatprep.subr.mxu0 0.0
    %2078 = vmatpush1.msra.mxu0 0.0
    %2079 = vmatprep.subr.mxu0 0.0
    %2080 = vmatpush1.msra.mxu0 0.0
    %2081 = vmatprep.subr.mxu0 0.0
    %2082 = vmatpush1.msra.mxu0 0.0
    %2083 = vmatprep.subr.mxu0 0.0
    %2084 = vmatpush1.msra.mxu0 0.0
    %2085 = vmatprep.subr.mxu0 0.0
    %2086 = vmatpush1.msra.mxu0 0.0
    %2087 = vmatprep.subr.mxu0 0.0
    %2088 = vmatpush1.msra.mxu0 0.0
    %2089 = vmatprep.subr.mxu0 0.0
    %2090 = vmatpush1.msra.mxu0 0.0
    %2091 = vmatprep.mubr.f32.mxu0 0.0
    %2092 = vmatmul.mubr.f32.gmra.mrb[0].mxu0 %v643
    %v2093 = vpop.f32.mrb[0].mxu0
    %v2094 = vadd.f32 %v240, %v2093
    %v2095 = vpop.f32.mrb[0].mxu0
    %2096 = vdwg.mxu0
    %2098 = vrot.lane.b32.xlu0 %v2026, 32
    %v2099 = vpop.permute.xlu0 %2098
    %v2100 = vsel %vm242, %v2099, 0
    %2102 = vmatprep.subr.mxu0 0.0
    %2103 = vmatpush1.msra.mxu0 %v231
    %2104 = vmatprep.subr.mxu0 0.0
    %2105 = vmatpush1.msra.mxu0 %v232
    %2106 = vmatprep.subr.mxu0 0.0
    %2107 = vmatpush1.msra.mxu0 %v233
    %2108 = vmatprep.subr.mxu0 0.0
    %2109 = vmatpush1.msra.mxu0 %v234
    %2110 = vmatprep.subr.mxu0 0.0
    %2111 = vmatpush1.msra.mxu0 0.0
    %2112 = vmatprep.subr.mxu0 0.0
    %2113 = vmatpush1.msra.mxu0 0.0
    %2114 = vmatprep.subr.mxu0 0.0
    %2115 = vmatpush1.msra.mxu0 0.0
    %2116 = vmatprep.subr.mxu0 0.0
    %2117 = vmatpush1.msra.mxu0 0.0
    %2118 = vmatprep.subr.mxu0 0.0
    %2119 = vmatpush1.msra.mxu0 0.0
    %2120 = vmatprep.subr.mxu0 0.0
    %2121 = vmatpush1.msra.mxu0 0.0
    %2122 = vmatprep.subr.mxu0 0.0
    %2123 = vmatpush1.msra.mxu0 0.0
    %2124 = vmatprep.subr.mxu0 0.0
    %2125 = vmatpush1.msra.mxu0 0.0
    %2126 = vmatprep.subr.mxu0 0.0
    %2127 = vmatpush1.msra.mxu0 0.0
    %2128 = vmatprep.subr.mxu0 0.0
    %2129 = vmatpush1.msra.mxu0 0.0
    %2130 = vmatprep.subr.mxu0 0.0
    %2131 = vmatpush1.msra.mxu0 0.0
    %2132 = vmatprep.subr.mxu0 0.0
    %2133 = vmatpush1.msra.mxu0 0.0
    %2134 = vmatprep.subr.mxu0 0.0
    %2135 = vmatpush1.msra.mxu0 0.0
    %2136 = vmatprep.subr.mxu0 0.0
    %2137 = vmatpush1.msra.mxu0 0.0
    %2138 = vmatprep.subr.mxu0 0.0
    %2139 = vmatpush1.msra.mxu0 0.0
    %2140 = vmatprep.subr.mxu0 0.0
    %2141 = vmatpush1.msra.mxu0 0.0
    %2142 = vmatprep.subr.mxu0 0.0
    %2143 = vmatpush1.msra.mxu0 0.0
    %2144 = vmatprep.subr.mxu0 0.0
    %2145 = vmatpush1.msra.mxu0 0.0
    %2146 = vmatprep.subr.mxu0 0.0
    %2147 = vmatpush1.msra.mxu0 0.0
    %2148 = vmatprep.subr.mxu0 0.0
    %2149 = vmatpush1.msra.mxu0 0.0
    %2150 = vmatprep.subr.mxu0 0.0
    %2151 = vmatpush1.msra.mxu0 0.0
    %2152 = vmatprep.subr.mxu0 0.0
    %2153 = vmatpush1.msra.mxu0 0.0
    %2154 = vmatprep.subr.mxu0 0.0
    %2155 = vmatpush1.msra.mxu0 0.0
    %2156 = vmatprep.subr.mxu0 0.0
    %2157 = vmatpush1.msra.mxu0 0.0
    %2158 = vmatprep.subr.mxu0 0.0
    %2159 = vmatpush1.msra.mxu0 0.0
    %2160 = vmatprep.subr.mxu0 0.0
    %2161 = vmatpush1.msra.mxu0 0.0
    %2162 = vmatprep.subr.mxu0 0.0
    %2163 = vmatpush1.msra.mxu0 0.0
    %2164 = vmatprep.subr.mxu0 0.0
    %2165 = vmatpush1.msra.mxu0 0.0
    %2166 = vmatprep.mubr.f32.mxu0 0.0
    %2167 = vmatmul.mubr.f32.gmra.mrb[0].mxu0 %v2100
    %v2168 = vpop.f32.mrb[0].mxu0
    %v2169 = vadd.f32 0.0, %v2168
    %v2170 = vpop.f32.mrb[0].mxu0
    %2171 = vdwg.mxu0
    %v2172 = vadd.f32 %v2094, %v2169
    %v2173 = vxor.u32 %v2172, 2147483648
    %v2174 = vmul.f32 %v2173, 1.442695
    %v2175 = vpow.pop %v2174
    %v2176 = vadd.f32 %v2175, 1.0
    %v2177 = vrcp.pop %v2176
    %v2178 = vmul.f32 1.0, %v2177
    %v2179 = vtanh.pop %v2172
    %v2180 = vmul.f32 %v2178, %v2020
    %2182 = vrot.lane.b32.xlu0 %v2179, 64
    %v2183 = vpop.permute.xlu0 %2182
    %v2185 = vmul.f32 %v2178, %v2183
    %2187 = vrot.lane.b32.xlu0 %v2185, 32
    %v2188 = vpop.permute.xlu0 %2187
    %v2190 = vadd.f32 %v2180, %v2188
    %v2191 = vtanh.pop %v2190
    %2193 = vrot.lane.b32.xlu0 %v2191, 64
    %v2194 = vpop.permute.xlu0 %2193
    %v2196 = vmul.f32 %v2178, %v2194
    %2197 = vmatprep.subr.mxu0 0.0
    %2198 = vmatpush1.msra.mxu0 %v227
    %2199 = vmatprep.subr.mxu0 0.0
    %2200 = vmatpush1.msra.mxu0 %v228
    %2201 = vmatprep.subr.mxu0 0.0
    %2202 = vmatpush1.msra.mxu0 %v229
    %2203 = vmatprep.subr.mxu0 0.0
    %2204 = vmatpush1.msra.mxu0 %v230
    %2205 = vmatprep.subr.mxu0 0.0
    %2206 = vmatpush1.msra.mxu0 0.0
    %2207 = vmatprep.subr.mxu0 0.0
    %2208 = vmatpush1.msra.mxu0 0.0
    %2209 = vmatprep.subr.mxu0 0.0
    %2210 = vmatpush1.msra.mxu0 0.0
    %2211 = vmatprep.subr.mxu0 0.0
    %2212 = vmatpush1.msra.mxu0 0.0
    %2213 = vmatprep.subr.mxu0 0.0
    %2214 = vmatpush1.msra.mxu0 0.0
    %2215 = vmatprep.subr.mxu0 0.0
    %2216 = vmatpush1.msra.mxu0 0.0
    %2217 = vmatprep.subr.mxu0 0.0
    %2218 = vmatpush1.msra.mxu0 0.0
    %2219 = vmatprep.subr.mxu0 0.0
    %2220 = vmatpush1.msra.mxu0 0.0
    %2221 = vmatprep.subr.mxu0 0.0
    %2222 = vmatpush1.msra.mxu0 0.0
    %2223 = vmatprep.subr.mxu0 0.0
    %2224 = vmatpush1.msra.mxu0 0.0
    %2225 = vmatprep.subr.mxu0 0.0
    %2226 = vmatpush1.msra.mxu0 0.0
    %2227 = vmatprep.subr.mxu0 0.0
    %2228 = vmatpush1.msra.mxu0 0.0
    %2229 = vmatprep.subr.mxu0 0.0
    %2230 = vmatpush1.msra.mxu0 0.0
    %2231 = vmatprep.subr.mxu0 0.0
    %2232 = vmatpush1.msra.mxu0 0.0
    %2233 = vmatprep.subr.mxu0 0.0
    %2234 = vmatpush1.msra.mxu0 0.0
    %2235 = vmatprep.subr.mxu0 0.0
    %2236 = vmatpush1.msra.mxu0 0.0
    %2237 = vmatprep.subr.mxu0 0.0
    %2238 = vmatpush1.msra.mxu0 0.0
    %2239 = vmatprep.subr.mxu0 0.0
    %2240 = vmatpush1.msra.mxu0 0.0
    %2241 = vmatprep.subr.mxu0 0.0
    %2242 = vmatpush1.msra.mxu0 0.0
    %2243 = vmatprep.subr.mxu0 0.0
    %2244 = vmatpush1.msra.mxu0 0.0
    %2245 = vmatprep.subr.mxu0 0.0
    %2246 = vmatpush1.msra.mxu0 0.0
    %2247 = vmatprep.subr.mxu0 0.0
    %2248 = vmatpush1.msra.mxu0 0.0
    %2249 = vmatprep.subr.mxu0 0.0
    %2250 = vmatpush1.msra.mxu0 0.0
    %2251 = vmatprep.subr.mxu0 0.0
    %2252 = vmatpush1.msra.mxu0 0.0
    %2253 = vmatprep.subr.mxu0 0.0
    %2254 = vmatpush1.msra.mxu0 0.0
    %2255 = vmatprep.subr.mxu0 0.0
    %2256 = vmatpush1.msra.mxu0 0.0
    %2257 = vmatprep.subr.mxu0 0.0
    %2258 = vmatpush1.msra.mxu0 0.0
    %2259 = vmatprep.subr.mxu0 0.0
    %2260 = vmatpush1.msra.mxu0 0.0
    %2261 = vmatprep.mubr.f32.mxu0 0.0
    %2262 = vmatmul.mubr.f32.gmra.mrb[0].mxu0 %v847
    %v2263 = vpop.f32.mrb[0].mxu0
    %v2264 = vadd.f32 %v240, %v2263
    %v2265 = vpop.f32.mrb[0].mxu0
    %2266 = vdwg.mxu0
    %2268 = vrot.lane.b32.xlu0 %v2196, 32
    %v2269 = vpop.permute.xlu0 %2268
    %v2270 = vsel %vm242, %v2269, 0
    %2272 = vmatprep.subr.mxu0 0.0
    %2273 = vmatpush1.msra.mxu0 %v231
    %2274 = vmatprep.subr.mxu0 0.0
    %2275 = vmatpush1.msra.mxu0 %v232
    %2276 = vmatprep.subr.mxu0 0.0
    %2277 = vmatpush1.msra.mxu0 %v233
    %2278 = vmatprep.subr.mxu0 0.0
    %2279 = vmatpush1.msra.mxu0 %v234
    %2280 = vmatprep.subr.mxu0 0.0
    %2281 = vmatpush1.msra.mxu0 0.0
    %2282 = vmatprep.subr.mxu0 0.0
    %2283 = vmatpush1.msra.mxu0 0.0
    %2284 = vmatprep.subr.mxu0 0.0
    %2285 = vmatpush1.msra.mxu0 0.0
    %2286 = vmatprep.subr.mxu0 0.0
    %2287 = vmatpush1.msra.mxu0 0.0
    %2288 = vmatprep.subr.mxu0 0.0
    %2289 = vmatpush1.msra.mxu0 0.0
    %2290 = vmatprep.subr.mxu0 0.0
    %2291 = vmatpush1.msra.mxu0 0.0
    %2292 = vmatprep.subr.mxu0 0.0
    %2293 = vmatpush1.msra.mxu0 0.0
    %2294 = vmatprep.subr.mxu0 0.0
    %2295 = vmatpush1.msra.mxu0 0.0
    %2296 = vmatprep.subr.mxu0 0.0
    %2297 = vmatpush1.msra.mxu0 0.0
    %2298 = vmatprep.subr.mxu0 0.0
    %2299 = vmatpush1.msra.mxu0 0.0
    %2300 = vmatprep.subr.mxu0 0.0
    %2301 = vmatpush1.msra.mxu0 0.0
    %2302 = vmatprep.subr.mxu0 0.0
    %2303 = vmatpush1.msra.mxu0 0.0
    %2304 = vmatprep.subr.mxu0 0.0
    %2305 = vmatpush1.msra.mxu0 0.0
    %2306 = vmatprep.subr.mxu0 0.0
    %2307 = vmatpush1.msra.mxu0 0.0
    %2308 = vmatprep.subr.mxu0 0.0
    %2309 = vmatpush1.msra.mxu0 0.0
    %2310 = vmatprep.subr.mxu0 0.0
    %2311 = vmatpush1.msra.mxu0 0.0
    %2312 = vmatprep.subr.mxu0 0.0
    %2313 = vmatpush1.msra.mxu0 0.0
    %2314 = vmatprep.subr.mxu0 0.0
    %2315 = vmatpush1.msra.mxu0 0.0
    %2316 = vmatprep.subr.mxu0 0.0
    %2317 = vmatpush1.msra.mxu0 0.0
    %2318 = vmatprep.subr.mxu0 0.0
    %2319 = vmatpush1.msra.mxu0 0.0
    %2320 = vmatprep.subr.mxu0 0.0
    %2321 = vmatpush1.msra.mxu0 0.0
    %2322 = vmatprep.subr.mxu0 0.0
    %2323 = vmatpush1.msra.mxu0 0.0
    %2324 = vmatprep.subr.mxu0 0.0
    %2325 = vmatpush1.msra.mxu0 0.0
    %2326 = vmatprep.subr.mxu0 0.0
    %2327 = vmatpush1.msra.mxu0 0.0
    %2328 = vmatprep.subr.mxu0 0.0
    %2329 = vmatpush1.msra.mxu0 0.0
    %2330 = vmatprep.subr.mxu0 0.0
    %2331 = vmatpush1.msra.mxu0 0.0
    %2332 = vmatprep.subr.mxu0 0.0
    %2333 = vmatpush1.msra.mxu0 0.0
    %2334 = vmatprep.subr.mxu0 0.0
    %2335 = vmatpush1.msra.mxu0 0.0
    %2336 = vmatprep.mubr.f32.mxu0 0.0
    %2337 = vmatmul.mubr.f32.gmra.mrb[0].mxu0 %v2270
    %v2338 = vpop.f32.mrb[0].mxu0
    %v2339 = vadd.f32 0.0, %v2338
    %v2340 = vpop.f32.mrb[0].mxu0
    %2341 = vdwg.mxu0
    %v2342 = vadd.f32 %v2264, %v2339
    %v2343 = vxor.u32 %v2342, 2147483648
    %v2344 = vmul.f32 %v2343, 1.442695
    %v2345 = vpow.pop %v2344
    %v2346 = vadd.f32 %v2345, 1.0
    %v2347 = vrcp.pop %v2346
    %v2348 = vmul.f32 1.0, %v2347
    %v2349 = vtanh.pop %v2342
    %v2350 = vmul.f32 %v2348, %v2190
    %2352 = vrot.lane.b32.xlu0 %v2349, 64
    %v2353 = vpop.permute.xlu0 %2352
    %v2355 = vmul.f32 %v2348, %v2353
    %2357 = vrot.lane.b32.xlu0 %v2355, 32
    %v2358 = vpop.permute.xlu0 %2357
    %v2360 = vadd.f32 %v2350, %v2358
    %v2361 = vtanh.pop %v2360
    %2363 = vrot.lane.b32.xlu0 %v2361, 64
    %v2364 = vpop.permute.xlu0 %2363
    %v2366 = vmul.f32 %v2348, %v2364
    %2367 = vmatprep.subr.mxu0 0.0
    %2368 = vmatpush1.msra.mxu0 %v227
    %2369 = vmatprep.subr.mxu0 0.0
    %2370 = vmatpush1.msra.mxu0 %v228
    %2371 = vmatprep.subr.mxu0 0.0
    %2372 = vmatpush1.msra.mxu0 %v229
    %2373 = vmatprep.subr.mxu0 0.0
    %2374 = vmatpush1.msra.mxu0 %v230
    %2375 = vmatprep.subr.mxu0 0.0
    %2376 = vmatpush1.msra.mxu0 0.0
    %2377 = vmatprep.subr.mxu0 0.0
    %2378 = vmatpush1.msra.mxu0 0.0
    %2379 = vmatprep.subr.mxu0 0.0
    %2380 = vmatpush1.msra.mxu0 0.0
    %2381 = vmatprep.subr.mxu0 0.0
    %2382 = vmatpush1.msra.mxu0 0.0
    %2383 = vmatprep.subr.mxu0 0.0
    %2384 = vmatpush1.msra.mxu0 0.0
    %2385 = vmatprep.subr.mxu0 0.0
    %2386 = vmatpush1.msra.mxu0 0.0
    %2387 = vmatprep.subr.mxu0 0.0
    %2388 = vmatpush1.msra.mxu0 0.0
    %2389 = vmatprep.subr.mxu0 0.0
    %2390 = vmatpush1.msra.mxu0 0.0
    %2391 = vmatprep.subr.mxu0 0.0
    %2392 = vmatpush1.msra.mxu0 0.0
    %2393 = vmatprep.subr.mxu0 0.0
    %2394 = vmatpush1.msra.mxu0 0.0
    %2395 = vmatprep.subr.mxu0 0.0
    %2396 = vmatpush1.msra.mxu0 0.0
    %2397 = vmatprep.subr.mxu0 0.0
    %2398 = vmatpush1.msra.mxu0 0.0
    %2399 = vmatprep.subr.mxu0 0.0
    %2400 = vmatpush1.msra.mxu0 0.0
    %2401 = vmatprep.subr.mxu0 0.0
    %2402 = vmatpush1.msra.mxu0 0.0
    %2403 = vmatprep.subr.mxu0 0.0
    %2404 = vmatpush1.msra.mxu0 0.0
    %2405 = vmatprep.subr.mxu0 0.0
    %2406 = vmatpush1.msra.mxu0 0.0
    %2407 = vmatprep.subr.mxu0 0.0
    %2408 = vmatpush1.msra.mxu0 0.0
    %2409 = vmatprep.subr.mxu0 0.0
    %2410 = vmatpush1.msra.mxu0 0.0
    %2411 = vmatprep.subr.mxu0 0.0
    %2412 = vmatpush1.msra.mxu0 0.0
    %2413 = vmatprep.subr.mxu0 0.0
    %2414 = vmatpush1.msra.mxu0 0.0
    %2415 = vmatprep.subr.mxu0 0.0
    %2416 = vmatpush1.msra.mxu0 0.0
    %2417 = vmatprep.subr.mxu0 0.0
    %2418 = vmatpush1.msra.mxu0 0.0
    %2419 = vmatprep.subr.mxu0 0.0
    %2420 = vmatpush1.msra.mxu0 0.0
    %2421 = vmatprep.subr.mxu0 0.0
    %2422 = vmatpush1.msra.mxu0 0.0
    %2423 = vmatprep.subr.mxu0 0.0
    %2424 = vmatpush1.msra.mxu0 0.0
    %2425 = vmatprep.subr.mxu0 0.0
    %2426 = vmatpush1.msra.mxu0 0.0
    %2427 = vmatprep.subr.mxu0 0.0
    %2428 = vmatpush1.msra.mxu0 0.0
    %2429 = vmatprep.subr.mxu0 0.0
    %2430 = vmatpush1.msra.mxu0 0.0
    %2431 = vmatprep.mubr.f32.mxu0 0.0
    %2432 = vmatmul.mubr.f32.gmra.mrb[0].mxu0 %v1051
    %v2433 = vpop.f32.mrb[0].mxu0
    %v2434 = vadd.f32 %v240, %v2433
    %v2435 = vpop.f32.mrb[0].mxu0
    %2436 = vdwg.mxu0
    %2438 = vrot.lane.b32.xlu0 %v2366, 32
    %v2439 = vpop.permute.xlu0 %2438
    %v2440 = vsel %vm242, %v2439, 0
    %2442 = vmatprep.subr.mxu0 0.0
    %2443 = vmatpush1.msra.mxu0 %v231
    %2444 = vmatprep.subr.mxu0 0.0
    %2445 = vmatpush1.msra.mxu0 %v232
    %2446 = vmatprep.subr.mxu0 0.0
    %2447 = vmatpush1.msra.mxu0 %v233
    %2448 = vmatprep.subr.mxu0 0.0
    %2449 = vmatpush1.msra.mxu0 %v234
    %2450 = vmatprep.subr.mxu0 0.0
    %2451 = vmatpush1.msra.mxu0 0.0
    %2452 = vmatprep.subr.mxu0 0.0
    %2453 = vmatpush1.msra.mxu0 0.0
    %2454 = vmatprep.subr.mxu0 0.0
    %2455 = vmatpush1.msra.mxu0 0.0
    %2456 = vmatprep.subr.mxu0 0.0
    %2457 = vmatpush1.msra.mxu0 0.0
    %2458 = vmatprep.subr.mxu0 0.0
    %2459 = vmatpush1.msra.mxu0 0.0
    %2460 = vmatprep.subr.mxu0 0.0
    %2461 = vmatpush1.msra.mxu0 0.0
    %2462 = vmatprep.subr.mxu0 0.0
    %2463 = vmatpush1.msra.mxu0 0.0
    %2464 = vmatprep.subr.mxu0 0.0
    %2465 = vmatpush1.msra.mxu0 0.0
    %2466 = vmatprep.subr.mxu0 0.0
    %2467 = vmatpush1.msra.mxu0 0.0
    %2468 = vmatprep.subr.mxu0 0.0
    %2469 = vmatpush1.msra.mxu0 0.0
    %2470 = vmatprep.subr.mxu0 0.0
    %2471 = vmatpush1.msra.mxu0 0.0
    %2472 = vmatprep.subr.mxu0 0.0
    %2473 = vmatpush1.msra.mxu0 0.0
    %2474 = vmatprep.subr.mxu0 0.0
    %2475 = vmatpush1.msra.mxu0 0.0
    %2476 = vmatprep.subr.mxu0 0.0
    %2477 = vmatpush1.msra.mxu0 0.0
    %2478 = vmatprep.subr.mxu0 0.0
    %2479 = vmatpush1.msra.mxu0 0.0
    %2480 = vmatprep.subr.mxu0 0.0
    %2481 = vmatpush1.msra.mxu0 0.0
    %2482 = vmatprep.subr.mxu0 0.0
    %2483 = vmatpush1.msra.mxu0 0.0
    %2484 = vmatprep.subr.mxu0 0.0
    %2485 = vmatpush1.msra.mxu0 0.0
    %2486 = vmatprep.subr.mxu0 0.0
    %2487 = vmatpush1.msra.mxu0 0.0
    %2488 = vmatprep.subr.mxu0 0.0
    %2489 = vmatpush1.msra.mxu0 0.0
    %2490 = vmatprep.subr.mxu0 0.0
    %2491 = vmatpush1.msra.mxu0 0.0
    %2492 = vmatprep.subr.mxu0 0.0
    %2493 = vmatpush1.msra.mxu0 0.0
    %2494 = vmatprep.subr.mxu0 0.0
    %2495 = vmatpush1.msra.mxu0 0.0
    %2496 = vmatprep.subr.mxu0 0.0
    %2497 = vmatpush1.msra.mxu0 0.0
    %2498 = vmatprep.subr.mxu0 0.0
    %2499 = vmatpush1.msra.mxu0 0.0
    %2500 = vmatprep.subr.mxu0 0.0
    %2501 = vmatpush1.msra.mxu0 0.0
    %2502 = vmatprep.subr.mxu0 0.0
    %2503 = vmatpush1.msra.mxu0 0.0
    %2504 = vmatprep.subr.mxu0 0.0
    %2505 = vmatpush1.msra.mxu0 0.0
    %2506 = vmatprep.mubr.f32.mxu0 0.0
    %2507 = vmatmul.mubr.f32.gmra.mrb[0].mxu0 %v2440
    %v2508 = vpop.f32.mrb[0].mxu0
    %v2509 = vadd.f32 0.0, %v2508
    %v2510 = vpop.f32.mrb[0].mxu0
    %2511 = vdwg.mxu0
    %v2512 = vadd.f32 %v2434, %v2509
    %v2513 = vxor.u32 %v2512, 2147483648
    %v2514 = vmul.f32 %v2513, 1.442695
    %v2515 = vpow.pop %v2514
    %v2516 = vadd.f32 %v2515, 1.0
    %v2517 = vrcp.pop %v2516
    %v2518 = vmul.f32 1.0, %v2517
    %v2519 = vtanh.pop %v2512
    %v2520 = vmul.f32 %v2518, %v2360
    %2522 = vrot.lane.b32.xlu0 %v2519, 64
    %v2523 = vpop.permute.xlu0 %2522
    %v2525 = vmul.f32 %v2518, %v2523
    %2527 = vrot.lane.b32.xlu0 %v2525, 32
    %v2528 = vpop.permute.xlu0 %2527
    %v2530 = vadd.f32 %v2520, %v2528
    %v2531 = vtanh.pop %v2530
    %2533 = vrot.lane.b32.xlu0 %v2531, 64
    %v2534 = vpop.permute.xlu0 %2533
    %v2536 = vmul.f32 %v2518, %v2534
    %2537 = vmatprep.subr.mxu0 0.0
    %2538 = vmatpush1.msra.mxu0 %v227
    %2539 = vmatprep.subr.mxu0 0.0
    %2540 = vmatpush1.msra.mxu0 %v228
    %2541 = vmatprep.subr.mxu0 0.0
    %2542 = vmatpush1.msra.mxu0 %v229
    %2543 = vmatprep.subr.mxu0 0.0
    %2544 = vmatpush1.msra.mxu0 %v230
    %2545 = vmatprep.subr.mxu0 0.0
    %2546 = vmatpush1.msra.mxu0 0.0
    %2547 = vmatprep.subr.mxu0 0.0
    %2548 = vmatpush1.msra.mxu0 0.0
    %2549 = vmatprep.subr.mxu0 0.0
    %2550 = vmatpush1.msra.mxu0 0.0
    %2551 = vmatprep.subr.mxu0 0.0
    %2552 = vmatpush1.msra.mxu0 0.0
    %2553 = vmatprep.subr.mxu0 0.0
    %2554 = vmatpush1.msra.mxu0 0.0
    %2555 = vmatprep.subr.mxu0 0.0
    %2556 = vmatpush1.msra.mxu0 0.0
    %2557 = vmatprep.subr.mxu0 0.0
    %2558 = vmatpush1.msra.mxu0 0.0
    %2559 = vmatprep.subr.mxu0 0.0
    %2560 = vmatpush1.msra.mxu0 0.0
    %2561 = vmatprep.subr.mxu0 0.0
    %2562 = vmatpush1.msra.mxu0 0.0
    %2563 = vmatprep.subr.mxu0 0.0
    %2564 = vmatpush1.msra.mxu0 0.0
    %2565 = vmatprep.subr.mxu0 0.0
    %2566 = vmatpush1.msra.mxu0 0.0
    %2567 = vmatprep.subr.mxu0 0.0
    %2568 = vmatpush1.msra.mxu0 0.0
    %2569 = vmatprep.subr.mxu0 0.0
    %2570 = vmatpush1.msra.mxu0 0.0
    %2571 = vmatprep.subr.mxu0 0.0
    %2572 = vmatpush1.msra.mxu0 0.0
    %2573 = vmatprep.subr.mxu0 0.0
    %2574 = vmatpush1.msra.mxu0 0.0
    %2575 = vmatprep.subr.mxu0 0.0
    %2576 = vmatpush1.msra.mxu0 0.0
    %2577 = vmatprep.subr.mxu0 0.0
    %2578 = vmatpush1.msra.mxu0 0.0
    %2579 = vmatprep.subr.mxu0 0.0
    %2580 = vmatpush1.msra.mxu0 0.0
    %2581 = vmatprep.subr.mxu0 0.0
    %2582 = vmatpush1.msra.mxu0 0.0
    %2583 = vmatprep.subr.mxu0 0.0
    %2584 = vmatpush1.msra.mxu0 0.0
    %2585 = vmatprep.subr.mxu0 0.0
    %2586 = vmatpush1.msra.mxu0 0.0
    %2587 = vmatprep.subr.mxu0 0.0
    %2588 = vmatpush1.msra.mxu0 0.0
    %2589 = vmatprep.subr.mxu0 0.0
    %2590 = vmatpush1.msra.mxu0 0.0
    %2591 = vmatprep.subr.mxu0 0.0
    %2592 = vmatpush1.msra.mxu0 0.0
    %2593 = vmatprep.subr.mxu0 0.0
    %2594 = vmatpush1.msra.mxu0 0.0
    %2595 = vmatprep.subr.mxu0 0.0
    %2596 = vmatpush1.msra.mxu0 0.0
    %2597 = vmatprep.subr.mxu0 0.0
    %2598 = vmatpush1.msra.mxu0 0.0
    %2599 = vmatprep.subr.mxu0 0.0
    %2600 = vmatpush1.msra.mxu0 0.0
    %2601 = vmatprep.mubr.f32.mxu0 0.0
    %2602 = vmatmul.mubr.f32.gmra.mrb[0].mxu0 %v1257
    %v2603 = vpop.f32.mrb[0].mxu0
    %v2604 = vadd.f32 %v240, %v2603
    %v2605 = vpop.f32.mrb[0].mxu0
    %2606 = vdwg.mxu0
    %2608 = vrot.lane.b32.xlu0 %v2536, 32
    %v2609 = vpop.permute.xlu0 %2608
    %v2610 = vsel %vm242, %v2609, 0
    %2612 = vmatprep.subr.mxu0 0.0
    %2613 = vmatpush1.msra.mxu0 %v231
    %2614 = vmatprep.subr.mxu0 0.0
    %2615 = vmatpush1.msra.mxu0 %v232
    %2616 = vmatprep.subr.mxu0 0.0
    %2617 = vmatpush1.msra.mxu0 %v233
    %2618 = vmatprep.subr.mxu0 0.0
    %2619 = vmatpush1.msra.mxu0 %v234
    %2620 = vmatprep.subr.mxu0 0.0
    %2621 = vmatpush1.msra.mxu0 0.0
    %2622 = vmatprep.subr.mxu0 0.0
    %2623 = vmatpush1.msra.mxu0 0.0
    %2624 = vmatprep.subr.mxu0 0.0
    %2625 = vmatpush1.msra.mxu0 0.0
    %2626 = vmatprep.subr.mxu0 0.0
    %2627 = vmatpush1.msra.mxu0 0.0
    %2628 = vmatprep.subr.mxu0 0.0
    %2629 = vmatpush1.msra.mxu0 0.0
    %2630 = vmatprep.subr.mxu0 0.0
    %2631 = vmatpush1.msra.mxu0 0.0
    %2632 = vmatprep.subr.mxu0 0.0
    %2633 = vmatpush1.msra.mxu0 0.0
    %2634 = vmatprep.subr.mxu0 0.0
    %2635 = vmatpush1.msra.mxu0 0.0
    %2636 = vmatprep.subr.mxu0 0.0
    %2637 = vmatpush1.msra.mxu0 0.0
    %2638 = vmatprep.subr.mxu0 0.0
    %2639 = vmatpush1.msra.mxu0 0.0
    %2640 = vmatprep.subr.mxu0 0.0
    %2641 = vmatpush1.msra.mxu0 0.0
    %2642 = vmatprep.subr.mxu0 0.0
    %2643 = vmatpush1.msra.mxu0 0.0
    %2644 = vmatprep.subr.mxu0 0.0
    %2645 = vmatpush1.msra.mxu0 0.0
    %2646 = vmatprep.subr.mxu0 0.0
    %2647 = vmatpush1.msra.mxu0 0.0
    %2648 = vmatprep.subr.mxu0 0.0
    %2649 = vmatpush1.msra.mxu0 0.0
    %2650 = vmatprep.subr.mxu0 0.0
    %2651 = vmatpush1.msra.mxu0 0.0
    %2652 = vmatprep.subr.mxu0 0.0
    %2653 = vmatpush1.msra.mxu0 0.0
    %2654 = vmatprep.subr.mxu0 0.0
    %2655 = vmatpush1.msra.mxu0 0.0
    %2656 = vmatprep.subr.mxu0 0.0
    %2657 = vmatpush1.msra.mxu0 0.0
    %2658 = vmatprep.subr.mxu0 0.0
    %2659 = vmatpush1.msra.mxu0 0.0
    %2660 = vmatprep.subr.mxu0 0.0
    %2661 = vmatpush1.msra.mxu0 0.0
    %2662 = vmatprep.subr.mxu0 0.0
    %2663 = vmatpush1.msra.mxu0 0.0
    %2664 = vmatprep.subr.mxu0 0.0
    %2665 = vmatpush1.msra.mxu0 0.0
    %2666 = vmatprep.subr.mxu0 0.0
    %2667 = vmatpush1.msra.mxu0 0.0
    %2668 = vmatprep.subr.mxu0 0.0
    %2669 = vmatpush1.msra.mxu0 0.0
    %2670 = vmatprep.subr.mxu0 0.0
    %2671 = vmatpush1.msra.mxu0 0.0
    %2672 = vmatprep.subr.mxu0 0.0
    %2673 = vmatpush1.msra.mxu0 0.0
    %2674 = vmatprep.subr.mxu0 0.0
    %2675 = vmatpush1.msra.mxu0 0.0
    %2676 = vmatprep.mubr.f32.mxu0 0.0
    %2677 = vmatmul.mubr.f32.gmra.mrb[0].mxu0 %v2610
    %v2678 = vpop.f32.mrb[0].mxu0
    %v2679 = vadd.f32 0.0, %v2678
    %v2680 = vpop.f32.mrb[0].mxu0
    %2681 = vdwg.mxu0
    %v2682 = vadd.f32 %v2604, %v2679
    %v2683 = vxor.u32 %v2682, 2147483648
    %v2684 = vmul.f32 %v2683, 1.442695
    %v2685 = vpow.pop %v2684
    %v2686 = vadd.f32 %v2685, 1.0
    %v2687 = vrcp.pop %v2686
    %v2688 = vmul.f32 1.0, %v2687
    %v2689 = vtanh.pop %v2682
    %v2690 = vmul.f32 %v2688, %v2530
    %2692 = vrot.lane.b32.xlu0 %v2689, 64
    %v2693 = vpop.permute.xlu0 %2692
    %v2695 = vmul.f32 %v2688, %v2693
    %2697 = vrot.lane.b32.xlu0 %v2695, 32
    %v2698 = vpop.permute.xlu0 %2697
    %v2700 = vadd.f32 %v2690, %v2698
    %v2701 = vtanh.pop %v2700
    %2703 = vrot.lane.b32.xlu0 %v2701, 64
    %v2704 = vpop.permute.xlu0 %2703
    %v2706 = vmul.f32 %v2688, %v2704
    %2707 = vmatprep.subr.mxu0 0.0
    %2708 = vmatpush1.msra.mxu0 %v227
    %2709 = vmatprep.subr.mxu0 0.0
    %2710 = vmatpush1.msra.mxu0 %v228
    %2711 = vmatprep.subr.mxu0 0.0
    %2712 = vmatpush1.msra.mxu0 %v229
    %2713 = vmatprep.subr.mxu0 0.0
    %2714 = vmatpush1.msra.mxu0 %v230
    %2715 = vmatprep.subr.mxu0 0.0
    %2716 = vmatpush1.msra.mxu0 0.0
    %2717 = vmatprep.subr.mxu0 0.0
    %2718 = vmatpush1.msra.mxu0 0.0
    %2719 = vmatprep.subr.mxu0 0.0
    %2720 = vmatpush1.msra.mxu0 0.0
    %2721 = vmatprep.subr.mxu0 0.0
    %2722 = vmatpush1.msra.mxu0 0.0
    %2723 = vmatprep.subr.mxu0 0.0
    %2724 = vmatpush1.msra.mxu0 0.0
    %2725 = vmatprep.subr.mxu0 0.0
    %2726 = vmatpush1.msra.mxu0 0.0
    %2727 = vmatprep.subr.mxu0 0.0
    %2728 = vmatpush1.msra.mxu0 0.0
    %2729 = vmatprep.subr.mxu0 0.0
    %2730 = vmatpush1.msra.mxu0 0.0
    %2731 = vmatprep.subr.mxu0 0.0
    %2732 = vmatpush1.msra.mxu0 0.0
    %2733 = vmatprep.subr.mxu0 0.0
    %2734 = vmatpush1.msra.mxu0 0.0
    %2735 = vmatprep.subr.mxu0 0.0
    %2736 = vmatpush1.msra.mxu0 0.0
    %2737 = vmatprep.subr.mxu0 0.0
    %2738 = vmatpush1.msra.mxu0 0.0
    %2739 = vmatprep.subr.mxu0 0.0
    %2740 = vmatpush1.msra.mxu0 0.0
    %2741 = vmatprep.subr.mxu0 0.0
    %2742 = vmatpush1.msra.mxu0 0.0
    %2743 = vmatprep.subr.mxu0 0.0
    %2744 = vmatpush1.msra.mxu0 0.0
    %2745 = vmatprep.subr.mxu0 0.0
    %2746 = vmatpush1.msra.mxu0 0.0
    %2747 = vmatprep.subr.mxu0 0.0
    %2748 = vmatpush1.msra.mxu0 0.0
    %2749 = vmatprep.subr.mxu0 0.0
    %2750 = vmatpush1.msra.mxu0 0.0
    %2751 = vmatprep.subr.mxu0 0.0
    %2752 = vmatpush1.msra.mxu0 0.0
    %2753 = vmatprep.subr.mxu0 0.0
    %2754 = vmatpush1.msra.mxu0 0.0
    %2755 = vmatprep.subr.mxu0 0.0
    %2756 = vmatpush1.msra.mxu0 0.0
    %2757 = vmatprep.subr.mxu0 0.0
    %2758 = vmatpush1.msra.mxu0 0.0
    %2759 = vmatprep.subr.mxu0 0.0
    %2760 = vmatpush1.msra.mxu0 0.0
    %2761 = vmatprep.subr.mxu0 0.0
    %2762 = vmatpush1.msra.mxu0 0.0
    %2763 = vmatprep.subr.mxu0 0.0
    %2764 = vmatpush1.msra.mxu0 0.0
    %2765 = vmatprep.subr.mxu0 0.0
    %2766 = vmatpush1.msra.mxu0 0.0
    %2767 = vmatprep.subr.mxu0 0.0
    %2768 = vmatpush1.msra.mxu0 0.0
    %2769 = vmatprep.subr.mxu0 0.0
    %2770 = vmatpush1.msra.mxu0 0.0
    %2771 = vmatprep.mubr.f32.mxu0 0.0
    %2772 = vmatmul.mubr.f32.gmra.mrb[0].mxu0 %v1463
    %v2773 = vpop.f32.mrb[0].mxu0
    %v2774 = vadd.f32 %v240, %v2773
    %v2775 = vpop.f32.mrb[0].mxu0
    %2776 = vdwg.mxu0
    %2778 = vrot.lane.b32.xlu0 %v2706, 32
    %v2779 = vpop.permute.xlu0 %2778
    %v2780 = vsel %vm242, %v2779, 0
    %2782 = vmatprep.subr.mxu0 0.0
    %2783 = vmatpush1.msra.mxu0 %v231
    %2784 = vmatprep.subr.mxu0 0.0
    %2785 = vmatpush1.msra.mxu0 %v232
    %2786 = vmatprep.subr.mxu0 0.0
    %2787 = vmatpush1.msra.mxu0 %v233
    %2788 = vmatprep.subr.mxu0 0.0
    %2789 = vmatpush1.msra.mxu0 %v234
    %2790 = vmatprep.subr.mxu0 0.0
    %2791 = vmatpush1.msra.mxu0 0.0
    %2792 = vmatprep.subr.mxu0 0.0
    %2793 = vmatpush1.msra.mxu0 0.0
    %2794 = vmatprep.subr.mxu0 0.0
    %2795 = vmatpush1.msra.mxu0 0.0
    %2796 = vmatprep.subr.mxu0 0.0
    %2797 = vmatpush1.msra.mxu0 0.0
    %2798 = vmatprep.subr.mxu0 0.0
    %2799 = vmatpush1.msra.mxu0 0.0
    %2800 = vmatprep.subr.mxu0 0.0
    %2801 = vmatpush1.msra.mxu0 0.0
    %2802 = vmatprep.subr.mxu0 0.0
    %2803 = vmatpush1.msra.mxu0 0.0
    %2804 = vmatprep.subr.mxu0 0.0
    %2805 = vmatpush1.msra.mxu0 0.0
    %2806 = vmatprep.subr.mxu0 0.0
    %2807 = vmatpush1.msra.mxu0 0.0
    %2808 = vmatprep.subr.mxu0 0.0
    %2809 = vmatpush1.msra.mxu0 0.0
    %2810 = vmatprep.subr.mxu0 0.0
    %2811 = vmatpush1.msra.mxu0 0.0
    %2812 = vmatprep.subr.mxu0 0.0
    %2813 = vmatpush1.msra.mxu0 0.0
    %2814 = vmatprep.subr.mxu0 0.0
    %2815 = vmatpush1.msra.mxu0 0.0
    %2816 = vmatprep.subr.mxu0 0.0
    %2817 = vmatpush1.msra.mxu0 0.0
    %2818 = vmatprep.subr.mxu0 0.0
    %2819 = vmatpush1.msra.mxu0 0.0
    %2820 = vmatprep.subr.mxu0 0.0
    %2821 = vmatpush1.msra.mxu0 0.0
    %2822 = vmatprep.subr.mxu0 0.0
    %2823 = vmatpush1.msra.mxu0 0.0
    %2824 = vmatprep.subr.mxu0 0.0
    %2825 = vmatpush1.msra.mxu0 0.0
    %2826 = vmatprep.subr.mxu0 0.0
    %2827 = vmatpush1.msra.mxu0 0.0
    %2828 = vmatprep.subr.mxu0 0.0
    %2829 = vmatpush1.msra.mxu0 0.0
    %2830 = vmatprep.subr.mxu0 0.0
    %2831 = vmatpush1.msra.mxu0 0.0
    %2832 = vmatprep.subr.mxu0 0.0
    %2833 = vmatpush1.msra.mxu0 0.0
    %2834 = vmatprep.subr.mxu0 0.0
    %2835 = vmatpush1.msra.mxu0 0.0
    %2836 = vmatprep.subr.mxu0 0.0
    %2837 = vmatpush1.msra.mxu0 0.0
    %2838 = vmatprep.subr.mxu0 0.0
    %2839 = vmatpush1.msra.mxu0 0.0
    %2840 = vmatprep.subr.mxu0 0.0
    %2841 = vmatpush1.msra.mxu0 0.0
    %2842 = vmatprep.subr.mxu0 0.0
    %2843 = vmatpush1.msra.mxu0 0.0
    %2844 = vmatprep.subr.mxu0 0.0
    %2845 = vmatpush1.msra.mxu0 0.0
    %2846 = vmatprep.mubr.f32.mxu0 0.0
    %2847 = vmatmul.mubr.f32.gmra.mrb[0].mxu0 %v2780
    %v2848 = vpop.f32.mrb[0].mxu0
    %v2849 = vadd.f32 0.0, %v2848
    %v2850 = vpop.f32.mrb[0].mxu0
    %2851 = vdwg.mxu0
    %v2852 = vadd.f32 %v2774, %v2849
    %v2853 = vxor.u32 %v2852, 2147483648
    %v2854 = vmul.f32 %v2853, 1.442695
    %v2855 = vpow.pop %v2854
    %v2856 = vadd.f32 %v2855, 1.0
    %v2857 = vrcp.pop %v2856
    %v2858 = vmul.f32 1.0, %v2857
    %v2859 = vtanh.pop %v2852
    %v2860 = vmul.f32 %v2858, %v2700
    %2862 = vrot.lane.b32.xlu0 %v2859, 64
    %v2863 = vpop.permute.xlu0 %2862
    %v2865 = vmul.f32 %v2858, %v2863
    %2867 = vrot.lane.b32.xlu0 %v2865, 32
    %v2868 = vpop.permute.xlu0 %2867
    %v2870 = vadd.f32 %v2860, %v2868
    %v2871 = vtanh.pop %v2870
    %2873 = vrot.lane.b32.xlu0 %v2871, 64
    %v2874 = vpop.permute.xlu0 %2873
    %v2876 = vmul.f32 %v2858, %v2874
    %2877 = vmatprep.subr.mxu0 0.0
    %2878 = vmatpush1.msra.mxu0 %v227
    %2879 = vmatprep.subr.mxu0 0.0
    %2880 = vmatpush1.msra.mxu0 %v228
    %2881 = vmatprep.subr.mxu0 0.0
    %2882 = vmatpush1.msra.mxu0 %v229
    %2883 = vmatprep.subr.mxu0 0.0
    %2884 = vmatpush1.msra.mxu0 %v230
    %2885 = vmatprep.subr.mxu0 0.0
    %2886 = vmatpush1.msra.mxu0 0.0
    %2887 = vmatprep.subr.mxu0 0.0
    %2888 = vmatpush1.msra.mxu0 0.0
    %2889 = vmatprep.subr.mxu0 0.0
    %2890 = vmatpush1.msra.mxu0 0.0
    %2891 = vmatprep.subr.mxu0 0.0
    %2892 = vmatpush1.msra.mxu0 0.0
    %2893 = vmatprep.subr.mxu0 0.0
    %2894 = vmatpush1.msra.mxu0 0.0
    %2895 = vmatprep.subr.mxu0 0.0
    %2896 = vmatpush1.msra.mxu0 0.0
    %2897 = vmatprep.subr.mxu0 0.0
    %2898 = vmatpush1.msra.mxu0 0.0
    %2899 = vmatprep.subr.mxu0 0.0
    %2900 = vmatpush1.msra.mxu0 0.0
    %2901 = vmatprep.subr.mxu0 0.0
    %2902 = vmatpush1.msra.mxu0 0.0
    %2903 = vmatprep.subr.mxu0 0.0
    %2904 = vmatpush1.msra.mxu0 0.0
    %2905 = vmatprep.subr.mxu0 0.0
    %2906 = vmatpush1.msra.mxu0 0.0
    %2907 = vmatprep.subr.mxu0 0.0
    %2908 = vmatpush1.msra.mxu0 0.0
    %2909 = vmatprep.subr.mxu0 0.0
    %2910 = vmatpush1.msra.mxu0 0.0
    %2911 = vmatprep.subr.mxu0 0.0
    %2912 = vmatpush1.msra.mxu0 0.0
    %2913 = vmatprep.subr.mxu0 0.0
    %2914 = vmatpush1.msra.mxu0 0.0
    %2915 = vmatprep.subr.mxu0 0.0
    %2916 = vmatpush1.msra.mxu0 0.0
    %2917 = vmatprep.subr.mxu0 0.0
    %2918 = vmatpush1.msra.mxu0 0.0
    %2919 = vmatprep.subr.mxu0 0.0
    %2920 = vmatpush1.msra.mxu0 0.0
    %2921 = vmatprep.subr.mxu0 0.0
    %2922 = vmatpush1.msra.mxu0 0.0
    %2923 = vmatprep.subr.mxu0 0.0
    %2924 = vmatpush1.msra.mxu0 0.0
    %2925 = vmatprep.subr.mxu0 0.0
    %2926 = vmatpush1.msra.mxu0 0.0
    %2927 = vmatprep.subr.mxu0 0.0
    %2928 = vmatpush1.msra.mxu0 0.0
    %2929 = vmatprep.subr.mxu0 0.0
    %2930 = vmatpush1.msra.mxu0 0.0
    %2931 = vmatprep.subr.mxu0 0.0
    %2932 = vmatpush1.msra.mxu0 0.0
    %2933 = vmatprep.subr.mxu0 0.0
    %2934 = vmatpush1.msra.mxu0 0.0
    %2935 = vmatprep.subr.mxu0 0.0
    %2936 = vmatpush1.msra.mxu0 0.0
    %2937 = vmatprep.subr.mxu0 0.0
    %2938 = vmatpush1.msra.mxu0 0.0
    %2939 = vmatprep.subr.mxu0 0.0
    %2940 = vmatpush1.msra.mxu0 0.0
    %2941 = vmatprep.mubr.f32.mxu0 0.0
    %2942 = vmatmul.mubr.f32.gmra.mrb[0].mxu0 %v1669
    %v2943 = vpop.f32.mrb[0].mxu0
    %v2944 = vadd.f32 %v240, %v2943
    %v2945 = vpop.f32.mrb[0].mxu0
    %2946 = vdwg.mxu0
    %2948 = vrot.lane.b32.xlu0 %v2876, 32
    %v2949 = vpop.permute.xlu0 %2948
    %v2950 = vsel %vm242, %v2949, 0
    %2952 = vmatprep.subr.mxu0 0.0
    %2953 = vmatpush1.msra.mxu0 %v231
    %2954 = vmatprep.subr.mxu0 0.0
    %2955 = vmatpush1.msra.mxu0 %v232
    %2956 = vmatprep.subr.mxu0 0.0
    %2957 = vmatpush1.msra.mxu0 %v233
    %2958 = vmatprep.subr.mxu0 0.0
    %2959 = vmatpush1.msra.mxu0 %v234
    %2960 = vmatprep.subr.mxu0 0.0
    %2961 = vmatpush1.msra.mxu0 0.0
    %2962 = vmatprep.subr.mxu0 0.0
    %2963 = vmatpush1.msra.mxu0 0.0
    %2964 = vmatprep.subr.mxu0 0.0
    %2965 = vmatpush1.msra.mxu0 0.0
    %2966 = vmatprep.subr.mxu0 0.0
    %2967 = vmatpush1.msra.mxu0 0.0
    %2968 = vmatprep.subr.mxu0 0.0
    %2969 = vmatpush1.msra.mxu0 0.0
    %2970 = vmatprep.subr.mxu0 0.0
    %2971 = vmatpush1.msra.mxu0 0.0
    %2972 = vmatprep.subr.mxu0 0.0
    %2973 = vmatpush1.msra.mxu0 0.0
    %2974 = vmatprep.subr.mxu0 0.0
    %2975 = vmatpush1.msra.mxu0 0.0
    %2976 = vmatprep.subr.mxu0 0.0
    %2977 = vmatpush1.msra.mxu0 0.0
    %2978 = vmatprep.subr.mxu0 0.0
    %2979 = vmatpush1.msra.mxu0 0.0
    %2980 = vmatprep.subr.mxu0 0.0
    %2981 = vmatpush1.msra.mxu0 0.0
    %2982 = vmatprep.subr.mxu0 0.0
    %2983 = vmatpush1.msra.mxu0 0.0
    %2984 = vmatprep.subr.mxu0 0.0
    %2985 = vmatpush1.msra.mxu0 0.0
    %2986 = vmatprep.subr.mxu0 0.0
    %2987 = vmatpush1.msra.mxu0 0.0
    %2988 = vmatprep.subr.mxu0 0.0
    %2989 = vmatpush1.msra.mxu0 0.0
    %2990 = vmatprep.subr.mxu0 0.0
    %2991 = vmatpush1.msra.mxu0 0.0
    %2992 = vmatprep.subr.mxu0 0.0
    %2993 = vmatpush1.msra.mxu0 0.0
    %2994 = vmatprep.subr.mxu0 0.0
    %2995 = vmatpush1.msra.mxu0 0.0
    %2996 = vmatprep.subr.mxu0 0.0
    %2997 = vmatpush1.msra.mxu0 0.0
    %2998 = vmatprep.subr.mxu0 0.0
    %2999 = vmatpush1.msra.mxu0 0.0
    %3000 = vmatprep.subr.mxu0 0.0
    %3001 = vmatpush1.msra.mxu0 0.0
    %3002 = vmatprep.subr.mxu0 0.0
    %3003 = vmatpush1.msra.mxu0 0.0
    %3004 = vmatprep.subr.mxu0 0.0
    %3005 = vmatpush1.msra.mxu0 0.0
    %3006 = vmatprep.subr.mxu0 0.0
    %3007 = vmatpush1.msra.mxu0 0.0
    %3008 = vmatprep.subr.mxu0 0.0
    %3009 = vmatpush1.msra.mxu0 0.0
    %3010 = vmatprep.subr.mxu0 0.0
    %3011 = vmatpush1.msra.mxu0 0.0
    %3012 = vmatprep.subr.mxu0 0.0
    %3013 = vmatpush1.msra.mxu0 0.0
    %3014 = vmatprep.subr.mxu0 0.0
    %3015 = vmatpush1.msra.mxu0 0.0
    %3016 = vmatprep.mubr.f32.mxu0 0.0
    %3017 = vmatmul.mubr.f32.gmra.mrb[0].mxu0 %v2950
    %v3018 = vpop.f32.mrb[0].mxu0
    %v3019 = vadd.f32 0.0, %v3018
    %v3020 = vpop.f32.mrb[0].mxu0
    %3021 = vdwg.mxu0
    %v3022 = vadd.f32 %v2944, %v3019
    %v3023 = vxor.u32 %v3022, 2147483648
    %v3024 = vmul.f32 %v3023, 1.442695
    %v3025 = vpow.pop %v3024
    %v3026 = vadd.f32 %v3025, 1.0
    %v3027 = vrcp.pop %v3026
    %v3028 = vmul.f32 1.0, %v3027
    %v3029 = vtanh.pop %v3022
    %v3030 = vmul.f32 %v3028, %v2870
    %3032 = vrot.lane.b32.xlu0 %v3029, 64
    %v3033 = vpop.permute.xlu0 %3032
    %v3035 = vmul.f32 %v3028, %v3033
    %3037 = vrot.lane.b32.xlu0 %v3035, 32
    %v3038 = vpop.permute.xlu0 %3037
    %v3040 = vadd.f32 %v3030, %v3038
    %v3041 = vtanh.pop %v3040
    %3043 = vrot.lane.b32.xlu0 %v3041, 64
    %v3044 = vpop.permute.xlu0 %3043
    %v3046 = vmul.f32 %v3028, %v3044
    %v3051 = vrot.slane %v1858, 7
    %v3052 = vrot.slane %v1859, 6
    %v3053 = vsel %vm429, %v3052, %v3051
    %v3054 = vrot.slane %v1860, 5
    %v3055 = vsel %vm432, %v3054, %v3053
    %v3056 = vrot.slane %v1861, 4
    %v3057 = vsel %vm435, %v3056, %v3055
    %3058 = vrot.lane.b32.xlu0 %v3057, 32
    %v3059 = vpop.permute.xlu0 %3058
    %v3060 = vsel %vm242, %v3059, 0
    %3062 = vmatprep.subr.mxu0 0.0
    %3063 = vmatpush1.msra.mxu0 %v227
    %3064 = vmatprep.subr.mxu0 0.0
    %3065 = vmatpush1.msra.mxu0 %v228
    %3066 = vmatprep.subr.mxu0 0.0
    %3067 = vmatpush1.msra.mxu0 %v229
    %3068 = vmatprep.subr.mxu0 0.0
    %3069 = vmatpush1.msra.mxu0 %v230
    %3070 = vmatprep.subr.mxu0 0.0
    %3071 = vmatpush1.msra.mxu0 0.0
    %3072 = vmatprep.subr.mxu0 0.0
    %3073 = vmatpush1.msra.mxu0 0.0
    %3074 = vmatprep.subr.mxu0 0.0
    %3075 = vmatpush1.msra.mxu0 0.0
    %3076 = vmatprep.subr.mxu0 0.0
    %3077 = vmatpush1.msra.mxu0 0.0
    %3078 = vmatprep.subr.mxu0 0.0
    %3079 = vmatpush1.msra.mxu0 0.0
    %3080 = vmatprep.subr.mxu0 0.0
    %3081 = vmatpush1.msra.mxu0 0.0
    %3082 = vmatprep.subr.mxu0 0.0
    %3083 = vmatpush1.msra.mxu0 0.0
    %3084 = vmatprep.subr.mxu0 0.0
    %3085 = vmatpush1.msra.mxu0 0.0
    %3086 = vmatprep.subr.mxu0 0.0
    %3087 = vmatpush1.msra.mxu0 0.0
    %3088 = vmatprep.subr.mxu0 0.0
    %3089 = vmatpush1.msra.mxu0 0.0
    %3090 = vmatprep.subr.mxu0 0.0
    %3091 = vmatpush1.msra.mxu0 0.0
    %3092 = vmatprep.subr.mxu0 0.0
    %3093 = vmatpush1.msra.mxu0 0.0
    %3094 = vmatprep.subr.mxu0 0.0
    %3095 = vmatpush1.msra.mxu0 0.0
    %3096 = vmatprep.subr.mxu0 0.0
    %3097 = vmatpush1.msra.mxu0 0.0
    %3098 = vmatprep.subr.mxu0 0.0
    %3099 = vmatpush1.msra.mxu0 0.0
    %3100 = vmatprep.subr.mxu0 0.0
    %3101 = vmatpush1.msra.mxu0 0.0
    %3102 = vmatprep.subr.mxu0 0.0
    %3103 = vmatpush1.msra.mxu0 0.0
    %3104 = vmatprep.subr.mxu0 0.0
    %3105 = vmatpush1.msra.mxu0 0.0
    %3106 = vmatprep.subr.mxu0 0.0
    %3107 = vmatpush1.msra.mxu0 0.0
    %3108 = vmatprep.subr.mxu0 0.0
    %3109 = vmatpush1.msra.mxu0 0.0
    %3110 = vmatprep.subr.mxu0 0.0
    %3111 = vmatpush1.msra.mxu0 0.0
    %3112 = vmatprep.subr.mxu0 0.0
    %3113 = vmatpush1.msra.mxu0 0.0
    %3114 = vmatprep.subr.mxu0 0.0
    %3115 = vmatpush1.msra.mxu0 0.0
    %3116 = vmatprep.subr.mxu0 0.0
    %3117 = vmatpush1.msra.mxu0 0.0
    %3118 = vmatprep.subr.mxu0 0.0
    %3119 = vmatpush1.msra.mxu0 0.0
    %3120 = vmatprep.subr.mxu0 0.0
    %3121 = vmatpush1.msra.mxu0 0.0
    %3122 = vmatprep.subr.mxu0 0.0
    %3123 = vmatpush1.msra.mxu0 0.0
    %3124 = vmatprep.subr.mxu0 0.0
    %3125 = vmatpush1.msra.mxu0 0.0
    %3126 = vmatprep.mubr.f32.mxu0 0.0
    %3127 = vmatmul.mubr.f32.gmra.mrb[0].mxu0 %v3060
    %v3128 = vpop.f32.mrb[0].mxu0
    %v3129 = vadd.f32 %v240, %v3128
    %v3130 = vpop.f32.mrb[0].mxu0
    %3131 = vdwg.mxu0
    %3133 = vrot.lane.b32.xlu0 %v3046, 32
    %v3134 = vpop.permute.xlu0 %3133
    %v3135 = vsel %vm242, %v3134, 0
    %3137 = vmatprep.subr.mxu0 0.0
    %3138 = vmatpush1.msra.mxu0 %v231
    %3139 = vmatprep.subr.mxu0 0.0
    %3140 = vmatpush1.msra.mxu0 %v232
    %3141 = vmatprep.subr.mxu0 0.0
    %3142 = vmatpush1.msra.mxu0 %v233
    %3143 = vmatprep.subr.mxu0 0.0
    %3144 = vmatpush1.msra.mxu0 %v234
    %3145 = vmatprep.subr.mxu0 0.0
    %3146 = vmatpush1.msra.mxu0 0.0
    %3147 = vmatprep.subr.mxu0 0.0
    %3148 = vmatpush1.msra.mxu0 0.0
    %3149 = vmatprep.subr.mxu0 0.0
    %3150 = vmatpush1.msra.mxu0 0.0
    %3151 = vmatprep.subr.mxu0 0.0
    %3152 = vmatpush1.msra.mxu0 0.0
    %3153 = vmatprep.subr.mxu0 0.0
    %3154 = vmatpush1.msra.mxu0 0.0
    %3155 = vmatprep.subr.mxu0 0.0
    %3156 = vmatpush1.msra.mxu0 0.0
    %3157 = vmatprep.subr.mxu0 0.0
    %3158 = vmatpush1.msra.mxu0 0.0
    %3159 = vmatprep.subr.mxu0 0.0
    %3160 = vmatpush1.msra.mxu0 0.0
    %3161 = vmatprep.subr.mxu0 0.0
    %3162 = vmatpush1.msra.mxu0 0.0
    %3163 = vmatprep.subr.mxu0 0.0
    %3164 = vmatpush1.msra.mxu0 0.0
    %3165 = vmatprep.subr.mxu0 0.0
    %3166 = vmatpush1.msra.mxu0 0.0
    %3167 = vmatprep.subr.mxu0 0.0
    %3168 = vmatpush1.msra.mxu0 0.0
    %3169 = vmatprep.subr.mxu0 0.0
    %3170 = vmatpush1.msra.mxu0 0.0
    %3171 = vmatprep.subr.mxu0 0.0
    %3172 = vmatpush1.msra.mxu0 0.0
    %3173 = vmatprep.subr.mxu0 0.0
    %3174 = vmatpush1.msra.mxu0 0.0
    %3175 = vmatprep.subr.mxu0 0.0
    %3176 = vmatpush1.msra.mxu0 0.0
    %3177 = vmatprep.subr.mxu0 0.0
    %3178 = vmatpush1.msra.mxu0 0.0
    %3179 = vmatprep.subr.mxu0 0.0
    %3180 = vmatpush1.msra.mxu0 0.0
    %3181 = vmatprep.subr.mxu0 0.0
    %3182 = vmatpush1.msra.mxu0 0.0
    %3183 = vmatprep.subr.mxu0 0.0
    %3184 = vmatpush1.msra.mxu0 0.0
    %3185 = vmatprep.subr.mxu0 0.0
    %3186 = vmatpush1.msra.mxu0 0.0
    %3187 = vmatprep.subr.mxu0 0.0
    %3188 = vmatpush1.msra.mxu0 0.0
    %3189 = vmatprep.subr.mxu0 0.0
    %3190 = vmatpush1.msra.mxu0 0.0
    %3191 = vmatprep.subr.mxu0 0.0
    %3192 = vmatpush1.msra.mxu0 0.0
    %3193 = vmatprep.subr.mxu0 0.0
    %3194 = vmatpush1.msra.mxu0 0.0
    %3195 = vmatprep.subr.mxu0 0.0
    %3196 = vmatpush1.msra.mxu0 0.0
    %3197 = vmatprep.subr.mxu0 0.0
    %3198 = vmatpush1.msra.mxu0 0.0
    %3199 = vmatprep.subr.mxu0 0.0
    %3200 = vmatpush1.msra.mxu0 0.0
    %3201 = vmatprep.mubr.f32.mxu0 0.0
    %3202 = vmatmul.mubr.f32.gmra.mrb[0].mxu0 %v3135
    %v3203 = vpop.f32.mrb[0].mxu0
    %v3204 = vadd.f32 0.0, %v3203
    %v3205 = vpop.f32.mrb[0].mxu0
    %3206 = vdwg.mxu0
    %v3207 = vadd.f32 %v3129, %v3204
    %v3208 = vxor.u32 %v3207, 2147483648
    %v3209 = vmul.f32 %v3208, 1.442695
    %v3210 = vpow.pop %v3209
    %v3211 = vadd.f32 %v3210, 1.0
    %v3212 = vrcp.pop %v3211
    %v3213 = vmul.f32 1.0, %v3212
    %v3214 = vtanh.pop %v3207
    %v3215 = vmul.f32 %v3213, %v3040
    %3217 = vrot.lane.b32.xlu0 %v3214, 64
    %v3218 = vpop.permute.xlu0 %3217
    %v3220 = vmul.f32 %v3213, %v3218
    %3222 = vrot.lane.b32.xlu0 %v3220, 32
    %v3223 = vpop.permute.xlu0 %3222
    %v3225 = vadd.f32 %v3215, %v3223
    %v3226 = vtanh.pop %v3225
    %3228 = vrot.lane.b32.xlu0 %v3226, 64
    %v3229 = vpop.permute.xlu0 %3228
    %v3231 = vmul.f32 %v3213, %v3229
    %v3232 = vld [vmem:[%s7] sm:$0x1]
    %v3234 = vlaneseq
    %v3235 = vshrl.u32 %v3234, 7
    %v3236 = vsub.s32 0, %v3235
    %v3237 = vrot.slane %v3232, %v3236
    %3238 = vrot.lane.b32.xlu0 %v3237, 96
    %v3239 = vpop.permute.xlu0 %3238
    %v3241 = vmul.f32 %v1858, %v3239
    %v3242 = vmul.f32 %v1859, %v3239
    %v3243 = vmul.f32 %v1860, %v3239
    %v3244 = vmul.f32 %v1861, %v3239
    %3245 = vrot.lane.b32.xlu0 %v3237, 64
    %v3246 = vpop.permute.xlu0 %3245
    %v3248 = vmul.f32 %v3231, %v3246
    %v3250 = vrot.slane %v3248, 1
    %v3251 = vrot.slane %v3248, 2
    %v3252 = vrot.slane %v3248, 3
    %v3253 = vrot.slane %v3248, 4
    %v3258 = vadd.f32 %v3241, %v3250
    %v3259 = vadd.f32 %v3242, %v3251
    %v3260 = vadd.f32 %v3243, %v3252
    %v3261 = vadd.f32 %v3244, %v3253
    %v3266 = vrot.slane %v3259, 7
    %v3267 = vrot.slane %v3260, 6
    %v3268 = vsel %vm429, %v3267, %v3266
    %v3269 = vrot.slane %v3261, 5
    %v3270 = vsel %vm432, %v3269, %v3268
    %3271 = vrot.lane.b32.xlu0 %v3258, 32
    %v3272 = vpop.permute.xlu0 %3271
    %3273 = vrot.lane.b32.xlu0 %v3270, 32
    %v3274 = vpop.permute.xlu0 %3273
    %vm3277 = vcmask 261127
    %v3278 = vsel %vm3277, %v3272, 0.0
    %3279 = vadd.xlane.f32.xlu0 %v3278
    %v3280 = vpop.xlane.xlu0 %3279
    %vm3281 = vcmask 256000
    %v3282 = vsel %vm3281, %v3274, 0.0
    %3283 = vadd.xlane.f32.xlu0 %v3282
    %v3284 = vpop.xlane.xlu0 %3283
    %v3285 = vld [vmem:[#allocation2] sm:$0x1]
    %v3287 = vlaneseq
    %v3288 = vshrl.u32 %v3287, 7
    %v3289 = vsub.s32 0, %v3288
    %v3290 = vrot.slane %v3285, %v3289
    %v3292 = vadd.f32 %v3280, %v3290
    %v3293 = vadd.f32 %v3284, %v3290
    %vm3294 = vcmask 7175
    %3295 = vst.msk [vmem:[%s9 - $0x7] sm:$0x80] %vm3294, %v3292
    %vm3296 = vcmask 2048
    %3297 = vst.msk [vmem:[%s9 + $0x1] sm:$0x7] %vm3296, %v3293
    // Predicated region
    $region58: #{tpu_custom_call.1} parent=1 // pred_check
      _
    $region59: #{tpu_custom_call.1} parent=1 // pred_check_branch
      %3299 = sbr.rel (0) target = $region61
    $region60: #{tpu_custom_call.1} parent=1 // pred_region
      _
    $region61: #{tpu_custom_call.1} parent=1 // pred_fallthru
      _
    // Predicated region
    $region62: #{tpu_custom_call.1} parent=1 // pred_check
      _
    $region63: #{tpu_custom_call.1} parent=1 // pred_check_branch
      %3301 = sbr.rel (0) target = $region65
    $region64: #{tpu_custom_call.1} parent=1 // pred_region
      _
    $region65: #{tpu_custom_call.1} parent=1 // pred_fallthru
      _
    %3302 = vsyncpa [#allocation4], 1
    %3303 = vsyncpa [#allocation6], 1
    %3304 = vsyncpa [#allocation9], 1

</llo_original>
